<compile_context>
chip_gen: v7x
topology: tpu7x:2x2x1
jax: 0.10.0
libtpu: 0.0.40
codegen_flags: <defaults>
</compile_context>

<pallas_src>
import functools

import jax
import jax.numpy as jnp
from jax import lax
from jax.experimental import pallas as pl
from jax.experimental.pallas import tpu as pltpu

_MiB = 1024 * 1024


def _round_up(x, m):
    return ((x + m - 1) // m) * m


def _tpu_defaults():
    """Per-generation default tiles and VMEM budget."""
    kind = ""
    try:
        kind = jax.devices()[0].device_kind.lower()
    except Exception:
        pass
    vmem_phys = None
    try:
        info = pltpu.get_tpu_info()
        vmem_phys = getattr(info, "vmem_capacity_bytes", None)
    except Exception:
        vmem_phys = None

    if ("v5 lite" in kind) or ("v5e" in kind) or ("v5litepod" in kind):
        d = dict(tb=128, tt=32, vmem=96 * _MiB, two_cores=False)
    elif "v6" in kind:
        d = dict(tb=256, tt=32, vmem=96 * _MiB, two_cores=False)
    elif ("v7" in kind) or ("7x" in kind):
        d = dict(tb=256, tt=32, vmem=48 * _MiB, two_cores=True)
    else:  # unknown generation: conservative (v7x-safe) budget
        d = dict(tb=128, tt=16, vmem=48 * _MiB, two_cores=False)

    if vmem_phys:
        d["vmem"] = min(d["vmem"], int(0.75 * int(vmem_phys)))
    return d


def _vmem_estimate(TB, tT, D, Hp):
    """Rough VMEM footprint (single-buffered weights, double-buffered x/out)."""
    H4 = 4 * Hp
    weights = (D * H4 + Hp * H4 + Hp * 512) * 2 + (H4 + 512) * 4   # bf16 W, f32 bias
    x_chunk = 2 * tT * TB * D * 2                                  # bf16, 2 buffers
    gates = tT * TB * H4 * 2                                       # bf16 scratch
    hc = 2 * TB * Hp * 4                                           # f32 h/c carry
    out = 2 * TB * 512 * 4                                         # f32, 2 buffers
    return weights + x_chunk + gates + hc + out


def _lstm_fc_kernel(x_ref, wih_ref, whh_ref, b_ref, fcw_ref, fcb_ref, out_ref,
                    gates_scr, h_scr, c_scr, *,
                    hidden_pad, seq_len, t_chunk, n_chains, ragged, unroll):
    """One (batch tile, time chunk) grid step of the LSTM + final Linear."""
    Hp = hidden_pad
    j = pl.program_id(1)                 # time-chunk index (arbitrary / sequential)
    n_t = pl.num_programs(1)

    @pl.when(j == 0)
    def _():
        h_scr[...] = jnp.zeros_like(h_scr)
        c_scr[...] = jnp.zeros_like(c_scr)

    # ---- Input projection for the whole chunk: one MXU matmul (bf16 x bf16 -> f32),
    #      stored back to the gates scratch in bf16 (VMEM / store-slot savings).
    tT, TB, D = x_ref.shape
    x = x_ref[...]                                                  # (tT, TB, D) bf16
    gx = jnp.dot(x.reshape(tT * TB, D), wih_ref[...],
                 preferred_element_type=jnp.float32) + b_ref[...]   # (tT*TB, 4Hp) f32
    gates_scr[...] = gx.reshape(tT, TB, 4 * Hp).astype(gates_scr.dtype)

    w_hh = whh_ref[...]                                             # (Hp, 4Hp) bf16
    sub = TB // n_chains                                            # static sub-tile
    t0 = j * t_chunk

    def run_chunk(guarded):
        # Load per-chain carries (static sublane slices of the VMEM carry).
        carry0 = tuple(
            (h_scr[pl.ds(ci * sub, sub), :], c_scr[pl.ds(ci * sub, sub), :])
            for ci in range(n_chains))

        def step(t, carry):
            g_x = gates_scr[t]                                      # (TB, 4Hp) bf16
            new = []
            # Two independent chains per timestep: chain B's MXU push overlaps
            # chain A's EUP/VPU phase (LLO schedules across the interleave).
            for ci in range(n_chains):
                h, c = carry[ci]
                g = (g_x[ci * sub:(ci + 1) * sub].astype(jnp.float32)
                     + jnp.dot(h.astype(jnp.bfloat16), w_hh,
                               preferred_element_type=jnp.float32))  # (sub, 4Hp) f32
                # Lane-dense gate slices (Hp is a multiple of 128).
                i_g = jax.nn.sigmoid(g[:, 0 * Hp:1 * Hp])
                f_g = jax.nn.sigmoid(g[:, 1 * Hp:2 * Hp])
                g_g = jnp.tanh(g[:, 2 * Hp:3 * Hp])
                o_g = jax.nn.sigmoid(g[:, 3 * Hp:4 * Hp])
                c_new = f_g * c + i_g * g_g
                h_new = o_g * jnp.tanh(c_new)
                if guarded:
                    # Only compiled into the ragged last chunk: skip t >= seq_len.
                    valid = (t0 + t) < seq_len
                    h_new = jnp.where(valid, h_new, h)
                    c_new = jnp.where(valid, c_new, c)
                new.append((h_new, c_new))
            return tuple(new)

        carry = lax.fori_loop(0, t_chunk, step, carry0, unroll=unroll)
        for ci in range(n_chains):
            h_scr[pl.ds(ci * sub, sub), :] = carry[ci][0]
            c_scr[pl.ds(ci * sub, sub), :] = carry[ci][1]

    if ragged:
        @pl.when(j < n_t - 1)
        def _():
            run_chunk(guarded=False)

        @pl.when(j == n_t - 1)
        def _():
            run_chunk(guarded=True)
    else:
        run_chunk(guarded=False)

    # ---- Final Linear on the last hidden state, emitted at the last time chunk.
    @pl.when(j == n_t - 1)
    def _():
        out = jnp.dot(h_scr[...].astype(jnp.bfloat16), fcw_ref[...],
                      preferred_element_type=jnp.float32) + fcb_ref[...]
        out_ref[...] = out.astype(out_ref.dtype)


def lstm_text_model_forward(x, params, *, batch_tile=None, time_chunk=None,
                            interleave_chains=True):
    """x: (B, T, D) float32 -> (B, 512) float32."""
    w_ih_t, w_hh_t, b, fc_w_t, fc_b = params
    B, T, D = x.shape
    Hp = fc_w_t.shape[0]                       # padded hidden (multiple of 128)
    H4 = 4 * Hp
    assert w_ih_t.shape == (D, H4) and w_hh_t.shape == (Hp, H4)

    gen = _tpu_defaults()

    # ---- Batch tile: multiple of 8 sublanes; fill the 256-wide MXU on v6e/v7x.
    TB = batch_tile if batch_tile is not None else gen["tb"]
    TB = max(8, _round_up(min(TB, _round_up(B, 8)), 8))
    if (gen["two_cores"] and batch_tile is None and B > 8 and TB >= 16
            and _round_up(B, TB) // TB < 2):
        TB = max(8, _round_up(TB // 2, 8))     # keep both v7x TensorCores busy
    Bp = _round_up(B, TB)

    # ---- Time chunk: amortize per-grid-step overhead; shrink to fit VMEM budget.
    tT = time_chunk if time_chunk is not None else min(T, gen["tt"])
    tT = max(1, min(tT, T))
    if time_chunk is None:
        while _vmem_estimate(TB, tT, D, Hp) > int(0.7 * gen["vmem"]) and tT > 8:
            tT = max(8, tT // 2)

    ragged = (T % tT) != 0
    n_chains = 2 if (interleave_chains and TB % 16 == 0) else 1
    unroll = tT if tT <= 8 else 4

    # Time-major (T, Bp, D) bf16 layout so per-chunk gates land with time leading.
    # TODO(synk): for D >> Hp one could hoist the input projection to a plain XLA
    # matmul outside the kernel and stream gate chunks instead of x.
    x_p = jnp.pad(x, ((0, Bp - B), (0, 0), (0, 0)))
    x_tbd = jnp.swapaxes(x_p, 0, 1).astype(jnp.bfloat16)            # (T, Bp, D)

    grid = (Bp // TB, pl.cdiv(T, tT))

    kernel = functools.partial(_lstm_fc_kernel, hidden_pad=Hp, seq_len=T,
                               t_chunk=tT, n_chains=n_chains, ragged=ragged,
                               unroll=unroll)

    def _run(single_buffer_weights):
        def wspec(shape):
            idx = lambda i, j: (0,) * len(shape)
            if single_buffer_weights:
                # Constant-index resident operands don't need a second buffer.
                return pl.BlockSpec(shape, idx, pipeline_mode=pl.Buffered(1))
            return pl.BlockSpec(shape, idx)

        out = pl.pallas_call(
            kernel,
            out_shape=jax.ShapeDtypeStruct((Bp, 512), jnp.float32),
            grid_spec=pltpu.PrefetchScalarGridSpec(
                num_scalar_prefetch=0,
                grid=grid,
                in_specs=[
                    pl.BlockSpec((tT, TB, D), lambda i, j: (j, i, 0)),  # x chunk
                    wspec((D, H4)),          # W_ih^T (resident)
                    wspec((Hp, H4)),         # W_hh^T (resident)
                    wspec((1, H4)),          # bias
                    wspec((Hp, 512)),        # fc.W^T
                    wspec((1, 512)),         # fc.b
                ],
                out_specs=pl.BlockSpec((TB, 512), lambda i, j: (i, 0)),
                scratch_shapes=[
                    pltpu.VMEM((tT, TB, H4), jnp.bfloat16),  # per-chunk gates (bf16)
                    pltpu.VMEM((TB, Hp), jnp.float32),       # h carry
                    pltpu.VMEM((TB, Hp), jnp.float32),       # c carry
                ],
            ),
            compiler_params=pltpu.CompilerParams(
                dimension_semantics=("parallel", "arbitrary"),
                vmem_limit_bytes=int(gen["vmem"]),
            ),
        )(x_tbd, w_ih_t, w_hh_t, b, fc_w_t, fc_b)
        return jax.block_until_ready(out)

    use_single_buf = hasattr(pl, "Buffered")
    if use_single_buf:
        try:
            out = _run(single_buffer_weights=True)
        except Exception:
            out = _run(single_buffer_weights=False)
    else:
        out = _run(single_buffer_weights=False)

    return out[:B]


def init_params(key, input_dim, hidden_dim):
    """PyTorch-like uniform(-1/sqrt(H), 1/sqrt(H)) init; returns raw + packed params."""
    H = hidden_dim
    Hp = _round_up(H, 128)
    ks = jax.random.split(key, 6)
    bound = 1.0 / jnp.sqrt(jnp.float32(H))
    u = lambda k, shape, bnd: jax.random.uniform(k, shape, jnp.float32, -bnd, bnd)

    w_ih = u(ks[0], (4 * H, input_dim), bound)     # PyTorch weight_ih_l0
    w_hh = u(ks[1], (4 * H, H), bound)             # PyTorch weight_hh_l0
    b_ih = u(ks[2], (4 * H,), bound)
    b_hh = u(ks[3], (4 * H,), bound)
    fc_w = u(ks[4], (512, H), bound)               # PyTorch fc.weight (fan_in = H)
    fc_b = u(ks[5], (512,), bound)

    raw = (w_ih, w_hh, b_ih, b_hh, fc_w, fc_b)

    def pad_gate_cols(w_t):   # (rows, 4H) -> (rows, 4Hp), zero-pad each gate block
        r = w_t.shape[0]
        return jnp.pad(w_t.reshape(r, 4, H),
                       ((0, 0), (0, 0), (0, Hp - H))).reshape(r, 4 * Hp)

    w_ih_t = pad_gate_cols(w_ih.T)                                   # (D, 4Hp)
    w_hh_t = jnp.pad(pad_gate_cols(w_hh.T), ((0, Hp - H), (0, 0)))   # (Hp, 4Hp)
    bias = pad_gate_cols((b_ih + b_hh).reshape(1, 4 * H))            # (1, 4Hp)
    fc_w_t = jnp.pad(fc_w.T, ((0, Hp - H), (0, 0)))                  # (Hp, 512)

    packed = (w_ih_t.astype(jnp.bfloat16),
              w_hh_t.astype(jnp.bfloat16),
              bias.astype(jnp.float32),
              fc_w_t.astype(jnp.bfloat16),
              fc_b.reshape(1, 512).astype(jnp.float32))
    return raw, packed, Hp


def reference_forward_bf16(x, packed, Hp):
    """Pure-JAX reference with the same padded bf16 operands, f32 accumulation,
    and the same bf16 rounding of the input-projection gates as the kernel."""
    w_ih_t, w_hh_t, b, fc_w_t, fc_b = packed
    B, T, D = x.shape
    xb = x.astype(jnp.bfloat16)

    gates_x = (jnp.einsum('btd,dh->bth', xb, w_ih_t,
                          preferred_element_type=jnp.float32)
               + b).astype(jnp.bfloat16)                             # (B, T, 4Hp)

    def step(carry, g_t):
        h, c = carry
        g = g_t.astype(jnp.float32) + jnp.dot(h.astype(jnp.bfloat16), w_hh_t,
                                              preferred_element_type=jnp.float32)
        i_g = jax.nn.sigmoid(g[:, 0 * Hp:1 * Hp])
        f_g = jax.nn.sigmoid(g[:, 1 * Hp:2 * Hp])
        g_g = jnp.tanh(g[:, 2 * Hp:3 * Hp])
        o_g = jax.nn.sigmoid(g[:, 3 * Hp:4 * Hp])
        c = f_g * c + i_g * g_g
        h = o_g * jnp.tanh(c)
        return (h, c), None

    h0 = jnp.zeros((B, Hp), jnp.float32)
    c0 = jnp.zeros((B, Hp), jnp.float32)
    (h_last, _), _ = lax.scan(step, (h0, c0), jnp.swapaxes(gates_x, 0, 1))
    return jnp.dot(h_last.astype(jnp.bfloat16), fc_w_t,
                   preferred_element_type=jnp.float32) + fc_b


def reference_forward_f32(x, raw):
    """Full-precision reference with exact PyTorch semantics (validates packing)."""
    w_ih, w_hh, b_ih, b_hh, fc_w, fc_b = raw
    H = w_hh.shape[1]

    def step(carry, x_t):
        h, c = carry
        g = x_t @ w_ih.T + b_ih + h @ w_hh.T + b_hh
        i_g = jax.nn.sigmoid(g[:, 0 * H:1 * H])
        f_g = jax.nn.sigmoid(g[:, 1 * H:2 * H])
        g_g = jnp.tanh(g[:, 2 * H:3 * H])
        o_g = jax.nn.sigmoid(g[:, 3 * H:4 * H])
        c = f_g * c + i_g * g_g
        h = o_g * jnp.tanh(c)
        return (h, c), None

    B = x.shape[0]
    h0 = jnp.zeros((B, H), jnp.float32)
    c0 = jnp.zeros((B, H), jnp.float32)
    (h_last, _), _ = lax.scan(step, (h0, c0), jnp.swapaxes(x, 0, 1))
    return h_last @ fc_w.T + fc_b


if __name__ == "__main__":
    INPUT_DIM, HIDDEN_DIM = 16, 32
    key = jax.random.PRNGKey(0)
    k_x, k_x2, k_p = jax.random.split(key, 3)
    raw, packed, Hp = init_params(k_p, INPUT_DIM, HIDDEN_DIM)

    # --- Config 1: default tiles (non-ragged, single chain) -------------------
    B, T = 2, 8
    x = jax.random.normal(k_x, (B, T, INPUT_DIM), jnp.float32)
    out = lstm_text_model_forward(x, packed)
    out = jax.block_until_ready(out)
    assert out.shape == (B, 512), out.shape

    ref_bf16 = reference_forward_bf16(x, packed, Hp)
    assert jnp.allclose(out, ref_bf16, atol=8e-3, rtol=8e-3), \
        float(jnp.max(jnp.abs(out - ref_bf16)))
    ref_f32 = reference_forward_f32(x, raw)
    assert jnp.allclose(out, ref_f32, atol=2.5e-2, rtol=2.5e-2), \
        float(jnp.max(jnp.abs(out - ref_f32)))

    # --- Config 2: exercises batch tiling, ragged last time chunk, and the
    #     two-chain interleave (TB=16 -> two 8-row chains) ----------------------
    B2, T2 = 20, 11
    x2 = jax.random.normal(k_x2, (B2, T2, INPUT_DIM), jnp.float32)
    out2 = lstm_text_model_forward(x2, packed, batch_tile=16, time_chunk=4)
    out2 = jax.block_until_ready(out2)
    assert out2.shape == (B2, 512), out2.shape

    ref2_bf16 = reference_forward_bf16(x2, packed, Hp)
    assert jnp.allclose(out2, ref2_bf16, atol=8e-3, rtol=8e-3), \
        float(jnp.max(jnp.abs(out2 - ref2_bf16)))
    ref2_f32 = reference_forward_f32(x2, raw)
    assert jnp.allclose(out2, ref2_f32, atol=2.5e-2, rtol=2.5e-2), \
        float(jnp.max(jnp.abs(out2 - ref2_f32)))

    print("KERNEL_OK")
</pallas_src>

<mosaic_0001>
module attributes {stable_mosaic.version = 11 : i64} {
  func.func @_lstm_fc_kernel(%arg0: i32, %arg1: i32, %arg2: memref<8x8x16xbf16, #tpu.memory_space<vmem>>, %arg3: memref<16x512xbf16, #tpu.memory_space<vmem>>, %arg4: memref<128x512xbf16, #tpu.memory_space<vmem>>, %arg5: memref<1x512xf32, #tpu.memory_space<vmem>>, %arg6: memref<128x512xbf16, #tpu.memory_space<vmem>>, %arg7: memref<1x512xf32, #tpu.memory_space<vmem>>, %arg8: memref<8x512xf32, #tpu.memory_space<vmem>>, %arg9: memref<8x8x512xbf16, #tpu.memory_space<vmem>>, %arg10: memref<8x128xf32, #tpu.memory_space<vmem>>, %arg11: memref<8x128xf32, #tpu.memory_space<vmem>>) attributes {dimension_semantics = [#tpu.dimension_semantics<parallel>, #tpu.dimension_semantics<arbitrary>], iteration_bounds = array<i64: 1, 1>, scalar_prefetch = 0 : i64, scratch_operands = 3 : i64, tpu.core_type = #tpu.core_type<tc>, window_params = [{transform_indices = @transform_0, window_bounds = array<i64: 8, 8, 16>}, {pipeline_mode = #tpu.pipeline_mode<synchronous>, transform_indices = @transform_1, window_bounds = array<i64: 16, 512>}, {pipeline_mode = #tpu.pipeline_mode<synchronous>, transform_indices = @transform_2, window_bounds = array<i64: 128, 512>}, {pipeline_mode = #tpu.pipeline_mode<synchronous>, transform_indices = @transform_3, window_bounds = array<i64: 1, 512>}, {pipeline_mode = #tpu.pipeline_mode<synchronous>, transform_indices = @transform_4, window_bounds = array<i64: 128, 512>}, {pipeline_mode = #tpu.pipeline_mode<synchronous>, transform_indices = @transform_5, window_bounds = array<i64: 1, 512>}, {transform_indices = @transform_6, window_bounds = array<i64: 8, 512>}]} {
    %c0_i32 = arith.constant 0 : i32
    %0 = arith.cmpi eq, %arg1, %c0_i32 : i32
    %1 = arith.extui %0 : i1 to i32
    %c0_i32_0 = arith.constant 0 : i32
    %2 = arith.cmpi ne, %1, %c0_i32_0 : i32
    scf.if %2 {
      %cst_71 = arith.constant 0.000000e+00 : f32
      %277 = vector.broadcast %cst_71 : f32 to vector<8x128xf32>
      %c0_72 = arith.constant 0 : index
      %c0_73 = arith.constant 0 : index
      %278 = vector.load %arg10[%c0_72, %c0_73] : memref<8x128xf32, #tpu.memory_space<vmem>>, vector<8x128xf32>
      tpu.vector_store %arg10[%c0_72, %c0_73], %277 {strides = array<i32>} : memref<8x128xf32, #tpu.memory_space<vmem>>, vector<8x128xf32>,
      %cst_74 = arith.constant 0.000000e+00 : f32
      %279 = vector.broadcast %cst_74 : f32 to vector<8x128xf32>
      %c0_75 = arith.constant 0 : index
      %c0_76 = arith.constant 0 : index
      %280 = vector.load %arg11[%c0_75, %c0_76] : memref<8x128xf32, #tpu.memory_space<vmem>>, vector<8x128xf32>
      tpu.vector_store %arg11[%c0_75, %c0_76], %279 {strides = array<i32>} : memref<8x128xf32, #tpu.memory_space<vmem>>, vector<8x128xf32>,
    } else {
    }
    %c0 = arith.constant 0 : index
    %c0_1 = arith.constant 0 : index
    %c0_2 = arith.constant 0 : index
    %3 = vector.load %arg2[%c0, %c0_1, %c0_2] : memref<8x8x16xbf16, #tpu.memory_space<vmem>>, vector<8x8x16xbf16>
    %4 = vector.shape_cast %3 : vector<8x8x16xbf16> to vector<64x16xbf16>
    %c0_3 = arith.constant 0 : index
    %c0_4 = arith.constant 0 : index
    %5 = vector.load %arg3[%c0_3, %c0_4] : memref<16x512xbf16, #tpu.memory_space<vmem>>, vector<16x512xbf16>
    %cst = arith.constant dense<0.000000e+00> : vector<64x512xf32>
    %6 = tpu.matmul %4, %5, %cst {dimension_numbers = #tpu.dot_dimension_numbers<[1], [0], [0], [1], [0, 0, 1, 1], [], []>} : vector<64x16xbf16>, vector<16x512xbf16>, vector<64x512xf32> -> vector<64x512xf32>
    %c0_5 = arith.constant 0 : index
    %c0_6 = arith.constant 0 : index
    %7 = vector.load %arg5[%c0_5, %c0_6] : memref<1x512xf32, #tpu.memory_space<vmem>>, vector<1x512xf32>
    %8 = vector.broadcast %7 : vector<1x512xf32> to vector<64x512xf32>
    %9 = arith.addf %6, %8 : vector<64x512xf32>
    %10 = vector.shape_cast %9 : vector<64x512xf32> to vector<8x8x512xf32>
    %11 = arith.truncf %10 : vector<8x8x512xf32> to vector<8x8x512xbf16>
    %c0_7 = arith.constant 0 : index
    %c0_8 = arith.constant 0 : index
    %c0_9 = arith.constant 0 : index
    %12 = vector.load %arg9[%c0_7, %c0_8, %c0_9] : memref<8x8x512xbf16, #tpu.memory_space<vmem>>, vector<8x8x512xbf16>
    tpu.vector_store %arg9[%c0_7, %c0_8, %c0_9], %11 {strides = array<i32>} : memref<8x8x512xbf16, #tpu.memory_space<vmem>>, vector<8x8x512xbf16>,
    %c0_10 = arith.constant 0 : index
    %c0_11 = arith.constant 0 : index
    %13 = vector.load %arg4[%c0_10, %c0_11] : memref<128x512xbf16, #tpu.memory_space<vmem>>, vector<128x512xbf16>
    %c0_12 = arith.constant 0 : index
    %c0_13 = arith.constant 0 : index
    %14 = vector.load %arg10[%c0_12, %c0_13] : memref<8x128xf32, #tpu.memory_space<vmem>>, vector<8x128xf32>
    %c0_14 = arith.constant 0 : index
    %c0_15 = arith.constant 0 : index
    %15 = vector.load %arg11[%c0_14, %c0_15] : memref<8x128xf32, #tpu.memory_space<vmem>>, vector<8x128xf32>
    %c0_i32_16 = arith.constant 0 : i32
    %16 = arith.index_cast %c0_i32_16 : i32 to index
    %c0_17 = arith.constant 0 : index
    %c0_18 = arith.constant 0 : index
    %17 = vector.load %arg9[%16, %c0_17, %c0_18] : memref<8x8x512xbf16, #tpu.memory_space<vmem>>, vector<1x8x512xbf16>
    %18 = vector.shape_cast %17 : vector<1x8x512xbf16> to vector<8x512xbf16>
    %19 = arith.extf %18 : vector<8x512xbf16> to vector<8x512xf32>
    %20 = arith.truncf %14 : vector<8x128xf32> to vector<8x128xbf16>
    %cst_19 = arith.constant dense<0.000000e+00> : vector<8x512xf32>
    %21 = tpu.matmul %20, %13, %cst_19 {dimension_numbers = #tpu.dot_dimension_numbers<[1], [0], [0], [1], [0, 0, 1, 1], [], []>} : vector<8x128xbf16>, vector<128x512xbf16>, vector<8x512xf32> -> vector<8x512xf32>
    %22 = arith.addf %19, %21 : vector<8x512xf32>
    %23 = vector.extract_strided_slice %22 {offsets = [0, 0], sizes = [8, 128], strides = [1, 1]} : vector<8x512xf32> to vector<8x128xf32>
    %24 = arith.negf %23 : vector<8x128xf32>
    %25 = math.exp %24 : vector<8x128xf32>
    %cst_20 = arith.constant 1.000000e+00 : f32
    %26 = vector.broadcast %cst_20 : f32 to vector<8x128xf32>
    %27 = arith.addf %26, %25 : vector<8x128xf32>
    %28 = arith.divf %26, %27 : vector<8x128xf32>
    %29 = vector.extract_strided_slice %22 {offsets = [0, 128], sizes = [8, 128], strides = [1, 1]} : vector<8x512xf32> to vector<8x128xf32>
    %30 = arith.negf %29 : vector<8x128xf32>
    %31 = math.exp %30 : vector<8x128xf32>
    %cst_21 = arith.constant 1.000000e+00 : f32
    %32 = vector.broadcast %cst_21 : f32 to vector<8x128xf32>
    %33 = arith.addf %32, %31 : vector<8x128xf32>
    %34 = arith.divf %32, %33 : vector<8x128xf32>
    %35 = vector.extract_strided_slice %22 {offsets = [0, 256], sizes = [8, 128], strides = [1, 1]} : vector<8x512xf32> to vector<8x128xf32>
    %36 = math.tanh %35 : vector<8x128xf32>
    %37 = vector.extract_strided_slice %22 {offsets = [0, 384], sizes = [8, 128], strides = [1, 1]} : vector<8x512xf32> to vector<8x128xf32>
    %38 = arith.negf %37 : vector<8x128xf32>
    %39 = math.exp %38 : vector<8x128xf32>
    %cst_22 = arith.constant 1.000000e+00 : f32
    %40 = vector.broadcast %cst_22 : f32 to vector<8x128xf32>
    %41 = arith.addf %40, %39 : vector<8x128xf32>
    %42 = arith.divf %40, %41 : vector<8x128xf32>
    %43 = arith.mulf %34, %15 : vector<8x128xf32>
    %44 = arith.mulf %28, %36 : vector<8x128xf32>
    %45 = arith.addf %43, %44 : vector<8x128xf32>
    %46 = math.tanh %45 : vector<8x128xf32>
    %47 = arith.mulf %42, %46 : vector<8x128xf32>
    %c1_i32 = arith.constant 1 : i32
    %48 = arith.index_cast %c1_i32 : i32 to index
    %c0_23 = arith.constant 0 : index
    %c0_24 = arith.constant 0 : index
    %49 = vector.load %arg9[%48, %c0_23, %c0_24] : memref<8x8x512xbf16, #tpu.memory_space<vmem>>, vector<1x8x512xbf16>
    %50 = vector.shape_cast %49 : vector<1x8x512xbf16> to vector<8x512xbf16>
    %51 = arith.extf %50 : vector<8x512xbf16> to vector<8x512xf32>
    %52 = arith.truncf %47 : vector<8x128xf32> to vector<8x128xbf16>
    %cst_25 = arith.constant dense<0.000000e+00> : vector<8x512xf32>
    %53 = tpu.matmul %52, %13, %cst_25 {dimension_numbers = #tpu.dot_dimension_numbers<[1], [0], [0], [1], [0, 0, 1, 1], [], []>} : vector<8x128xbf16>, vector<128x512xbf16>, vector<8x512xf32> -> vector<8x512xf32>
    %54 = arith.addf %51, %53 : vector<8x512xf32>
    %55 = vector.extract_strided_slice %54 {offsets = [0, 0], sizes = [8, 128], strides = [1, 1]} : vector<8x512xf32> to vector<8x128xf32>
    %56 = arith.negf %55 : vector<8x128xf32>
    %57 = math.exp %56 : vector<8x128xf32>
    %cst_26 = arith.constant 1.000000e+00 : f32
    %58 = vector.broadcast %cst_26 : f32 to vector<8x128xf32>
    %59 = arith.addf %58, %57 : vector<8x128xf32>
    %60 = arith.divf %58, %59 : vector<8x128xf32>
    %61 = vector.extract_strided_slice %54 {offsets = [0, 128], sizes = [8, 128], strides = [1, 1]} : vector<8x512xf32> to vector<8x128xf32>
    %62 = arith.negf %61 : vector<8x128xf32>
    %63 = math.exp %62 : vector<8x128xf32>
    %cst_27 = arith.constant 1.000000e+00 : f32
    %64 = vector.broadcast %cst_27 : f32 to vector<8x128xf32>
    %65 = arith.addf %64, %63 : vector<8x128xf32>
    %66 = arith.divf %64, %65 : vector<8x128xf32>
    %67 = vector.extract_strided_slice %54 {offsets = [0, 256], sizes = [8, 128], strides = [1, 1]} : vector<8x512xf32> to vector<8x128xf32>
    %68 = math.tanh %67 : vector<8x128xf32>
    %69 = vector.extract_strided_slice %54 {offsets = [0, 384], sizes = [8, 128], strides = [1, 1]} : vector<8x512xf32> to vector<8x128xf32>
    %70 = arith.negf %69 : vector<8x128xf32>
    %71 = math.exp %70 : vector<8x128xf32>
    %cst_28 = arith.constant 1.000000e+00 : f32
    %72 = vector.broadcast %cst_28 : f32 to vector<8x128xf32>
    %73 = arith.addf %72, %71 : vector<8x128xf32>
    %74 = arith.divf %72, %73 : vector<8x128xf32>
    %75 = arith.mulf %66, %45 : vector<8x128xf32>
    %76 = arith.mulf %60, %68 : vector<8x128xf32>
    %77 = arith.addf %75, %76 : vector<8x128xf32>
    %78 = math.tanh %77 : vector<8x128xf32>
    %79 = arith.mulf %74, %78 : vector<8x128xf32>
    %c2_i32 = arith.constant 2 : i32
    %80 = arith.index_cast %c2_i32 : i32 to index
    %c0_29 = arith.constant 0 : index
    %c0_30 = arith.constant 0 : index
    %81 = vector.load %arg9[%80, %c0_29, %c0_30] : memref<8x8x512xbf16, #tpu.memory_space<vmem>>, vector<1x8x512xbf16>
    %82 = vector.shape_cast %81 : vector<1x8x512xbf16> to vector<8x512xbf16>
    %83 = arith.extf %82 : vector<8x512xbf16> to vector<8x512xf32>
    %84 = arith.truncf %79 : vector<8x128xf32> to vector<8x128xbf16>
    %cst_31 = arith.constant dense<0.000000e+00> : vector<8x512xf32>
    %85 = tpu.matmul %84, %13, %cst_31 {dimension_numbers = #tpu.dot_dimension_numbers<[1], [0], [0], [1], [0, 0, 1, 1], [], []>} : vector<8x128xbf16>, vector<128x512xbf16>, vector<8x512xf32> -> vector<8x512xf32>
    %86 = arith.addf %83, %85 : vector<8x512xf32>
    %87 = vector.extract_strided_slice %86 {offsets = [0, 0], sizes = [8, 128], strides = [1, 1]} : vector<8x512xf32> to vector<8x128xf32>
    %88 = arith.negf %87 : vector<8x128xf32>
    %89 = math.exp %88 : vector<8x128xf32>
    %cst_32 = arith.constant 1.000000e+00 : f32
    %90 = vector.broadcast %cst_32 : f32 to vector<8x128xf32>
    %91 = arith.addf %90, %89 : vector<8x128xf32>
    %92 = arith.divf %90, %91 : vector<8x128xf32>
    %93 = vector.extract_strided_slice %86 {offsets = [0, 128], sizes = [8, 128], strides = [1, 1]} : vector<8x512xf32> to vector<8x128xf32>
    %94 = arith.negf %93 : vector<8x128xf32>
    %95 = math.exp %94 : vector<8x128xf32>
    %cst_33 = arith.constant 1.000000e+00 : f32
    %96 = vector.broadcast %cst_33 : f32 to vector<8x128xf32>
    %97 = arith.addf %96, %95 : vector<8x128xf32>
    %98 = arith.divf %96, %97 : vector<8x128xf32>
    %99 = vector.extract_strided_slice %86 {offsets = [0, 256], sizes = [8, 128], strides = [1, 1]} : vector<8x512xf32> to vector<8x128xf32>
    %100 = math.tanh %99 : vector<8x128xf32>
    %101 = vector.extract_strided_slice %86 {offsets = [0, 384], sizes = [8, 128], strides = [1, 1]} : vector<8x512xf32> to vector<8x128xf32>
    %102 = arith.negf %101 : vector<8x128xf32>
    %103 = math.exp %102 : vector<8x128xf32>
    %cst_34 = arith.constant 1.000000e+00 : f32
    %104 = vector.broadcast %cst_34 : f32 to vector<8x128xf32>
    %105 = arith.addf %104, %103 : vector<8x128xf32>
    %106 = arith.divf %104, %105 : vector<8x128xf32>
    %107 = arith.mulf %98, %77 : vector<8x128xf32>
    %108 = arith.mulf %92, %100 : vector<8x128xf32>
    %109 = arith.addf %107, %108 : vector<8x128xf32>
    %110 = math.tanh %109 : vector<8x128xf32>
    %111 = arith.mulf %106, %110 : vector<8x128xf32>
    %c3_i32 = arith.constant 3 : i32
    %112 = arith.index_cast %c3_i32 : i32 to index
    %c0_35 = arith.constant 0 : index
    %c0_36 = arith.constant 0 : index
    %113 = vector.load %arg9[%112, %c0_35, %c0_36] : memref<8x8x512xbf16, #tpu.memory_space<vmem>>, vector<1x8x512xbf16>
    %114 = vector.shape_cast %113 : vector<1x8x512xbf16> to vector<8x512xbf16>
    %115 = arith.extf %114 : vector<8x512xbf16> to vector<8x512xf32>
    %116 = arith.truncf %111 : vector<8x128xf32> to vector<8x128xbf16>
    %cst_37 = arith.constant dense<0.000000e+00> : vector<8x512xf32>
    %117 = tpu.matmul %116, %13, %cst_37 {dimension_numbers = #tpu.dot_dimension_numbers<[1], [0], [0], [1], [0, 0, 1, 1], [], []>} : vector<8x128xbf16>, vector<128x512xbf16>, vector<8x512xf32> -> vector<8x512xf32>
    %118 = arith.addf %115, %117 : vector<8x512xf32>
    %119 = vector.extract_strided_slice %118 {offsets = [0, 0], sizes = [8, 128], strides = [1, 1]} : vector<8x512xf32> to vector<8x128xf32>
    %120 = arith.negf %119 : vector<8x128xf32>
    %121 = math.exp %120 : vector<8x128xf32>
    %cst_38 = arith.constant 1.000000e+00 : f32
    %122 = vector.broadcast %cst_38 : f32 to vector<8x128xf32>
    %123 = arith.addf %122, %121 : vector<8x128xf32>
    %124 = arith.divf %122, %123 : vector<8x128xf32>
    %125 = vector.extract_strided_slice %118 {offsets = [0, 128], sizes = [8, 128], strides = [1, 1]} : vector<8x512xf32> to vector<8x128xf32>
    %126 = arith.negf %125 : vector<8x128xf32>
    %127 = math.exp %126 : vector<8x128xf32>
    %cst_39 = arith.constant 1.000000e+00 : f32
    %128 = vector.broadcast %cst_39 : f32 to vector<8x128xf32>
    %129 = arith.addf %128, %127 : vector<8x128xf32>
    %130 = arith.divf %128, %129 : vector<8x128xf32>
    %131 = vector.extract_strided_slice %118 {offsets = [0, 256], sizes = [8, 128], strides = [1, 1]} : vector<8x512xf32> to vector<8x128xf32>
    %132 = math.tanh %131 : vector<8x128xf32>
    %133 = vector.extract_strided_slice %118 {offsets = [0, 384], sizes = [8, 128], strides = [1, 1]} : vector<8x512xf32> to vector<8x128xf32>
    %134 = arith.negf %133 : vector<8x128xf32>
    %135 = math.exp %134 : vector<8x128xf32>
    %cst_40 = arith.constant 1.000000e+00 : f32
    %136 = vector.broadcast %cst_40 : f32 to vector<8x128xf32>
    %137 = arith.addf %136, %135 : vector<8x128xf32>
    %138 = arith.divf %136, %137 : vector<8x128xf32>
    %139 = arith.mulf %130, %109 : vector<8x128xf32>
    %140 = arith.mulf %124, %132 : vector<8x128xf32>
    %141 = arith.addf %139, %140 : vector<8x128xf32>
    %142 = math.tanh %141 : vector<8x128xf32>
    %143 = arith.mulf %138, %142 : vector<8x128xf32>
    %c4_i32 = arith.constant 4 : i32
    %144 = arith.index_cast %c4_i32 : i32 to index
    %c0_41 = arith.constant 0 : index
    %c0_42 = arith.constant 0 : index
    %145 = vector.load %arg9[%144, %c0_41, %c0_42] : memref<8x8x512xbf16, #tpu.memory_space<vmem>>, vector<1x8x512xbf16>
    %146 = vector.shape_cast %145 : vector<1x8x512xbf16> to vector<8x512xbf16>
    %147 = arith.extf %146 : vector<8x512xbf16> to vector<8x512xf32>
    %148 = arith.truncf %143 : vector<8x128xf32> to vector<8x128xbf16>
    %cst_43 = arith.constant dense<0.000000e+00> : vector<8x512xf32>
    %149 = tpu.matmul %148, %13, %cst_43 {dimension_numbers = #tpu.dot_dimension_numbers<[1], [0], [0], [1], [0, 0, 1, 1], [], []>} : vector<8x128xbf16>, vector<128x512xbf16>, vector<8x512xf32> -> vector<8x512xf32>
    %150 = arith.addf %147, %149 : vector<8x512xf32>
    %151 = vector.extract_strided_slice %150 {offsets = [0, 0], sizes = [8, 128], strides = [1, 1]} : vector<8x512xf32> to vector<8x128xf32>
    %152 = arith.negf %151 : vector<8x128xf32>
    %153 = math.exp %152 : vector<8x128xf32>
    %cst_44 = arith.constant 1.000000e+00 : f32
    %154 = vector.broadcast %cst_44 : f32 to vector<8x128xf32>
    %155 = arith.addf %154, %153 : vector<8x128xf32>
    %156 = arith.divf %154, %155 : vector<8x128xf32>
    %157 = vector.extract_strided_slice %150 {offsets = [0, 128], sizes = [8, 128], strides = [1, 1]} : vector<8x512xf32> to vector<8x128xf32>
    %158 = arith.negf %157 : vector<8x128xf32>
    %159 = math.exp %158 : vector<8x128xf32>
    %cst_45 = arith.constant 1.000000e+00 : f32
    %160 = vector.broadcast %cst_45 : f32 to vector<8x128xf32>
    %161 = arith.addf %160, %159 : vector<8x128xf32>
    %162 = arith.divf %160, %161 : vector<8x128xf32>
    %163 = vector.extract_strided_slice %150 {offsets = [0, 256], sizes = [8, 128], strides = [1, 1]} : vector<8x512xf32> to vector<8x128xf32>
    %164 = math.tanh %163 : vector<8x128xf32>
    %165 = vector.extract_strided_slice %150 {offsets = [0, 384], sizes = [8, 128], strides = [1, 1]} : vector<8x512xf32> to vector<8x128xf32>
    %166 = arith.negf %165 : vector<8x128xf32>
    %167 = math.exp %166 : vector<8x128xf32>
    %cst_46 = arith.constant 1.000000e+00 : f32
    %168 = vector.broadcast %cst_46 : f32 to vector<8x128xf32>
    %169 = arith.addf %168, %167 : vector<8x128xf32>
    %170 = arith.divf %168, %169 : vector<8x128xf32>
    %171 = arith.mulf %162, %141 : vector<8x128xf32>
    %172 = arith.mulf %156, %164 : vector<8x128xf32>
    %173 = arith.addf %171, %172 : vector<8x128xf32>
    %174 = math.tanh %173 : vector<8x128xf32>
    %175 = arith.mulf %170, %174 : vector<8x128xf32>
    %c5_i32 = arith.constant 5 : i32
    %176 = arith.index_cast %c5_i32 : i32 to index
    %c0_47 = arith.constant 0 : index
    %c0_48 = arith.constant 0 : index
    %177 = vector.load %arg9[%176, %c0_47, %c0_48] : memref<8x8x512xbf16, #tpu.memory_space<vmem>>, vector<1x8x512xbf16>
    %178 = vector.shape_cast %177 : vector<1x8x512xbf16> to vector<8x512xbf16>
    %179 = arith.extf %178 : vector<8x512xbf16> to vector<8x512xf32>
    %180 = arith.truncf %175 : vector<8x128xf32> to vector<8x128xbf16>
    %cst_49 = arith.constant dense<0.000000e+00> : vector<8x512xf32>
    %181 = tpu.matmul %180, %13, %cst_49 {dimension_numbers = #tpu.dot_dimension_numbers<[1], [0], [0], [1], [0, 0, 1, 1], [], []>} : vector<8x128xbf16>, vector<128x512xbf16>, vector<8x512xf32> -> vector<8x512xf32>
    %182 = arith.addf %179, %181 : vector<8x512xf32>
    %183 = vector.extract_strided_slice %182 {offsets = [0, 0], sizes = [8, 128], strides = [1, 1]} : vector<8x512xf32> to vector<8x128xf32>
    %184 = arith.negf %183 : vector<8x128xf32>
    %185 = math.exp %184 : vector<8x128xf32>
    %cst_50 = arith.constant 1.000000e+00 : f32
    %186 = vector.broadcast %cst_50 : f32 to vector<8x128xf32>
    %187 = arith.addf %186, %185 : vector<8x128xf32>
    %188 = arith.divf %186, %187 : vector<8x128xf32>
    %189 = vector.extract_strided_slice %182 {offsets = [0, 128], sizes = [8, 128], strides = [1, 1]} : vector<8x512xf32> to vector<8x128xf32>
    %190 = arith.negf %189 : vector<8x128xf32>
    %191 = math.exp %190 : vector<8x128xf32>
    %cst_51 = arith.constant 1.000000e+00 : f32
    %192 = vector.broadcast %cst_51 : f32 to vector<8x128xf32>
    %193 = arith.addf %192, %191 : vector<8x128xf32>
    %194 = arith.divf %192, %193 : vector<8x128xf32>
    %195 = vector.extract_strided_slice %182 {offsets = [0, 256], sizes = [8, 128], strides = [1, 1]} : vector<8x512xf32> to vector<8x128xf32>
    %196 = math.tanh %195 : vector<8x128xf32>
    %197 = vector.extract_strided_slice %182 {offsets = [0, 384], sizes = [8, 128], strides = [1, 1]} : vector<8x512xf32> to vector<8x128xf32>
    %198 = arith.negf %197 : vector<8x128xf32>
    %199 = math.exp %198 : vector<8x128xf32>
    %cst_52 = arith.constant 1.000000e+00 : f32
    %200 = vector.broadcast %cst_52 : f32 to vector<8x128xf32>
    %201 = arith.addf %200, %199 : vector<8x128xf32>
    %202 = arith.divf %200, %201 : vector<8x128xf32>
    %203 = arith.mulf %194, %173 : vector<8x128xf32>
    %204 = arith.mulf %188, %196 : vector<8x128xf32>
    %205 = arith.addf %203, %204 : vector<8x128xf32>
    %206 = math.tanh %205 : vector<8x128xf32>
    %207 = arith.mulf %202, %206 : vector<8x128xf32>
    %c6_i32 = arith.constant 6 : i32
    %208 = arith.index_cast %c6_i32 : i32 to index
    %c0_53 = arith.constant 0 : index
    %c0_54 = arith.constant 0 : index
    %209 = vector.load %arg9[%208, %c0_53, %c0_54] : memref<8x8x512xbf16, #tpu.memory_space<vmem>>, vector<1x8x512xbf16>
    %210 = vector.shape_cast %209 : vector<1x8x512xbf16> to vector<8x512xbf16>
    %211 = arith.extf %210 : vector<8x512xbf16> to vector<8x512xf32>
    %212 = arith.truncf %207 : vector<8x128xf32> to vector<8x128xbf16>
    %cst_55 = arith.constant dense<0.000000e+00> : vector<8x512xf32>
    %213 = tpu.matmul %212, %13, %cst_55 {dimension_numbers = #tpu.dot_dimension_numbers<[1], [0], [0], [1], [0, 0, 1, 1], [], []>} : vector<8x128xbf16>, vector<128x512xbf16>, vector<8x512xf32> -> vector<8x512xf32>
    %214 = arith.addf %211, %213 : vector<8x512xf32>
    %215 = vector.extract_strided_slice %214 {offsets = [0, 0], sizes = [8, 128], strides = [1, 1]} : vector<8x512xf32> to vector<8x128xf32>
    %216 = arith.negf %215 : vector<8x128xf32>
    %217 = math.exp %216 : vector<8x128xf32>
    %cst_56 = arith.constant 1.000000e+00 : f32
    %218 = vector.broadcast %cst_56 : f32 to vector<8x128xf32>
    %219 = arith.addf %218, %217 : vector<8x128xf32>
    %220 = arith.divf %218, %219 : vector<8x128xf32>
    %221 = vector.extract_strided_slice %214 {offsets = [0, 128], sizes = [8, 128], strides = [1, 1]} : vector<8x512xf32> to vector<8x128xf32>
    %222 = arith.negf %221 : vector<8x128xf32>
    %223 = math.exp %222 : vector<8x128xf32>
    %cst_57 = arith.constant 1.000000e+00 : f32
    %224 = vector.broadcast %cst_57 : f32 to vector<8x128xf32>
    %225 = arith.addf %224, %223 : vector<8x128xf32>
    %226 = arith.divf %224, %225 : vector<8x128xf32>
    %227 = vector.extract_strided_slice %214 {offsets = [0, 256], sizes = [8, 128], strides = [1, 1]} : vector<8x512xf32> to vector<8x128xf32>
    %228 = math.tanh %227 : vector<8x128xf32>
    %229 = vector.extract_strided_slice %214 {offsets = [0, 384], sizes = [8, 128], strides = [1, 1]} : vector<8x512xf32> to vector<8x128xf32>
    %230 = arith.negf %229 : vector<8x128xf32>
    %231 = math.exp %230 : vector<8x128xf32>
    %cst_58 = arith.constant 1.000000e+00 : f32
    %232 = vector.broadcast %cst_58 : f32 to vector<8x128xf32>
    %233 = arith.addf %232, %231 : vector<8x128xf32>
    %234 = arith.divf %232, %233 : vector<8x128xf32>
    %235 = arith.mulf %226, %205 : vector<8x128xf32>
    %236 = arith.mulf %220, %228 : vector<8x128xf32>
    %237 = arith.addf %235, %236 : vector<8x128xf32>
    %238 = math.tanh %237 : vector<8x128xf32>
    %239 = arith.mulf %234, %238 : vector<8x128xf32>
    %c7_i32 = arith.constant 7 : i32
    %240 = arith.index_cast %c7_i32 : i32 to index
    %c0_59 = arith.constant 0 : index
    %c0_60 = arith.constant 0 : index
    %241 = vector.load %arg9[%240, %c0_59, %c0_60] : memref<8x8x512xbf16, #tpu.memory_space<vmem>>, vector<1x8x512xbf16>
    %242 = vector.shape_cast %241 : vector<1x8x512xbf16> to vector<8x512xbf16>
    %243 = arith.extf %242 : vector<8x512xbf16> to vector<8x512xf32>
    %244 = arith.truncf %239 : vector<8x128xf32> to vector<8x128xbf16>
    %cst_61 = arith.constant dense<0.000000e+00> : vector<8x512xf32>
    %245 = tpu.matmul %244, %13, %cst_61 {dimension_numbers = #tpu.dot_dimension_numbers<[1], [0], [0], [1], [0, 0, 1, 1], [], []>} : vector<8x128xbf16>, vector<128x512xbf16>, vector<8x512xf32> -> vector<8x512xf32>
    %246 = arith.addf %243, %245 : vector<8x512xf32>
    %247 = vector.extract_strided_slice %246 {offsets = [0, 0], sizes = [8, 128], strides = [1, 1]} : vector<8x512xf32> to vector<8x128xf32>
    %248 = arith.negf %247 : vector<8x128xf32>
    %249 = math.exp %248 : vector<8x128xf32>
    %cst_62 = arith.constant 1.000000e+00 : f32
    %250 = vector.broadcast %cst_62 : f32 to vector<8x128xf32>
    %251 = arith.addf %250, %249 : vector<8x128xf32>
    %252 = arith.divf %250, %251 : vector<8x128xf32>
    %253 = vector.extract_strided_slice %246 {offsets = [0, 128], sizes = [8, 128], strides = [1, 1]} : vector<8x512xf32> to vector<8x128xf32>
    %254 = arith.negf %253 : vector<8x128xf32>
    %255 = math.exp %254 : vector<8x128xf32>
    %cst_63 = arith.constant 1.000000e+00 : f32
    %256 = vector.broadcast %cst_63 : f32 to vector<8x128xf32>
    %257 = arith.addf %256, %255 : vector<8x128xf32>
    %258 = arith.divf %256, %257 : vector<8x128xf32>
    %259 = vector.extract_strided_slice %246 {offsets = [0, 256], sizes = [8, 128], strides = [1, 1]} : vector<8x512xf32> to vector<8x128xf32>
    %260 = math.tanh %259 : vector<8x128xf32>
    %261 = vector.extract_strided_slice %246 {offsets = [0, 384], sizes = [8, 128], strides = [1, 1]} : vector<8x512xf32> to vector<8x128xf32>
    %262 = arith.negf %261 : vector<8x128xf32>
    %263 = math.exp %262 : vector<8x128xf32>
    %cst_64 = arith.constant 1.000000e+00 : f32
    %264 = vector.broadcast %cst_64 : f32 to vector<8x128xf32>
    %265 = arith.addf %264, %263 : vector<8x128xf32>
    %266 = arith.divf %264, %265 : vector<8x128xf32>
    %267 = arith.mulf %258, %237 : vector<8x128xf32>
    %268 = arith.mulf %252, %260 : vector<8x128xf32>
    %269 = arith.addf %267, %268 : vector<8x128xf32>
    %270 = math.tanh %269 : vector<8x128xf32>
    %271 = arith.mulf %266, %270 : vector<8x128xf32>
    %c8_i32 = arith.constant 8 : i32
    %c0_65 = arith.constant 0 : index
    %c0_66 = arith.constant 0 : index
    %272 = vector.load %arg10[%c0_65, %c0_66] : memref<8x128xf32, #tpu.memory_space<vmem>>, vector<8x128xf32>
    tpu.vector_store %arg10[%c0_65, %c0_66], %271 {strides = array<i32>} : memref<8x128xf32, #tpu.memory_space<vmem>>, vector<8x128xf32>,
    %c0_67 = arith.constant 0 : index
    %c0_68 = arith.constant 0 : index
    %273 = vector.load %arg11[%c0_67, %c0_68] : memref<8x128xf32, #tpu.memory_space<vmem>>, vector<8x128xf32>
    tpu.vector_store %arg11[%c0_67, %c0_68], %269 {strides = array<i32>} : memref<8x128xf32, #tpu.memory_space<vmem>>, vector<8x128xf32>,
    %c0_i32_69 = arith.constant 0 : i32
    %274 = arith.cmpi eq, %arg1, %c0_i32_69 : i32
    %275 = arith.extui %274 : i1 to i32
    %c0_i32_70 = arith.constant 0 : i32
    %276 = arith.cmpi ne, %275, %c0_i32_70 : i32
    scf.if %276 {
      %c0_71 = arith.constant 0 : index
      %c0_72 = arith.constant 0 : index
      %277 = vector.load %arg10[%c0_71, %c0_72] : memref<8x128xf32, #tpu.memory_space<vmem>>, vector<8x128xf32>
      %278 = arith.truncf %277 : vector<8x128xf32> to vector<8x128xbf16>
      %c0_73 = arith.constant 0 : index
      %c0_74 = arith.constant 0 : index
      %279 = vector.load %arg6[%c0_73, %c0_74] : memref<128x512xbf16, #tpu.memory_space<vmem>>, vector<128x512xbf16>
      %cst_75 = arith.constant dense<0.000000e+00> : vector<8x512xf32>
      %280 = tpu.matmul %278, %279, %cst_75 {dimension_numbers = #tpu.dot_dimension_numbers<[1], [0], [0], [1], [0, 0, 1, 1], [], []>} : vector<8x128xbf16>, vector<128x512xbf16>, vector<8x512xf32> -> vector<8x512xf32>
      %c0_76 = arith.constant 0 : index
      %c0_77 = arith.constant 0 : index
      %281 = vector.load %arg7[%c0_76, %c0_77] : memref<1x512xf32, #tpu.memory_space<vmem>>, vector<1x512xf32>
      %282 = vector.broadcast %281 : vector<1x512xf32> to vector<8x512xf32>
      %283 = arith.addf %280, %282 : vector<8x512xf32>
      %c0_78 = arith.constant 0 : index
      %c0_79 = arith.constant 0 : index
      %284 = vector.load %arg8[%c0_78, %c0_79] : memref<8x512xf32, #tpu.memory_space<vmem>>, vector<8x512xf32>
      tpu.vector_store %arg8[%c0_78, %c0_79], %283 {strides = array<i32>} : memref<8x512xf32, #tpu.memory_space<vmem>>, vector<8x512xf32>,
    } else {
    }
    return
  }
  func.func @transform_0(%arg0: i32, %arg1: i32) -> (i32, i32, i32) {
    %c0_i32 = arith.constant 0 : i32
    %c0_i32_0 = arith.constant 0 : i32
    return %arg1, %arg0, %c0_i32 : i32, i32, i32
  }
  func.func @transform_1(%arg0: i32, %arg1: i32) -> (i32, i32) {
    %c0_i32 = arith.constant 0 : i32
    %c0_i32_0 = arith.constant 0 : i32
    %c0_i32_1 = arith.constant 0 : i32
    return %c0_i32, %c0_i32_0 : i32, i32
  }
  func.func @transform_2(%arg0: i32, %arg1: i32) -> (i32, i32) {
    %c0_i32 = arith.constant 0 : i32
    %c0_i32_0 = arith.constant 0 : i32
    %c0_i32_1 = arith.constant 0 : i32
    return %c0_i32, %c0_i32_0 : i32, i32
  }
  func.func @transform_3(%arg0: i32, %arg1: i32) -> (i32, i32) {
    %c0_i32 = arith.constant 0 : i32
    %c0_i32_0 = arith.constant 0 : i32
    %c0_i32_1 = arith.constant 0 : i32
    return %c0_i32, %c0_i32_0 : i32, i32
  }
  func.func @transform_4(%arg0: i32, %arg1: i32) -> (i32, i32) {
    %c0_i32 = arith.constant 0 : i32
    %c0_i32_0 = arith.constant 0 : i32
    %c0_i32_1 = arith.constant 0 : i32
    return %c0_i32, %c0_i32_0 : i32, i32
  }
  func.func @transform_5(%arg0: i32, %arg1: i32) -> (i32, i32) {
    %c0_i32 = arith.constant 0 : i32
    %c0_i32_0 = arith.constant 0 : i32
    %c0_i32_1 = arith.constant 0 : i32
    return %c0_i32, %c0_i32_0 : i32, i32
  }
  func.func @transform_6(%arg0: i32, %arg1: i32) -> (i32, i32) {
    %c0_i32 = arith.constant 0 : i32
    %c0_i32_0 = arith.constant 0 : i32
    return %arg0, %c0_i32 : i32, i32
  }
}

module attributes {stable_mosaic.version = 11 : i64} {
  func.func @_lstm_fc_kernel(%arg0: i32, %arg1: i32, %arg2: memref<8x8x16xbf16, #tpu.memory_space<vmem>>, %arg3: memref<16x512xbf16, #tpu.memory_space<vmem>>, %arg4: memref<128x512xbf16, #tpu.memory_space<vmem>>, %arg5: memref<1x512xf32, #tpu.memory_space<vmem>>, %arg6: memref<128x512xbf16, #tpu.memory_space<vmem>>, %arg7: memref<1x512xf32, #tpu.memory_space<vmem>>, %arg8: memref<8x512xf32, #tpu.memory_space<vmem>>, %arg9: memref<8x8x512xbf16, #tpu.memory_space<vmem>>, %arg10: memref<8x128xf32, #tpu.memory_space<vmem>>, %arg11: memref<8x128xf32, #tpu.memory_space<vmem>>) attributes {dimension_semantics = [#tpu.dimension_semantics<parallel>, #tpu.dimension_semantics<arbitrary>], iteration_bounds = array<i64: 1, 1>, scalar_prefetch = 0 : i64, scratch_operands = 3 : i64, tpu.core_type = #tpu.core_type<tc>, window_params = [{transform_indices = @transform_0, window_bounds = array<i64: 8, 8, 16>}, {pipeline_mode = #tpu.pipeline_mode<synchronous>, transform_indices = @transform_1, window_bounds = array<i64: 16, 512>}, {pipeline_mode = #tpu.pipeline_mode<synchronous>, transform_indices = @transform_2, window_bounds = array<i64: 128, 512>}, {pipeline_mode = #tpu.pipeline_mode<synchronous>, transform_indices = @transform_3, window_bounds = array<i64: 1, 512>}, {pipeline_mode = #tpu.pipeline_mode<synchronous>, transform_indices = @transform_4, window_bounds = array<i64: 128, 512>}, {pipeline_mode = #tpu.pipeline_mode<synchronous>, transform_indices = @transform_5, window_bounds = array<i64: 1, 512>}, {transform_indices = @transform_6, window_bounds = array<i64: 8, 512>}]} {
    %c0_i32 = arith.constant 0 : i32
    %0 = arith.cmpi eq, %arg1, %c0_i32 : i32
    %1 = arith.extui %0 : i1 to i32
    %c0_i32_0 = arith.constant 0 : i32
    %2 = arith.cmpi ne, %1, %c0_i32_0 : i32
    scf.if %2 {
      %cst_71 = arith.constant 0.000000e+00 : f32
      %277 = vector.broadcast %cst_71 : f32 to vector<8x128xf32>
      %c0_72 = arith.constant 0 : index
      %c0_73 = arith.constant 0 : index
      %278 = vector.load %arg10[%c0_72, %c0_73] : memref<8x128xf32, #tpu.memory_space<vmem>>, vector<8x128xf32>
      tpu.vector_store %arg10[%c0_72, %c0_73], %277 {strides = array<i32>} : memref<8x128xf32, #tpu.memory_space<vmem>>, vector<8x128xf32>,
      %cst_74 = arith.constant 0.000000e+00 : f32
      %279 = vector.broadcast %cst_74 : f32 to vector<8x128xf32>
      %c0_75 = arith.constant 0 : index
      %c0_76 = arith.constant 0 : index
      %280 = vector.load %arg11[%c0_75, %c0_76] : memref<8x128xf32, #tpu.memory_space<vmem>>, vector<8x128xf32>
      tpu.vector_store %arg11[%c0_75, %c0_76], %279 {strides = array<i32>} : memref<8x128xf32, #tpu.memory_space<vmem>>, vector<8x128xf32>,
    } else {
    }
    %c0 = arith.constant 0 : index
    %c0_1 = arith.constant 0 : index
    %c0_2 = arith.constant 0 : index
    %3 = vector.load %arg2[%c0, %c0_1, %c0_2] : memref<8x8x16xbf16, #tpu.memory_space<vmem>>, vector<8x8x16xbf16>
    %4 = vector.shape_cast %3 : vector<8x8x16xbf16> to vector<64x16xbf16>
    %c0_3 = arith.constant 0 : index
    %c0_4 = arith.constant 0 : index
    %5 = vector.load %arg3[%c0_3, %c0_4] : memref<16x512xbf16, #tpu.memory_space<vmem>>, vector<16x512xbf16>
    %cst = arith.constant dense<0.000000e+00> : vector<64x512xf32>
    %6 = tpu.matmul %4, %5, %cst {dimension_numbers = #tpu.dot_dimension_numbers<[1], [0], [0], [1], [0, 0, 1, 1], [], []>} : vector<64x16xbf16>, vector<16x512xbf16>, vector<64x512xf32> -> vector<64x512xf32>
    %c0_5 = arith.constant 0 : index
    %c0_6 = arith.constant 0 : index
    %7 = vector.load %arg5[%c0_5, %c0_6] : memref<1x512xf32, #tpu.memory_space<vmem>>, vector<1x512xf32>
    %8 = vector.broadcast %7 : vector<1x512xf32> to vector<64x512xf32>
    %9 = arith.addf %6, %8 : vector<64x512xf32>
    %10 = vector.shape_cast %9 : vector<64x512xf32> to vector<8x8x512xf32>
    %11 = arith.truncf %10 : vector<8x8x512xf32> to vector<8x8x512xbf16>
    %c0_7 = arith.constant 0 : index
    %c0_8 = arith.constant 0 : index
    %c0_9 = arith.constant 0 : index
    %12 = vector.load %arg9[%c0_7, %c0_8, %c0_9] : memref<8x8x512xbf16, #tpu.memory_space<vmem>>, vector<8x8x512xbf16>
    tpu.vector_store %arg9[%c0_7, %c0_8, %c0_9], %11 {strides = array<i32>} : memref<8x8x512xbf16, #tpu.memory_space<vmem>>, vector<8x8x512xbf16>,
    %c0_10 = arith.constant 0 : index
    %c0_11 = arith.constant 0 : index
    %13 = vector.load %arg4[%c0_10, %c0_11] : memref<128x512xbf16, #tpu.memory_space<vmem>>, vector<128x512xbf16>
    %c0_12 = arith.constant 0 : index
    %c0_13 = arith.constant 0 : index
    %14 = vector.load %arg10[%c0_12, %c0_13] : memref<8x128xf32, #tpu.memory_space<vmem>>, vector<8x128xf32>
    %c0_14 = arith.constant 0 : index
    %c0_15 = arith.constant 0 : index
    %15 = vector.load %arg11[%c0_14, %c0_15] : memref<8x128xf32, #tpu.memory_space<vmem>>, vector<8x128xf32>
    %c0_i32_16 = arith.constant 0 : i32
    %16 = arith.index_cast %c0_i32_16 : i32 to index
    %c0_17 = arith.constant 0 : index
    %c0_18 = arith.constant 0 : index
    %17 = vector.load %arg9[%16, %c0_17, %c0_18] : memref<8x8x512xbf16, #tpu.memory_space<vmem>>, vector<1x8x512xbf16>
    %18 = vector.shape_cast %17 : vector<1x8x512xbf16> to vector<8x512xbf16>
    %19 = arith.extf %18 : vector<8x512xbf16> to vector<8x512xf32>
    %20 = arith.truncf %14 : vector<8x128xf32> to vector<8x128xbf16>
    %cst_19 = arith.constant dense<0.000000e+00> : vector<8x512xf32>
    %21 = tpu.matmul %20, %13, %cst_19 {dimension_numbers = #tpu.dot_dimension_numbers<[1], [0], [0], [1], [0, 0, 1, 1], [], []>} : vector<8x128xbf16>, vector<128x512xbf16>, vector<8x512xf32> -> vector<8x512xf32>
    %22 = arith.addf %19, %21 : vector<8x512xf32>
    %23 = vector.extract_strided_slice %22 {offsets = [0, 0], sizes = [8, 128], strides = [1, 1]} : vector<8x512xf32> to vector<8x128xf32>
    %24 = arith.negf %23 : vector<8x128xf32>
    %25 = math.exp %24 : vector<8x128xf32>
    %cst_20 = arith.constant 1.000000e+00 : f32
    %26 = vector.broadcast %cst_20 : f32 to vector<8x128xf32>
    %27 = arith.addf %26, %25 : vector<8x128xf32>
    %28 = arith.divf %26, %27 : vector<8x128xf32>
    %29 = vector.extract_strided_slice %22 {offsets = [0, 128], sizes = [8, 128], strides = [1, 1]} : vector<8x512xf32> to vector<8x128xf32>
    %30 = arith.negf %29 : vector<8x128xf32>
    %31 = math.exp %30 : vector<8x128xf32>
    %cst_21 = arith.constant 1.000000e+00 : f32
    %32 = vector.broadcast %cst_21 : f32 to vector<8x128xf32>
    %33 = arith.addf %32, %31 : vector<8x128xf32>
    %34 = arith.divf %32, %33 : vector<8x128xf32>
    %35 = vector.extract_strided_slice %22 {offsets = [0, 256], sizes = [8, 128], strides = [1, 1]} : vector<8x512xf32> to vector<8x128xf32>
    %36 = math.tanh %35 : vector<8x128xf32>
    %37 = vector.extract_strided_slice %22 {offsets = [0, 384], sizes = [8, 128], strides = [1, 1]} : vector<8x512xf32> to vector<8x128xf32>
    %38 = arith.negf %37 : vector<8x128xf32>
    %39 = math.exp %38 : vector<8x128xf32>
    %cst_22 = arith.constant 1.000000e+00 : f32
    %40 = vector.broadcast %cst_22 : f32 to vector<8x128xf32>
    %41 = arith.addf %40, %39 : vector<8x128xf32>
    %42 = arith.divf %40, %41 : vector<8x128xf32>
    %43 = arith.mulf %34, %15 : vector<8x128xf32>
    %44 = arith.mulf %28, %36 : vector<8x128xf32>
    %45 = arith.addf %43, %44 : vector<8x128xf32>
    %46 = math.tanh %45 : vector<8x128xf32>
    %47 = arith.mulf %42, %46 : vector<8x128xf32>
    %c1_i32 = arith.constant 1 : i32
    %48 = arith.index_cast %c1_i32 : i32 to index
    %c0_23 = arith.constant 0 : index
    %c0_24 = arith.constant 0 : index
    %49 = vector.load %arg9[%48, %c0_23, %c0_24] : memref<8x8x512xbf16, #tpu.memory_space<vmem>>, vector<1x8x512xbf16>
    %50 = vector.shape_cast %49 : vector<1x8x512xbf16> to vector<8x512xbf16>
    %51 = arith.extf %50 : vector<8x512xbf16> to vector<8x512xf32>
    %52 = arith.truncf %47 : vector<8x128xf32> to vector<8x128xbf16>
    %cst_25 = arith.constant dense<0.000000e+00> : vector<8x512xf32>
    %53 = tpu.matmul %52, %13, %cst_25 {dimension_numbers = #tpu.dot_dimension_numbers<[1], [0], [0], [1], [0, 0, 1, 1], [], []>} : vector<8x128xbf16>, vector<128x512xbf16>, vector<8x512xf32> -> vector<8x512xf32>
    %54 = arith.addf %51, %53 : vector<8x512xf32>
    %55 = vector.extract_strided_slice %54 {offsets = [0, 0], sizes = [8, 128], strides = [1, 1]} : vector<8x512xf32> to vector<8x128xf32>
    %56 = arith.negf %55 : vector<8x128xf32>
    %57 = math.exp %56 : vector<8x128xf32>
    %cst_26 = arith.constant 1.000000e+00 : f32
    %58 = vector.broadcast %cst_26 : f32 to vector<8x128xf32>
    %59 = arith.addf %58, %57 : vector<8x128xf32>
    %60 = arith.divf %58, %59 : vector<8x128xf32>
    %61 = vector.extract_strided_slice %54 {offsets = [0, 128], sizes = [8, 128], strides = [1, 1]} : vector<8x512xf32> to vector<8x128xf32>
    %62 = arith.negf %61 : vector<8x128xf32>
    %63 = math.exp %62 : vector<8x128xf32>
    %cst_27 = arith.constant 1.000000e+00 : f32
    %64 = vector.broadcast %cst_27 : f32 to vector<8x128xf32>
    %65 = arith.addf %64, %63 : vector<8x128xf32>
    %66 = arith.divf %64, %65 : vector<8x128xf32>
    %67 = vector.extract_strided_slice %54 {offsets = [0, 256], sizes = [8, 128], strides = [1, 1]} : vector<8x512xf32> to vector<8x128xf32>
    %68 = math.tanh %67 : vector<8x128xf32>
    %69 = vector.extract_strided_slice %54 {offsets = [0, 384], sizes = [8, 128], strides = [1, 1]} : vector<8x512xf32> to vector<8x128xf32>
    %70 = arith.negf %69 : vector<8x128xf32>
    %71 = math.exp %70 : vector<8x128xf32>
    %cst_28 = arith.constant 1.000000e+00 : f32
    %72 = vector.broadcast %cst_28 : f32 to vector<8x128xf32>
    %73 = arith.addf %72, %71 : vector<8x128xf32>
    %74 = arith.divf %72, %73 : vector<8x128xf32>
    %75 = arith.mulf %66, %45 : vector<8x128xf32>
    %76 = arith.mulf %60, %68 : vector<8x128xf32>
    %77 = arith.addf %75, %76 : vector<8x128xf32>
    %78 = math.tanh %77 : vector<8x128xf32>
    %79 = arith.mulf %74, %78 : vector<8x128xf32>
    %c2_i32 = arith.constant 2 : i32
    %80 = arith.index_cast %c2_i32 : i32 to index
    %c0_29 = arith.constant 0 : index
    %c0_30 = arith.constant 0 : index
    %81 = vector.load %arg9[%80, %c0_29, %c0_30] : memref<8x8x512xbf16, #tpu.memory_space<vmem>>, vector<1x8x512xbf16>
    %82 = vector.shape_cast %81 : vector<1x8x512xbf16> to vector<8x512xbf16>
    %83 = arith.extf %82 : vector<8x512xbf16> to vector<8x512xf32>
    %84 = arith.truncf %79 : vector<8x128xf32> to vector<8x128xbf16>
    %cst_31 = arith.constant dense<0.000000e+00> : vector<8x512xf32>
    %85 = tpu.matmul %84, %13, %cst_31 {dimension_numbers = #tpu.dot_dimension_numbers<[1], [0], [0], [1], [0, 0, 1, 1], [], []>} : vector<8x128xbf16>, vector<128x512xbf16>, vector<8x512xf32> -> vector<8x512xf32>
    %86 = arith.addf %83, %85 : vector<8x512xf32>
    %87 = vector.extract_strided_slice %86 {offsets = [0, 0], sizes = [8, 128], strides = [1, 1]} : vector<8x512xf32> to vector<8x128xf32>
    %88 = arith.negf %87 : vector<8x128xf32>
    %89 = math.exp %88 : vector<8x128xf32>
    %cst_32 = arith.constant 1.000000e+00 : f32
    %90 = vector.broadcast %cst_32 : f32 to vector<8x128xf32>
    %91 = arith.addf %90, %89 : vector<8x128xf32>
    %92 = arith.divf %90, %91 : vector<8x128xf32>
    %93 = vector.extract_strided_slice %86 {offsets = [0, 128], sizes = [8, 128], strides = [1, 1]} : vector<8x512xf32> to vector<8x128xf32>
    %94 = arith.negf %93 : vector<8x128xf32>
    %95 = math.exp %94 : vector<8x128xf32>
    %cst_33 = arith.constant 1.000000e+00 : f32
    %96 = vector.broadcast %cst_33 : f32 to vector<8x128xf32>
    %97 = arith.addf %96, %95 : vector<8x128xf32>
    %98 = arith.divf %96, %97 : vector<8x128xf32>
    %99 = vector.extract_strided_slice %86 {offsets = [0, 256], sizes = [8, 128], strides = [1, 1]} : vector<8x512xf32> to vector<8x128xf32>
    %100 = math.tanh %99 : vector<8x128xf32>
    %101 = vector.extract_strided_slice %86 {offsets = [0, 384], sizes = [8, 128], strides = [1, 1]} : vector<8x512xf32> to vector<8x128xf32>
    %102 = arith.negf %101 : vector<8x128xf32>
    %103 = math.exp %102 : vector<8x128xf32>
    %cst_34 = arith.constant 1.000000e+00 : f32
    %104 = vector.broadcast %cst_34 : f32 to vector<8x128xf32>
    %105 = arith.addf %104, %103 : vector<8x128xf32>
    %106 = arith.divf %104, %105 : vector<8x128xf32>
    %107 = arith.mulf %98, %77 : vector<8x128xf32>
    %108 = arith.mulf %92, %100 : vector<8x128xf32>
    %109 = arith.addf %107, %108 : vector<8x128xf32>
    %110 = math.tanh %109 : vector<8x128xf32>
    %111 = arith.mulf %106, %110 : vector<8x128xf32>
    %c3_i32 = arith.constant 3 : i32
    %112 = arith.index_cast %c3_i32 : i32 to index
    %c0_35 = arith.constant 0 : index
    %c0_36 = arith.constant 0 : index
    %113 = vector.load %arg9[%112, %c0_35, %c0_36] : memref<8x8x512xbf16, #tpu.memory_space<vmem>>, vector<1x8x512xbf16>
    %114 = vector.shape_cast %113 : vector<1x8x512xbf16> to vector<8x512xbf16>
    %115 = arith.extf %114 : vector<8x512xbf16> to vector<8x512xf32>
    %116 = arith.truncf %111 : vector<8x128xf32> to vector<8x128xbf16>
    %cst_37 = arith.constant dense<0.000000e+00> : vector<8x512xf32>
    %117 = tpu.matmul %116, %13, %cst_37 {dimension_numbers = #tpu.dot_dimension_numbers<[1], [0], [0], [1], [0, 0, 1, 1], [], []>} : vector<8x128xbf16>, vector<128x512xbf16>, vector<8x512xf32> -> vector<8x512xf32>
    %118 = arith.addf %115, %117 : vector<8x512xf32>
    %119 = vector.extract_strided_slice %118 {offsets = [0, 0], sizes = [8, 128], strides = [1, 1]} : vector<8x512xf32> to vector<8x128xf32>
    %120 = arith.negf %119 : vector<8x128xf32>
    %121 = math.exp %120 : vector<8x128xf32>
    %cst_38 = arith.constant 1.000000e+00 : f32
    %122 = vector.broadcast %cst_38 : f32 to vector<8x128xf32>
    %123 = arith.addf %122, %121 : vector<8x128xf32>
    %124 = arith.divf %122, %123 : vector<8x128xf32>
    %125 = vector.extract_strided_slice %118 {offsets = [0, 128], sizes = [8, 128], strides = [1, 1]} : vector<8x512xf32> to vector<8x128xf32>
    %126 = arith.negf %125 : vector<8x128xf32>
    %127 = math.exp %126 : vector<8x128xf32>
    %cst_39 = arith.constant 1.000000e+00 : f32
    %128 = vector.broadcast %cst_39 : f32 to vector<8x128xf32>
    %129 = arith.addf %128, %127 : vector<8x128xf32>
    %130 = arith.divf %128, %129 : vector<8x128xf32>
    %131 = vector.extract_strided_slice %118 {offsets = [0, 256], sizes = [8, 128], strides = [1, 1]} : vector<8x512xf32> to vector<8x128xf32>
    %132 = math.tanh %131 : vector<8x128xf32>
    %133 = vector.extract_strided_slice %118 {offsets = [0, 384], sizes = [8, 128], strides = [1, 1]} : vector<8x512xf32> to vector<8x128xf32>
    %134 = arith.negf %133 : vector<8x128xf32>
    %135 = math.exp %134 : vector<8x128xf32>
    %cst_40 = arith.constant 1.000000e+00 : f32
    %136 = vector.broadcast %cst_40 : f32 to vector<8x128xf32>
    %137 = arith.addf %136, %135 : vector<8x128xf32>
    %138 = arith.divf %136, %137 : vector<8x128xf32>
    %139 = arith.mulf %130, %109 : vector<8x128xf32>
    %140 = arith.mulf %124, %132 : vector<8x128xf32>
    %141 = arith.addf %139, %140 : vector<8x128xf32>
    %142 = math.tanh %141 : vector<8x128xf32>
    %143 = arith.mulf %138, %142 : vector<8x128xf32>
    %c4_i32 = arith.constant 4 : i32
    %144 = arith.index_cast %c4_i32 : i32 to index
    %c0_41 = arith.constant 0 : index
    %c0_42 = arith.constant 0 : index
    %145 = vector.load %arg9[%144, %c0_41, %c0_42] : memref<8x8x512xbf16, #tpu.memory_space<vmem>>, vector<1x8x512xbf16>
    %146 = vector.shape_cast %145 : vector<1x8x512xbf16> to vector<8x512xbf16>
    %147 = arith.extf %146 : vector<8x512xbf16> to vector<8x512xf32>
    %148 = arith.truncf %143 : vector<8x128xf32> to vector<8x128xbf16>
    %cst_43 = arith.constant dense<0.000000e+00> : vector<8x512xf32>
    %149 = tpu.matmul %148, %13, %cst_43 {dimension_numbers = #tpu.dot_dimension_numbers<[1], [0], [0], [1], [0, 0, 1, 1], [], []>} : vector<8x128xbf16>, vector<128x512xbf16>, vector<8x512xf32> -> vector<8x512xf32>
    %150 = arith.addf %147, %149 : vector<8x512xf32>
    %151 = vector.extract_strided_slice %150 {offsets = [0, 0], sizes = [8, 128], strides = [1, 1]} : vector<8x512xf32> to vector<8x128xf32>
    %152 = arith.negf %151 : vector<8x128xf32>
    %153 = math.exp %152 : vector<8x128xf32>
    %cst_44 = arith.constant 1.000000e+00 : f32
    %154 = vector.broadcast %cst_44 : f32 to vector<8x128xf32>
    %155 = arith.addf %154, %153 : vector<8x128xf32>
    %156 = arith.divf %154, %155 : vector<8x128xf32>
    %157 = vector.extract_strided_slice %150 {offsets = [0, 128], sizes = [8, 128], strides = [1, 1]} : vector<8x512xf32> to vector<8x128xf32>
    %158 = arith.negf %157 : vector<8x128xf32>
    %159 = math.exp %158 : vector<8x128xf32>
    %cst_45 = arith.constant 1.000000e+00 : f32
    %160 = vector.broadcast %cst_45 : f32 to vector<8x128xf32>
    %161 = arith.addf %160, %159 : vector<8x128xf32>
    %162 = arith.divf %160, %161 : vector<8x128xf32>
    %163 = vector.extract_strided_slice %150 {offsets = [0, 256], sizes = [8, 128], strides = [1, 1]} : vector<8x512xf32> to vector<8x128xf32>
    %164 = math.tanh %163 : vector<8x128xf32>
    %165 = vector.extract_strided_slice %150 {offsets = [0, 384], sizes = [8, 128], strides = [1, 1]} : vector<8x512xf32> to vector<8x128xf32>
    %166 = arith.negf %165 : vector<8x128xf32>
    %167 = math.exp %166 : vector<8x128xf32>
    %cst_46 = arith.constant 1.000000e+00 : f32
    %168 = vector.broadcast %cst_46 : f32 to vector<8x128xf32>
    %169 = arith.addf %168, %167 : vector<8x128xf32>
    %170 = arith.divf %168, %169 : vector<8x128xf32>
    %171 = arith.mulf %162, %141 : vector<8x128xf32>
    %172 = arith.mulf %156, %164 : vector<8x128xf32>
    %173 = arith.addf %171, %172 : vector<8x128xf32>
    %174 = math.tanh %173 : vector<8x128xf32>
    %175 = arith.mulf %170, %174 : vector<8x128xf32>
    %c5_i32 = arith.constant 5 : i32
    %176 = arith.index_cast %c5_i32 : i32 to index
    %c0_47 = arith.constant 0 : index
    %c0_48 = arith.constant 0 : index
    %177 = vector.load %arg9[%176, %c0_47, %c0_48] : memref<8x8x512xbf16, #tpu.memory_space<vmem>>, vector<1x8x512xbf16>
    %178 = vector.shape_cast %177 : vector<1x8x512xbf16> to vector<8x512xbf16>
    %179 = arith.extf %178 : vector<8x512xbf16> to vector<8x512xf32>
    %180 = arith.truncf %175 : vector<8x128xf32> to vector<8x128xbf16>
    %cst_49 = arith.constant dense<0.000000e+00> : vector<8x512xf32>
    %181 = tpu.matmul %180, %13, %cst_49 {dimension_numbers = #tpu.dot_dimension_numbers<[1], [0], [0], [1], [0, 0, 1, 1], [], []>} : vector<8x128xbf16>, vector<128x512xbf16>, vector<8x512xf32> -> vector<8x512xf32>
    %182 = arith.addf %179, %181 : vector<8x512xf32>
    %183 = vector.extract_strided_slice %182 {offsets = [0, 0], sizes = [8, 128], strides = [1, 1]} : vector<8x512xf32> to vector<8x128xf32>
    %184 = arith.negf %183 : vector<8x128xf32>
    %185 = math.exp %184 : vector<8x128xf32>
    %cst_50 = arith.constant 1.000000e+00 : f32
    %186 = vector.broadcast %cst_50 : f32 to vector<8x128xf32>
    %187 = arith.addf %186, %185 : vector<8x128xf32>
    %188 = arith.divf %186, %187 : vector<8x128xf32>
    %189 = vector.extract_strided_slice %182 {offsets = [0, 128], sizes = [8, 128], strides = [1, 1]} : vector<8x512xf32> to vector<8x128xf32>
    %190 = arith.negf %189 : vector<8x128xf32>
    %191 = math.exp %190 : vector<8x128xf32>
    %cst_51 = arith.constant 1.000000e+00 : f32
    %192 = vector.broadcast %cst_51 : f32 to vector<8x128xf32>
    %193 = arith.addf %192, %191 : vector<8x128xf32>
    %194 = arith.divf %192, %193 : vector<8x128xf32>
    %195 = vector.extract_strided_slice %182 {offsets = [0, 256], sizes = [8, 128], strides = [1, 1]} : vector<8x512xf32> to vector<8x128xf32>
    %196 = math.tanh %195 : vector<8x128xf32>
    %197 = vector.extract_strided_slice %182 {offsets = [0, 384], sizes = [8, 128], strides = [1, 1]} : vector<8x512xf32> to vector<8x128xf32>
    %198 = arith.negf %197 : vector<8x128xf32>
    %199 = math.exp %198 : vector<8x128xf32>
    %cst_52 = arith.constant 1.000000e+00 : f32
    %200 = vector.broadcast %cst_52 : f32 to vector<8x128xf32>
    %201 = arith.addf %200, %199 : vector<8x128xf32>
    %202 = arith.divf %200, %201 : vector<8x128xf32>
    %203 = arith.mulf %194, %173 : vector<8x128xf32>
    %204 = arith.mulf %188, %196 : vector<8x128xf32>
    %205 = arith.addf %203, %204 : vector<8x128xf32>
    %206 = math.tanh %205 : vector<8x128xf32>
    %207 = arith.mulf %202, %206 : vector<8x128xf32>
    %c6_i32 = arith.constant 6 : i32
    %208 = arith.index_cast %c6_i32 : i32 to index
    %c0_53 = arith.constant 0 : index
    %c0_54 = arith.constant 0 : index
    %209 = vector.load %arg9[%208, %c0_53, %c0_54] : memref<8x8x512xbf16, #tpu.memory_space<vmem>>, vector<1x8x512xbf16>
    %210 = vector.shape_cast %209 : vector<1x8x512xbf16> to vector<8x512xbf16>
    %211 = arith.extf %210 : vector<8x512xbf16> to vector<8x512xf32>
    %212 = arith.truncf %207 : vector<8x128xf32> to vector<8x128xbf16>
    %cst_55 = arith.constant dense<0.000000e+00> : vector<8x512xf32>
    %213 = tpu.matmul %212, %13, %cst_55 {dimension_numbers = #tpu.dot_dimension_numbers<[1], [0], [0], [1], [0, 0, 1, 1], [], []>} : vector<8x128xbf16>, vector<128x512xbf16>, vector<8x512xf32> -> vector<8x512xf32>
    %214 = arith.addf %211, %213 : vector<8x512xf32>
    %215 = vector.extract_strided_slice %214 {offsets = [0, 0], sizes = [8, 128], strides = [1, 1]} : vector<8x512xf32> to vector<8x128xf32>
    %216 = arith.negf %215 : vector<8x128xf32>
    %217 = math.exp %216 : vector<8x128xf32>
    %cst_56 = arith.constant 1.000000e+00 : f32
    %218 = vector.broadcast %cst_56 : f32 to vector<8x128xf32>
    %219 = arith.addf %218, %217 : vector<8x128xf32>
    %220 = arith.divf %218, %219 : vector<8x128xf32>
    %221 = vector.extract_strided_slice %214 {offsets = [0, 128], sizes = [8, 128], strides = [1, 1]} : vector<8x512xf32> to vector<8x128xf32>
    %222 = arith.negf %221 : vector<8x128xf32>
    %223 = math.exp %222 : vector<8x128xf32>
    %cst_57 = arith.constant 1.000000e+00 : f32
    %224 = vector.broadcast %cst_57 : f32 to vector<8x128xf32>
    %225 = arith.addf %224, %223 : vector<8x128xf32>
    %226 = arith.divf %224, %225 : vector<8x128xf32>
    %227 = vector.extract_strided_slice %214 {offsets = [0, 256], sizes = [8, 128], strides = [1, 1]} : vector<8x512xf32> to vector<8x128xf32>
    %228 = math.tanh %227 : vector<8x128xf32>
    %229 = vector.extract_strided_slice %214 {offsets = [0, 384], sizes = [8, 128], strides = [1, 1]} : vector<8x512xf32> to vector<8x128xf32>
    %230 = arith.negf %229 : vector<8x128xf32>
    %231 = math.exp %230 : vector<8x128xf32>
    %cst_58 = arith.constant 1.000000e+00 : f32
    %232 = vector.broadcast %cst_58 : f32 to vector<8x128xf32>
    %233 = arith.addf %232, %231 : vector<8x128xf32>
    %234 = arith.divf %232, %233 : vector<8x128xf32>
    %235 = arith.mulf %226, %205 : vector<8x128xf32>
    %236 = arith.mulf %220, %228 : vector<8x128xf32>
    %237 = arith.addf %235, %236 : vector<8x128xf32>
    %238 = math.tanh %237 : vector<8x128xf32>
    %239 = arith.mulf %234, %238 : vector<8x128xf32>
    %c7_i32 = arith.constant 7 : i32
    %240 = arith.index_cast %c7_i32 : i32 to index
    %c0_59 = arith.constant 0 : index
    %c0_60 = arith.constant 0 : index
    %241 = vector.load %arg9[%240, %c0_59, %c0_60] : memref<8x8x512xbf16, #tpu.memory_space<vmem>>, vector<1x8x512xbf16>
    %242 = vector.shape_cast %241 : vector<1x8x512xbf16> to vector<8x512xbf16>
    %243 = arith.extf %242 : vector<8x512xbf16> to vector<8x512xf32>
    %244 = arith.truncf %239 : vector<8x128xf32> to vector<8x128xbf16>
    %cst_61 = arith.constant dense<0.000000e+00> : vector<8x512xf32>
    %245 = tpu.matmul %244, %13, %cst_61 {dimension_numbers = #tpu.dot_dimension_numbers<[1], [0], [0], [1], [0, 0, 1, 1], [], []>} : vector<8x128xbf16>, vector<128x512xbf16>, vector<8x512xf32> -> vector<8x512xf32>
    %246 = arith.addf %243, %245 : vector<8x512xf32>
    %247 = vector.extract_strided_slice %246 {offsets = [0, 0], sizes = [8, 128], strides = [1, 1]} : vector<8x512xf32> to vector<8x128xf32>
    %248 = arith.negf %247 : vector<8x128xf32>
    %249 = math.exp %248 : vector<8x128xf32>
    %cst_62 = arith.constant 1.000000e+00 : f32
    %250 = vector.broadcast %cst_62 : f32 to vector<8x128xf32>
    %251 = arith.addf %250, %249 : vector<8x128xf32>
    %252 = arith.divf %250, %251 : vector<8x128xf32>
    %253 = vector.extract_strided_slice %246 {offsets = [0, 128], sizes = [8, 128], strides = [1, 1]} : vector<8x512xf32> to vector<8x128xf32>
    %254 = arith.negf %253 : vector<8x128xf32>
    %255 = math.exp %254 : vector<8x128xf32>
    %cst_63 = arith.constant 1.000000e+00 : f32
    %256 = vector.broadcast %cst_63 : f32 to vector<8x128xf32>
    %257 = arith.addf %256, %255 : vector<8x128xf32>
    %258 = arith.divf %256, %257 : vector<8x128xf32>
    %259 = vector.extract_strided_slice %246 {offsets = [0, 256], sizes = [8, 128], strides = [1, 1]} : vector<8x512xf32> to vector<8x128xf32>
    %260 = math.tanh %259 : vector<8x128xf32>
    %261 = vector.extract_strided_slice %246 {offsets = [0, 384], sizes = [8, 128], strides = [1, 1]} : vector<8x512xf32> to vector<8x128xf32>
    %262 = arith.negf %261 : vector<8x128xf32>
    %263 = math.exp %262 : vector<8x128xf32>
    %cst_64 = arith.constant 1.000000e+00 : f32
    %264 = vector.broadcast %cst_64 : f32 to vector<8x128xf32>
    %265 = arith.addf %264, %263 : vector<8x128xf32>
    %266 = arith.divf %264, %265 : vector<8x128xf32>
    %267 = arith.mulf %258, %237 : vector<8x128xf32>
    %268 = arith.mulf %252, %260 : vector<8x128xf32>
    %269 = arith.addf %267, %268 : vector<8x128xf32>
    %270 = math.tanh %269 : vector<8x128xf32>
    %271 = arith.mulf %266, %270 : vector<8x128xf32>
    %c8_i32 = arith.constant 8 : i32
    %c0_65 = arith.constant 0 : index
    %c0_66 = arith.constant 0 : index
    %272 = vector.load %arg10[%c0_65, %c0_66] : memref<8x128xf32, #tpu.memory_space<vmem>>, vector<8x128xf32>
    tpu.vector_store %arg10[%c0_65, %c0_66], %271 {strides = array<i32>} : memref<8x128xf32, #tpu.memory_space<vmem>>, vector<8x128xf32>,
    %c0_67 = arith.constant 0 : index
    %c0_68 = arith.constant 0 : index
    %273 = vector.load %arg11[%c0_67, %c0_68] : memref<8x128xf32, #tpu.memory_space<vmem>>, vector<8x128xf32>
    tpu.vector_store %arg11[%c0_67, %c0_68], %269 {strides = array<i32>} : memref<8x128xf32, #tpu.memory_space<vmem>>, vector<8x128xf32>,
    %c0_i32_69 = arith.constant 0 : i32
    %274 = arith.cmpi eq, %arg1, %c0_i32_69 : i32
    %275 = arith.extui %274 : i1 to i32
    %c0_i32_70 = arith.constant 0 : i32
    %276 = arith.cmpi ne, %275, %c0_i32_70 : i32
    scf.if %276 {
      %c0_71 = arith.constant 0 : index
      %c0_72 = arith.constant 0 : index
      %277 = vector.load %arg10[%c0_71, %c0_72] : memref<8x128xf32, #tpu.memory_space<vmem>>, vector<8x128xf32>
      %278 = arith.truncf %277 : vector<8x128xf32> to vector<8x128xbf16>
      %c0_73 = arith.constant 0 : index
      %c0_74 = arith.constant 0 : index
      %279 = vector.load %arg6[%c0_73, %c0_74] : memref<128x512xbf16, #tpu.memory_space<vmem>>, vector<128x512xbf16>
      %cst_75 = arith.constant dense<0.000000e+00> : vector<8x512xf32>
      %280 = tpu.matmul %278, %279, %cst_75 {dimension_numbers = #tpu.dot_dimension_numbers<[1], [0], [0], [1], [0, 0, 1, 1], [], []>} : vector<8x128xbf16>, vector<128x512xbf16>, vector<8x512xf32> -> vector<8x512xf32>
      %c0_76 = arith.constant 0 : index
      %c0_77 = arith.constant 0 : index
      %281 = vector.load %arg7[%c0_76, %c0_77] : memref<1x512xf32, #tpu.memory_space<vmem>>, vector<1x512xf32>
      %282 = vector.broadcast %281 : vector<1x512xf32> to vector<8x512xf32>
      %283 = arith.addf %280, %282 : vector<8x512xf32>
      %c0_78 = arith.constant 0 : index
      %c0_79 = arith.constant 0 : index
      %284 = vector.load %arg8[%c0_78, %c0_79] : memref<8x512xf32, #tpu.memory_space<vmem>>, vector<8x512xf32>
      tpu.vector_store %arg8[%c0_78, %c0_79], %283 {strides = array<i32>} : memref<8x512xf32, #tpu.memory_space<vmem>>, vector<8x512xf32>,
    } else {
    }
    return
  }
  func.func @transform_0(%arg0: i32, %arg1: i32) -> (i32, i32, i32) {
    %c0_i32 = arith.constant 0 : i32
    %c0_i32_0 = arith.constant 0 : i32
    return %arg1, %arg0, %c0_i32 : i32, i32, i32
  }
  func.func @transform_1(%arg0: i32, %arg1: i32) -> (i32, i32) {
    %c0_i32 = arith.constant 0 : i32
    %c0_i32_0 = arith.constant 0 : i32
    %c0_i32_1 = arith.constant 0 : i32
    return %c0_i32, %c0_i32_0 : i32, i32
  }
  func.func @transform_2(%arg0: i32, %arg1: i32) -> (i32, i32) {
    %c0_i32 = arith.constant 0 : i32
    %c0_i32_0 = arith.constant 0 : i32
    %c0_i32_1 = arith.constant 0 : i32
    return %c0_i32, %c0_i32_0 : i32, i32
  }
  func.func @transform_3(%arg0: i32, %arg1: i32) -> (i32, i32) {
    %c0_i32 = arith.constant 0 : i32
    %c0_i32_0 = arith.constant 0 : i32
    %c0_i32_1 = arith.constant 0 : i32
    return %c0_i32, %c0_i32_0 : i32, i32
  }
  func.func @transform_4(%arg0: i32, %arg1: i32) -> (i32, i32) {
    %c0_i32 = arith.constant 0 : i32
    %c0_i32_0 = arith.constant 0 : i32
    %c0_i32_1 = arith.constant 0 : i32
    return %c0_i32, %c0_i32_0 : i32, i32
  }
  func.func @transform_5(%arg0: i32, %arg1: i32) -> (i32, i32) {
    %c0_i32 = arith.constant 0 : i32
    %c0_i32_0 = arith.constant 0 : i32
    %c0_i32_1 = arith.constant 0 : i32
    return %c0_i32, %c0_i32_0 : i32, i32
  }
  func.func @transform_6(%arg0: i32, %arg1: i32) -> (i32, i32) {
    %c0_i32 = arith.constant 0 : i32
    %c0_i32_0 = arith.constant 0 : i32
    return %arg0, %c0_i32 : i32, i32
  }
}

</mosaic_0001>

<llo_original>
// kernel: tpu_custom_call.1
$region0: #{tpu_custom_call.1}
  #allocation0 [shape = 'u32[]', space=smem, size = 0x4, offset = 0x4, fixed_abs, tag = 'smem constant byte address 0x4 - core index']
  #allocation1 [shape = 'u32[144,128]{1,0:T(1,128)}', space=vmem, size = 0x12000, scoped, tag = 'internal scratch']
  #allocation2 [shape = 'bf16[8,8,512]{2,1,0:T(8,128)(2,1)}', space=vmem, size = 0x10000, scoped, tag = 'scratch operand']
  #allocation3 [shape = 'f32[8,128]{1,0:T(8,128)}', space=vmem, size = 0x1000, scoped, tag = 'scratch operand']
  #allocation4 [shape = 'f32[8,128]{1,0:T(8,128)}', space=vmem, size = 0x1000, scoped, tag = 'scratch operand']
  %s0 = inlined_call_operand.hbm [shape: bf16[8,8,16], index: 0, kind: input, shape index: {}]
  %s1 = inlined_call_operand.hbm [shape: bf16[16,512], index: 1, kind: input, shape index: {}]
  %s2 = inlined_call_operand.hbm [shape: bf16[128,512], index: 2, kind: input, shape index: {}]
  %s3 = inlined_call_operand.vmem [shape: f32[1,512], index: 3, kind: input, shape index: {}]
  %s4 = inlined_call_operand.hbm [shape: bf16[128,512], index: 4, kind: input, shape index: {}]
  %s5 = inlined_call_operand.vmem [shape: f32[1,512], index: 5, kind: input, shape index: {}]
  %s6 = inlined_call_operand.hbm [shape: f32[8,512], index: 6, kind: output, shape index: {}]
  %s7 = sld [smem:[#allocation0]]
  $region58: #{tpu_custom_call.1} parent=0
    _
  %s9 = ssub.s32 1, %s7
  %s10 = scalar_select 0, %s9, %s7
  $region1: #{tpu_custom_call.1} parent=0
    #allocation5 [shape = 'u8[16384]{0}', space=vmem, size = 0x4000, scoped, tag = 'input window, operand 0, single buffered']
    #allocation6 [shape = 's32[1]{0}', space=sflag, size = 0x4, scoped, tag = 'scoped memory for tpu_custom_call.1']
    #allocation7 [shape = 's32[1]{0}', space=sflag, size = 0x4, scoped, tag = 'scoped memory for tpu_custom_call.1']
    #allocation8 [shape = 'u8[16384]{0}', space=vmem, size = 0x4000, scoped, tag = 'input window, operand 1, single buffered']
    #allocation9 [shape = 's32[1]{0}', space=sflag, size = 0x4, scoped, tag = 'scoped memory for tpu_custom_call.1']
    #allocation10 [shape = 'u8[131072]{0}', space=vmem, size = 0x20000, scoped, tag = 'input window, operand 2, single buffered']
    #allocation11 [shape = 'u8[131072]{0}', space=vmem, size = 0x20000, scoped, tag = 'input window, operand 4, single buffered']
    #allocation12 [shape = 's32[1]{0}', space=sflag, size = 0x4, scoped, tag = 'scoped memory for tpu_custom_call.1']
    #allocation13 [shape = 'u8[16384]{0}', space=vmem, size = 0x4000, scoped, tag = 'output window, operand 0, single buffered']
    %11 = vsyncpa [#allocation6], 0
    %12 = vsyncpa [#allocation9], 0
    %13 = vsyncpa [#allocation12], 0
    %14 = vsyncpa [#allocation7], 0
    // Predicated region
    $region2: #{tpu_custom_call.1} parent=1 // pred_check
      _
    $region3: #{tpu_custom_call.1} parent=1 // pred_check_branch
      %16 = sbr.rel (0) target = $region5
    $region4: #{tpu_custom_call.1} parent=1 // pred_region
      %s18 = ssub.s32 512, 512
      %19 = vsyncadd [#allocation6], %s18
      %s20 = sshll.u32 [#allocation5], 4
      %s21 = int_to_ptr.vmem [resolvable:$true] %s20
      %26 = dma.hbm_to_vmem [thread:$0]  %s0, 512, %s21, [#allocation6], 64, 64, 4
    $region5: #{tpu_custom_call.1} parent=1 // pred_fallthru
      _
    // Predicated region
    $region6: #{tpu_custom_call.1} parent=1 // pred_check
      _
    $region7: #{tpu_custom_call.1} parent=1 // pred_check_branch
      %28 = sbr.rel (0) target = $region9
    $region8: #{tpu_custom_call.1} parent=1 // pred_region
      %s30 = ssub.s32 512, 512
      %31 = vsyncadd [#allocation9], %s30
      %s32 = sshll.u32 [#allocation8], 4
      %s33 = int_to_ptr.vmem [resolvable:$true] %s32
      %38 = dma.hbm_to_vmem [thread:$0]  %s1, 512, %s33, [#allocation9], 256, 256, 16
    $region9: #{tpu_custom_call.1} parent=1 // pred_fallthru
      _
    // Predicated region
    $region10: #{tpu_custom_call.1} parent=1 // pred_check
      _
    $region11: #{tpu_custom_call.1} parent=1 // pred_check_branch
      %40 = sbr.rel (0) target = $region13
    $region12: #{tpu_custom_call.1} parent=1 // pred_region
      %s42 = ssub.s32 4096, 4096
      %43 = vsyncadd [#allocation9], %s42
      %s44 = sshll.u32 [#allocation10], 4
      %s45 = int_to_ptr.vmem [resolvable:$true] %s44
      %50 = dma.hbm_to_vmem [thread:$0]  %s2, 4096, %s45, [#allocation9], 256, 256, 16
    $region13: #{tpu_custom_call.1} parent=1 // pred_fallthru
      _
    // Predicated region
    $region14: #{tpu_custom_call.1} parent=1 // pred_check
      _
    $region15: #{tpu_custom_call.1} parent=1 // pred_check_branch
      %52 = sbr.rel (0) target = $region17
    $region16: #{tpu_custom_call.1} parent=1 // pred_region
      _
    $region17: #{tpu_custom_call.1} parent=1 // pred_fallthru
      _
    // Predicated region
    $region18: #{tpu_custom_call.1} parent=1 // pred_check
      _
    $region19: #{tpu_custom_call.1} parent=1 // pred_check_branch
      %54 = sbr.rel (0) target = $region21
    $region20: #{tpu_custom_call.1} parent=1 // pred_region
      %s56 = ssub.s32 4096, 4096
      %57 = vsyncadd [#allocation12], %s56
      %s58 = sshll.u32 [#allocation11], 4
      %s59 = int_to_ptr.vmem [resolvable:$true] %s58
      %64 = dma.hbm_to_vmem [thread:$0]  %s4, 4096, %s59, [#allocation12], 256, 256, 16
    $region21: #{tpu_custom_call.1} parent=1 // pred_fallthru
      _
    // Predicated region
    $region22: #{tpu_custom_call.1} parent=1 // pred_check
      _
    $region23: #{tpu_custom_call.1} parent=1 // pred_check_branch
      %66 = sbr.rel (0) target = $region25
    $region24: #{tpu_custom_call.1} parent=1 // pred_region
      _
    $region25: #{tpu_custom_call.1} parent=1 // pred_fallthru
      _
    // Predicated region
    $region26: #{tpu_custom_call.1} parent=1 // pred_check
      _
    $region27: #{tpu_custom_call.1} parent=1 // pred_check_branch
      %68 = sbr.rel (0) target = $region29
    $region28: #{tpu_custom_call.1} parent=1 // pred_region
      %69 = dma.done [#allocation6], 512
    $region29: #{tpu_custom_call.1} parent=1 // pred_fallthru
      _
    // Predicated region
    $region30: #{tpu_custom_call.1} parent=1 // pred_check
      _
    $region31: #{tpu_custom_call.1} parent=1 // pred_check_branch
      %71 = sbr.rel (0) target = $region33
    $region32: #{tpu_custom_call.1} parent=1 // pred_region
      %72 = dma.done [#allocation9], 512
    $region33: #{tpu_custom_call.1} parent=1 // pred_fallthru
      _
    // Predicated region
    $region34: #{tpu_custom_call.1} parent=1 // pred_check
      _
    $region35: #{tpu_custom_call.1} parent=1 // pred_check_branch
      %74 = sbr.rel (0) target = $region37
    $region36: #{tpu_custom_call.1} parent=1 // pred_region
      %75 = dma.done [#allocation9], 4096
    $region37: #{tpu_custom_call.1} parent=1 // pred_fallthru
      _
    // Predicated region
    $region38: #{tpu_custom_call.1} parent=1 // pred_check
      _
    $region39: #{tpu_custom_call.1} parent=1 // pred_check_branch
      %77 = sbr.rel (0) target = $region41
    $region40: #{tpu_custom_call.1} parent=1 // pred_region
      %78 = dma.done [#allocation12], 4096
    $region41: #{tpu_custom_call.1} parent=1 // pred_fallthru
      _
    %p80 = scmp.eq.s32.totalorder 0, 0
    // Predicated region
    $region42: #{tpu_custom_call.1} parent=1 // pred_check
      %p81 = pneg %p80
    $region43: #{tpu_custom_call.1} parent=1 // pred_check_branch
      %83 = sbr.rel (%p81) target = $region45
    $region44: #{tpu_custom_call.1} parent=1 // pred_region
      %84 = vst [vmem:[#allocation3] sm:$0xff] 0.0
      %85 = vst [vmem:[#allocation4] sm:$0xff] 0.0
    $region45: #{tpu_custom_call.1} parent=1 // pred_fallthru
      _
    %v86 = vld [vmem:[#allocation5] sm:$0xf]
    %v87 = vld [vmem:[#allocation5 + $0x4] sm:$0xf]
    %v88 = vld [vmem:[#allocation5 + $0x8] sm:$0xf]
    %v89 = vld [vmem:[#allocation5 + $0xc] sm:$0xf]
    %v90 = vld [vmem:[#allocation5 + $0x10] sm:$0xf]
    %v91 = vld [vmem:[#allocation5 + $0x14] sm:$0xf]
    %v92 = vld [vmem:[#allocation5 + $0x18] sm:$0xf]
    %v93 = vld [vmem:[#allocation5 + $0x1c] sm:$0xf]
    %v94 = vld [vmem:[#allocation8] sm:$0xff]
    %v95 = vld [vmem:[#allocation8 + $0x8] sm:$0xff]
    %v96 = vld [vmem:[#allocation8 + $0x10] sm:$0xff]
    %v97 = vld [vmem:[#allocation8 + $0x18] sm:$0xff]
    %v98 = vld [vmem:[%s3] sm:$0xf]
    %v100 = vlaneseq
    %v101 = vshrl.u32 %v100, 7
    %v102 = vsub.s32 0, %v101
    %v103 = vrot.slane %v98, %v102
    %v104 = vlaneseq
    %v105 = vshrl.u32 %v104, 7
    %v106 = vsub.s32 1, %v105
    %v107 = vrot.slane %v98, %v106
    %v108 = vlaneseq
    %v109 = vshrl.u32 %v108, 7
    %v110 = vsub.s32 2, %v109
    %v111 = vrot.slane %v98, %v110
    %v112 = vlaneseq
    %v113 = vshrl.u32 %v112, 7
    %v114 = vsub.s32 3, %v113
    %v115 = vrot.slane %v98, %v114
    %v128 = vunpack.c.l.b16 %v86
    %v129 = vunpack.c.l.b16 %v87
    %v130 = vunpack.c.l.b16 %v88
    %v131 = vunpack.c.l.b16 %v89
    %v132 = vunpack.c.l.b16 %v90
    %v133 = vunpack.c.l.b16 %v91
    %v134 = vunpack.c.l.b16 %v92
    %v135 = vunpack.c.l.b16 %v93
    %v136 = vpack.c.b16 %v129, %v128
    %v137 = vpack.c.b16 %v131, %v130
    %v138 = vpack.c.b16 %v133, %v132
    %v139 = vpack.c.b16 %v135, %v134
    %v144 = vunpack.c.l.b16 %v94
    %v145 = vunpack.c.h.b16 %v94
    %v146 = vunpack.c.l.b16 %v95
    %v147 = vunpack.c.h.b16 %v95
    %v148 = vunpack.c.l.b16 %v96
    %v149 = vunpack.c.h.b16 %v96
    %v150 = vunpack.c.l.b16 %v97
    %v151 = vunpack.c.h.b16 %v97
    %v152 = vpack.c.b16 %v148, %v144
    %v153 = vpack.c.b16 %v149, %v145
    %v154 = vpack.c.b16 %v150, %v146
    %v155 = vpack.c.b16 %v151, %v147
    %vm160 = vcmask 130048
    %v162 = vsel %vm160, %v136, 0
    %v165 = vsel %vm160, %v137, 0
    %v168 = vsel %vm160, %v138, 0
    %v171 = vsel %vm160, %v139, 0
    %173 = vmatprep.subr.bf16.mxu0 %v153
    %174 = vmatpush1.bf16.msra.mxu0 %v152
    %175 = vmatprep.subr.bf16.mxu0 0
    %176 = vmatpush1.bf16.msra.mxu0 0
    %177 = vmatprep.subr.bf16.mxu0 0
    %178 = vmatpush1.bf16.msra.mxu0 0
    %179 = vmatprep.subr.bf16.mxu0 0
    %180 = vmatpush1.bf16.msra.mxu0 0
    %181 = vmatprep.subr.bf16.mxu0 0
    %182 = vmatpush1.bf16.msra.mxu0 0
    %183 = vmatprep.subr.bf16.mxu0 0
    %184 = vmatpush1.bf16.msra.mxu0 0
    %185 = vmatprep.subr.bf16.mxu0 0
    %186 = vmatpush1.bf16.msra.mxu0 0
    %187 = vmatprep.subr.bf16.mxu0 0
    %188 = vmatpush1.bf16.msra.mxu0 0
    %189 = vmatprep.subr.bf16.mxu0 0
    %190 = vmatpush1.bf16.msra.mxu0 0
    %191 = vmatprep.subr.bf16.mxu0 0
    %192 = vmatpush1.bf16.msra.mxu0 0
    %193 = vmatprep.subr.bf16.mxu0 0
    %194 = vmatpush1.bf16.msra.mxu0 0
    %195 = vmatprep.subr.bf16.mxu0 0
    %196 = vmatpush1.bf16.msra.mxu0 0
    %197 = vmatprep.subr.bf16.mxu0 0
    %198 = vmatpush1.bf16.msra.mxu0 0
    %199 = vmatprep.subr.bf16.mxu0 0
    %200 = vmatpush1.bf16.msra.mxu0 0
    %201 = vmatprep.subr.bf16.mxu0 0
    %202 = vmatpush1.bf16.msra.mxu0 0
    %203 = vmatprep.subr.bf16.mxu0 0
    %204 = vmatpush1.bf16.msra.mxu0 0
    %205 = vmatprep.mubr.bf16.mxu0 0
    %206 = vmatmul.mubr.bf16.gmra.mrb[0].mxu0 %v162
    %v207 = vpop.f32.mrb[0].mxu0
    %v208 = vadd.f32 %v103, %v207
    %v209 = vpop.f32.mrb[0].mxu0
    %v210 = vadd.f32 %v107, %v209
    %v211 = vpop.f32.mrb[0].mxu0
    %v212 = vadd.f32 %v103, %v211
    %v213 = vpop.f32.mrb[0].mxu0
    %v214 = vadd.f32 %v107, %v213
    %215 = vmatprep.mubr.bf16.mxu0 0
    %216 = vmatmul.mubr.bf16.gmra.mrb[0].mxu0 %v165
    %v217 = vpop.f32.mrb[0].mxu0
    %v218 = vadd.f32 %v103, %v217
    %v219 = vpop.f32.mrb[0].mxu0
    %v220 = vadd.f32 %v107, %v219
    %v221 = vpop.f32.mrb[0].mxu0
    %v222 = vadd.f32 %v103, %v221
    %v223 = vpop.f32.mrb[0].mxu0
    %v224 = vadd.f32 %v107, %v223
    %225 = vmatprep.mubr.bf16.mxu0 0
    %226 = vmatmul.mubr.bf16.gmra.mrb[0].mxu0 %v168
    %v227 = vpop.f32.mrb[0].mxu0
    %v228 = vadd.f32 %v103, %v227
    %v229 = vpop.f32.mrb[0].mxu0
    %v230 = vadd.f32 %v107, %v229
    %v231 = vpop.f32.mrb[0].mxu0
    %v232 = vadd.f32 %v103, %v231
    %v233 = vpop.f32.mrb[0].mxu0
    %v234 = vadd.f32 %v107, %v233
    %235 = vmatprep.mubr.bf16.mxu0 0
    %236 = vmatmul.mubr.bf16.gmra.mrb[0].mxu0 %v171
    %v237 = vpop.f32.mrb[0].mxu0
    %v238 = vadd.f32 %v103, %v237
    %v239 = vpop.f32.mrb[0].mxu0
    %v240 = vadd.f32 %v107, %v239
    %v241 = vpop.f32.mrb[0].mxu0
    %v242 = vadd.f32 %v103, %v241
    %v243 = vpop.f32.mrb[0].mxu0
    %v244 = vadd.f32 %v107, %v243
    %245 = vdwg.mxu0
    %246 = vmatprep.subr.bf16.mxu0 %v155
    %247 = vmatpush1.bf16.msra.mxu0 %v154
    %248 = vmatprep.subr.bf16.mxu0 0
    %249 = vmatpush1.bf16.msra.mxu0 0
    %250 = vmatprep.subr.bf16.mxu0 0
    %251 = vmatpush1.bf16.msra.mxu0 0
    %252 = vmatprep.subr.bf16.mxu0 0
    %253 = vmatpush1.bf16.msra.mxu0 0
    %254 = vmatprep.subr.bf16.mxu0 0
    %255 = vmatpush1.bf16.msra.mxu0 0
    %256 = vmatprep.subr.bf16.mxu0 0
    %257 = vmatpush1.bf16.msra.mxu0 0
    %258 = vmatprep.subr.bf16.mxu0 0
    %259 = vmatpush1.bf16.msra.mxu0 0
    %260 = vmatprep.subr.bf16.mxu0 0
    %261 = vmatpush1.bf16.msra.mxu0 0
    %262 = vmatprep.subr.bf16.mxu0 0
    %263 = vmatpush1.bf16.msra.mxu0 0
    %264 = vmatprep.subr.bf16.mxu0 0
    %265 = vmatpush1.bf16.msra.mxu0 0
    %266 = vmatprep.subr.bf16.mxu0 0
    %267 = vmatpush1.bf16.msra.mxu0 0
    %268 = vmatprep.subr.bf16.mxu0 0
    %269 = vmatpush1.bf16.msra.mxu0 0
    %270 = vmatprep.subr.bf16.mxu0 0
    %271 = vmatpush1.bf16.msra.mxu0 0
    %272 = vmatprep.subr.bf16.mxu0 0
    %273 = vmatpush1.bf16.msra.mxu0 0
    %274 = vmatprep.subr.bf16.mxu0 0
    %275 = vmatpush1.bf16.msra.mxu0 0
    %276 = vmatprep.subr.bf16.mxu0 0
    %277 = vmatpush1.bf16.msra.mxu0 0
    %278 = vmatprep.mubr.bf16.mxu0 0
    %279 = vmatmul.mubr.bf16.gmra.mrb[0].mxu0 %v162
    %v280 = vpop.f32.mrb[0].mxu0
    %v281 = vadd.f32 %v111, %v280
    %v282 = vpop.f32.mrb[0].mxu0
    %v283 = vadd.f32 %v115, %v282
    %v284 = vpop.f32.mrb[0].mxu0
    %v285 = vadd.f32 %v111, %v284
    %v286 = vpop.f32.mrb[0].mxu0
    %v287 = vadd.f32 %v115, %v286
    %288 = vmatprep.mubr.bf16.mxu0 0
    %289 = vmatmul.mubr.bf16.gmra.mrb[0].mxu0 %v165
    %v290 = vpop.f32.mrb[0].mxu0
    %v291 = vadd.f32 %v111, %v290
    %v292 = vpop.f32.mrb[0].mxu0
    %v293 = vadd.f32 %v115, %v292
    %v294 = vpop.f32.mrb[0].mxu0
    %v295 = vadd.f32 %v111, %v294
    %v296 = vpop.f32.mrb[0].mxu0
    %v297 = vadd.f32 %v115, %v296
    %298 = vmatprep.mubr.bf16.mxu0 0
    %299 = vmatmul.mubr.bf16.gmra.mrb[0].mxu0 %v168
    %v300 = vpop.f32.mrb[0].mxu0
    %v301 = vadd.f32 %v111, %v300
    %v302 = vpop.f32.mrb[0].mxu0
    %v303 = vadd.f32 %v115, %v302
    %v304 = vpop.f32.mrb[0].mxu0
    %v305 = vadd.f32 %v111, %v304
    %v306 = vpop.f32.mrb[0].mxu0
    %v307 = vadd.f32 %v115, %v306
    %308 = vmatprep.mubr.bf16.mxu0 0
    %309 = vmatmul.mubr.bf16.gmra.mrb[0].mxu0 %v171
    %v310 = vpop.f32.mrb[0].mxu0
    %v311 = vadd.f32 %v111, %v310
    %v312 = vpop.f32.mrb[0].mxu0
    %v313 = vadd.f32 %v115, %v312
    %v314 = vpop.f32.mrb[0].mxu0
    %v315 = vadd.f32 %v111, %v314
    %v316 = vpop.f32.mrb[0].mxu0
    %v317 = vadd.f32 %v115, %v316
    %318 = vdwg.mxu0
    %v319 = vpack.c.bf16 %v208, %v208
    %v320 = vpack.c.bf16 %v210, %v210
    %v321 = vpack.c.bf16 %v281, %v281
    %v322 = vpack.c.bf16 %v283, %v283
    %v323 = vpack.c.bf16 %v212, %v212
    %v324 = vpack.c.bf16 %v214, %v214
    %v325 = vpack.c.bf16 %v285, %v285
    %v326 = vpack.c.bf16 %v287, %v287
    %v327 = vpack.c.bf16 %v218, %v218
    %v328 = vpack.c.bf16 %v220, %v220
    %v329 = vpack.c.bf16 %v291, %v291
    %v330 = vpack.c.bf16 %v293, %v293
    %v331 = vpack.c.bf16 %v222, %v222
    %v332 = vpack.c.bf16 %v224, %v224
    %v333 = vpack.c.bf16 %v295, %v295
    %v334 = vpack.c.bf16 %v297, %v297
    %v335 = vpack.c.bf16 %v228, %v228
    %v336 = vpack.c.bf16 %v230, %v230
    %v337 = vpack.c.bf16 %v301, %v301
    %v338 = vpack.c.bf16 %v303, %v303
    %v339 = vpack.c.bf16 %v232, %v232
    %v340 = vpack.c.bf16 %v234, %v234
    %v341 = vpack.c.bf16 %v305, %v305
    %v342 = vpack.c.bf16 %v307, %v307
    %v343 = vpack.c.bf16 %v238, %v238
    %v344 = vpack.c.bf16 %v240, %v240
    %v345 = vpack.c.bf16 %v311, %v311
    %v346 = vpack.c.bf16 %v313, %v313
    %v347 = vpack.c.bf16 %v242, %v242
    %v348 = vpack.c.bf16 %v244, %v244
    %v349 = vpack.c.bf16 %v315, %v315
    %v350 = vpack.c.bf16 %v317, %v317
    %v383 = vunpack.c.l.b16 %v319
    %v384 = vunpack.c.l.b16 %v320
    %v385 = vunpack.c.l.b16 %v321
    %v386 = vunpack.c.l.b16 %v322
    %v387 = vunpack.c.l.b16 %v323
    %v388 = vunpack.c.l.b16 %v324
    %v389 = vunpack.c.l.b16 %v325
    %v390 = vunpack.c.l.b16 %v326
    %v391 = vunpack.c.l.b16 %v327
    %v392 = vunpack.c.l.b16 %v328
    %v393 = vunpack.c.l.b16 %v329
    %v394 = vunpack.c.l.b16 %v330
    %v395 = vunpack.c.l.b16 %v331
    %v396 = vunpack.c.l.b16 %v332
    %v397 = vunpack.c.l.b16 %v333
    %v398 = vunpack.c.l.b16 %v334
    %v399 = vunpack.c.l.b16 %v335
    %v400 = vunpack.c.l.b16 %v336
    %v401 = vunpack.c.l.b16 %v337
    %v402 = vunpack.c.l.b16 %v338
    %v403 = vunpack.c.l.b16 %v339
    %v404 = vunpack.c.l.b16 %v340
    %v405 = vunpack.c.l.b16 %v341
    %v406 = vunpack.c.l.b16 %v342
    %v407 = vunpack.c.l.b16 %v343
    %v408 = vunpack.c.l.b16 %v344
    %v409 = vunpack.c.l.b16 %v345
    %v410 = vunpack.c.l.b16 %v346
    %v411 = vunpack.c.l.b16 %v347
    %v412 = vunpack.c.l.b16 %v348
    %v413 = vunpack.c.l.b16 %v349
    %v414 = vunpack.c.l.b16 %v350
    %v415 = vpack.c.b16 %v384, %v383
    %v416 = vpack.c.b16 %v386, %v385
    %v417 = vpack.c.b16 %v388, %v387
    %v418 = vpack.c.b16 %v390, %v389
    %v419 = vpack.c.b16 %v392, %v391
    %v420 = vpack.c.b16 %v394, %v393
    %v421 = vpack.c.b16 %v396, %v395
    %v422 = vpack.c.b16 %v398, %v397
    %v423 = vpack.c.b16 %v400, %v399
    %v424 = vpack.c.b16 %v402, %v401
    %v425 = vpack.c.b16 %v404, %v403
    %v426 = vpack.c.b16 %v406, %v405
    %v427 = vpack.c.b16 %v408, %v407
    %v428 = vpack.c.b16 %v410, %v409
    %v429 = vpack.c.b16 %v412, %v411
    %v430 = vpack.c.b16 %v414, %v413
    %447 = vst [vmem:[#allocation2] sm:$0xff] %v415
    %448 = vst [vmem:[#allocation2 + $0x8] sm:$0xff] %v416
    %449 = vst [vmem:[#allocation2 + $0x10] sm:$0xff] %v417
    %450 = vst [vmem:[#allocation2 + $0x18] sm:$0xff] %v418
    %451 = vst [vmem:[#allocation2 + $0x20] sm:$0xff] %v419
    %452 = vst [vmem:[#allocation2 + $0x28] sm:$0xff] %v420
    %453 = vst [vmem:[#allocation2 + $0x30] sm:$0xff] %v421
    %454 = vst [vmem:[#allocation2 + $0x38] sm:$0xff] %v422
    %455 = vst [vmem:[#allocation2 + $0x40] sm:$0xff] %v423
    %456 = vst [vmem:[#allocation2 + $0x48] sm:$0xff] %v424
    %457 = vst [vmem:[#allocation2 + $0x50] sm:$0xff] %v425
    %458 = vst [vmem:[#allocation2 + $0x58] sm:$0xff] %v426
    %459 = vst [vmem:[#allocation2 + $0x60] sm:$0xff] %v427
    %460 = vst [vmem:[#allocation2 + $0x68] sm:$0xff] %v428
    %461 = vst [vmem:[#allocation2 + $0x70] sm:$0xff] %v429
    %462 = vst [vmem:[#allocation2 + $0x78] sm:$0xff] %v430
    %v463 = vld [vmem:[#allocation10] sm:$0xff]
    %v464 = vld [vmem:[#allocation10 + $0x8] sm:$0xff]
    %v465 = vld [vmem:[#allocation10 + $0x10] sm:$0xff]
    %v466 = vld [vmem:[#allocation10 + $0x18] sm:$0xff]
    %v467 = vld [vmem:[#allocation10 + $0x20] sm:$0xff]
    %v468 = vld [vmem:[#allocation10 + $0x28] sm:$0xff]
    %v469 = vld [vmem:[#allocation10 + $0x30] sm:$0xff]
    %v470 = vld [vmem:[#allocation10 + $0x38] sm:$0xff]
    %v471 = vld [vmem:[#allocation10 + $0x40] sm:$0xff]
    %v472 = vld [vmem:[#allocation10 + $0x48] sm:$0xff]
    %v473 = vld [vmem:[#allocation10 + $0x50] sm:$0xff]
    %v474 = vld [vmem:[#allocation10 + $0x58] sm:$0xff]
    %v475 = vld [vmem:[#allocation10 + $0x60] sm:$0xff]
    %v476 = vld [vmem:[#allocation10 + $0x68] sm:$0xff]
    %v477 = vld [vmem:[#allocation10 + $0x70] sm:$0xff]
    %v478 = vld [vmem:[#allocation10 + $0x78] sm:$0xff]
    %v479 = vld [vmem:[#allocation10 + $0x80] sm:$0xff]
    %v480 = vld [vmem:[#allocation10 + $0x88] sm:$0xff]
    %v481 = vld [vmem:[#allocation10 + $0x90] sm:$0xff]
    %v482 = vld [vmem:[#allocation10 + $0x98] sm:$0xff]
    %v483 = vld [vmem:[#allocation10 + $0xa0] sm:$0xff]
    %v484 = vld [vmem:[#allocation10 + $0xa8] sm:$0xff]
    %v485 = vld [vmem:[#allocation10 + $0xb0] sm:$0xff]
    %v486 = vld [vmem:[#allocation10 + $0xb8] sm:$0xff]
    %v487 = vld [vmem:[#allocation10 + $0xc0] sm:$0xff]
    %v488 = vld [vmem:[#allocation10 + $0xc8] sm:$0xff]
    %v489 = vld [vmem:[#allocation10 + $0xd0] sm:$0xff]
    %v490 = vld [vmem:[#allocation10 + $0xd8] sm:$0xff]
    %v491 = vld [vmem:[#allocation10 + $0xe0] sm:$0xff]
    %v492 = vld [vmem:[#allocation10 + $0xe8] sm:$0xff]
    %v493 = vld [vmem:[#allocation10 + $0xf0] sm:$0xff]
    %v494 = vld [vmem:[#allocation10 + $0xf8] sm:$0xff]
    %v495 = vld [vmem:[#allocation3] sm:$0xff]
    %v496 = vld [vmem:[#allocation4] sm:$0xff]
    %v497 = vld [vmem:[#allocation2] sm:$0xff]
    %v498 = vld [vmem:[#allocation2 + $0x8] sm:$0xff]
    %v499 = vunpack.c.l.bf16 %v497
    %v500 = vunpack.c.h.bf16 %v497
    %v501 = vunpack.c.l.bf16 %v498
    %v502 = vunpack.c.h.bf16 %v498
    %v503 = vpack.c.bf16 %v495, %v495
    %v536 = vunpack.c.l.b16 %v463
    %v537 = vunpack.c.h.b16 %v463
    %v538 = vunpack.c.l.b16 %v464
    %v539 = vunpack.c.h.b16 %v464
    %v540 = vunpack.c.l.b16 %v465
    %v541 = vunpack.c.h.b16 %v465
    %v542 = vunpack.c.l.b16 %v466
    %v543 = vunpack.c.h.b16 %v466
    %v544 = vunpack.c.l.b16 %v467
    %v545 = vunpack.c.h.b16 %v467
    %v546 = vunpack.c.l.b16 %v468
    %v547 = vunpack.c.h.b16 %v468
    %v548 = vunpack.c.l.b16 %v469
    %v549 = vunpack.c.h.b16 %v469
    %v550 = vunpack.c.l.b16 %v470
    %v551 = vunpack.c.h.b16 %v470
    %v552 = vunpack.c.l.b16 %v471
    %v553 = vunpack.c.h.b16 %v471
    %v554 = vunpack.c.l.b16 %v472
    %v555 = vunpack.c.h.b16 %v472
    %v556 = vunpack.c.l.b16 %v473
    %v557 = vunpack.c.h.b16 %v473
    %v558 = vunpack.c.l.b16 %v474
    %v559 = vunpack.c.h.b16 %v474
    %v560 = vunpack.c.l.b16 %v475
    %v561 = vunpack.c.h.b16 %v475
    %v562 = vunpack.c.l.b16 %v476
    %v563 = vunpack.c.h.b16 %v476
    %v564 = vunpack.c.l.b16 %v477
    %v565 = vunpack.c.h.b16 %v477
    %v566 = vunpack.c.l.b16 %v478
    %v567 = vunpack.c.h.b16 %v478
    %v568 = vunpack.c.l.b16 %v479
    %v569 = vunpack.c.h.b16 %v479
    %v570 = vunpack.c.l.b16 %v480
    %v571 = vunpack.c.h.b16 %v480
    %v572 = vunpack.c.l.b16 %v481
    %v573 = vunpack.c.h.b16 %v481
    %v574 = vunpack.c.l.b16 %v482
    %v575 = vunpack.c.h.b16 %v482
    %v576 = vunpack.c.l.b16 %v483
    %v577 = vunpack.c.h.b16 %v483
    %v578 = vunpack.c.l.b16 %v484
    %v579 = vunpack.c.h.b16 %v484
    %v580 = vunpack.c.l.b16 %v485
    %v581 = vunpack.c.h.b16 %v485
    %v582 = vunpack.c.l.b16 %v486
    %v583 = vunpack.c.h.b16 %v486
    %v584 = vunpack.c.l.b16 %v487
    %v585 = vunpack.c.h.b16 %v487
    %v586 = vunpack.c.l.b16 %v488
    %v587 = vunpack.c.h.b16 %v488
    %v588 = vunpack.c.l.b16 %v489
    %v589 = vunpack.c.h.b16 %v489
    %v590 = vunpack.c.l.b16 %v490
    %v591 = vunpack.c.h.b16 %v490
    %v592 = vunpack.c.l.b16 %v491
    %v593 = vunpack.c.h.b16 %v491
    %v594 = vunpack.c.l.b16 %v492
    %v595 = vunpack.c.h.b16 %v492
    %v596 = vunpack.c.l.b16 %v493
    %v597 = vunpack.c.h.b16 %v493
    %v598 = vunpack.c.l.b16 %v494
    %v599 = vunpack.c.h.b16 %v494
    %v600 = vpack.c.b16 %v540, %v536
    %v601 = vpack.c.b16 %v541, %v537
    %v602 = vpack.c.b16 %v542, %v538
    %v603 = vpack.c.b16 %v543, %v539
    %v604 = vpack.c.b16 %v548, %v544
    %v605 = vpack.c.b16 %v549, %v545
    %v606 = vpack.c.b16 %v550, %v546
    %v607 = vpack.c.b16 %v551, %v547
    %v608 = vpack.c.b16 %v556, %v552
    %v609 = vpack.c.b16 %v557, %v553
    %v610 = vpack.c.b16 %v558, %v554
    %v611 = vpack.c.b16 %v559, %v555
    %v612 = vpack.c.b16 %v564, %v560
    %v613 = vpack.c.b16 %v565, %v561
    %v614 = vpack.c.b16 %v566, %v562
    %v615 = vpack.c.b16 %v567, %v563
    %v616 = vpack.c.b16 %v572, %v568
    %v617 = vpack.c.b16 %v573, %v569
    %v618 = vpack.c.b16 %v574, %v570
    %v619 = vpack.c.b16 %v575, %v571
    %v620 = vpack.c.b16 %v580, %v576
    %v621 = vpack.c.b16 %v581, %v577
    %v622 = vpack.c.b16 %v582, %v578
    %v623 = vpack.c.b16 %v583, %v579
    %v624 = vpack.c.b16 %v588, %v584
    %v625 = vpack.c.b16 %v589, %v585
    %v626 = vpack.c.b16 %v590, %v586
    %v627 = vpack.c.b16 %v591, %v587
    %v628 = vpack.c.b16 %v596, %v592
    %v629 = vpack.c.b16 %v597, %v593
    %v630 = vpack.c.b16 %v598, %v594
    %v631 = vpack.c.b16 %v599, %v595
    %664 = vmatprep.subr.bf16.mxu0 %v601
    %665 = vmatpush1.bf16.msra.mxu0 %v600
    %666 = vmatprep.subr.bf16.mxu0 %v605
    %667 = vmatpush1.bf16.msra.mxu0 %v604
    %668 = vmatprep.subr.bf16.mxu0 %v609
    %669 = vmatpush1.bf16.msra.mxu0 %v608
    %670 = vmatprep.subr.bf16.mxu0 %v613
    %671 = vmatpush1.bf16.msra.mxu0 %v612
    %672 = vmatprep.subr.bf16.mxu0 %v617
    %673 = vmatpush1.bf16.msra.mxu0 %v616
    %674 = vmatprep.subr.bf16.mxu0 %v621
    %675 = vmatpush1.bf16.msra.mxu0 %v620
    %676 = vmatprep.subr.bf16.mxu0 %v625
    %677 = vmatpush1.bf16.msra.mxu0 %v624
    %678 = vmatprep.subr.bf16.mxu0 %v629
    %679 = vmatpush1.bf16.msra.mxu0 %v628
    %680 = vmatprep.subr.bf16.mxu0 0
    %681 = vmatpush1.bf16.msra.mxu0 0
    %682 = vmatprep.subr.bf16.mxu0 0
    %683 = vmatpush1.bf16.msra.mxu0 0
    %684 = vmatprep.subr.bf16.mxu0 0
    %685 = vmatpush1.bf16.msra.mxu0 0
    %686 = vmatprep.subr.bf16.mxu0 0
    %687 = vmatpush1.bf16.msra.mxu0 0
    %688 = vmatprep.subr.bf16.mxu0 0
    %689 = vmatpush1.bf16.msra.mxu0 0
    %690 = vmatprep.subr.bf16.mxu0 0
    %691 = vmatpush1.bf16.msra.mxu0 0
    %692 = vmatprep.subr.bf16.mxu0 0
    %693 = vmatpush1.bf16.msra.mxu0 0
    %694 = vmatprep.subr.bf16.mxu0 0
    %695 = vmatpush1.bf16.msra.mxu0 0
    %696 = vmatprep.mubr.bf16.mxu0 0
    %697 = vmatmul.mubr.bf16.gmra.mrb[0].mxu0 %v503
    %v698 = vpop.f32.mrb[0].mxu0
    %v699 = vadd.f32 0.0, %v698
    %v700 = vpop.f32.mrb[0].mxu0
    %v701 = vadd.f32 0.0, %v700
    %v702 = vpop.f32.mrb[0].mxu0
    %v703 = vpop.f32.mrb[0].mxu0
    %704 = vdwg.mxu0
    %705 = vmatprep.subr.bf16.mxu0 %v603
    %706 = vmatpush1.bf16.msra.mxu0 %v602
    %707 = vmatprep.subr.bf16.mxu0 %v607
    %708 = vmatpush1.bf16.msra.mxu0 %v606
    %709 = vmatprep.subr.bf16.mxu0 %v611
    %710 = vmatpush1.bf16.msra.mxu0 %v610
    %711 = vmatprep.subr.bf16.mxu0 %v615
    %712 = vmatpush1.bf16.msra.mxu0 %v614
    %713 = vmatprep.subr.bf16.mxu0 %v619
    %714 = vmatpush1.bf16.msra.mxu0 %v618
    %715 = vmatprep.subr.bf16.mxu0 %v623
    %716 = vmatpush1.bf16.msra.mxu0 %v622
    %717 = vmatprep.subr.bf16.mxu0 %v627
    %718 = vmatpush1.bf16.msra.mxu0 %v626
    %719 = vmatprep.subr.bf16.mxu0 %v631
    %720 = vmatpush1.bf16.msra.mxu0 %v630
    %721 = vmatprep.subr.bf16.mxu0 0
    %722 = vmatpush1.bf16.msra.mxu0 0
    %723 = vmatprep.subr.bf16.mxu0 0
    %724 = vmatpush1.bf16.msra.mxu0 0
    %725 = vmatprep.subr.bf16.mxu0 0
    %726 = vmatpush1.bf16.msra.mxu0 0
    %727 = vmatprep.subr.bf16.mxu0 0
    %728 = vmatpush1.bf16.msra.mxu0 0
    %729 = vmatprep.subr.bf16.mxu0 0
    %730 = vmatpush1.bf16.msra.mxu0 0
    %731 = vmatprep.subr.bf16.mxu0 0
    %732 = vmatpush1.bf16.msra.mxu0 0
    %733 = vmatprep.subr.bf16.mxu0 0
    %734 = vmatpush1.bf16.msra.mxu0 0
    %735 = vmatprep.subr.bf16.mxu0 0
    %736 = vmatpush1.bf16.msra.mxu0 0
    %737 = vmatprep.mubr.bf16.mxu0 0
    %738 = vmatmul.mubr.bf16.gmra.mrb[0].mxu0 %v503
    %v739 = vpop.f32.mrb[0].mxu0
    %v740 = vadd.f32 0.0, %v739
    %v741 = vpop.f32.mrb[0].mxu0
    %v742 = vadd.f32 0.0, %v741
    %v743 = vpop.f32.mrb[0].mxu0
    %v744 = vpop.f32.mrb[0].mxu0
    %745 = vdwg.mxu0
    %v746 = vadd.f32 %v499, %v699
    %v747 = vadd.f32 %v500, %v701
    %v748 = vadd.f32 %v501, %v740
    %v749 = vadd.f32 %v502, %v742
    %v750 = vxor.u32 %v746, 2147483648
    %v751 = vmul.f32 %v750, 1.442695
    %v752 = vpow.pop %v751
    %v753 = vadd.f32 %v752, 1.0
    %v754 = vrcp.pop %v753
    %v755 = vmul.f32 1.0, %v754
    %v756 = vxor.u32 %v747, 2147483648
    %v757 = vmul.f32 %v756, 1.442695
    %v758 = vpow.pop %v757
    %v759 = vadd.f32 %v758, 1.0
    %v760 = vrcp.pop %v759
    %v761 = vmul.f32 1.0, %v760
    %v762 = vtanh.pop %v748
    %v763 = vxor.u32 %v749, 2147483648
    %v764 = vmul.f32 %v763, 1.442695
    %v765 = vpow.pop %v764
    %v766 = vadd.f32 %v765, 1.0
    %v767 = vrcp.pop %v766
    %v768 = vmul.f32 1.0, %v767
    %v769 = vmul.f32 %v761, %v496
    %v770 = vmul.f32 %v755, %v762
    %v771 = vadd.f32 %v769, %v770
    %v772 = vtanh.pop %v771
    %v773 = vmul.f32 %v768, %v772
    %s774 = scalar_lea.vmem [#allocation2], 16
    %v775 = vld [vmem:[%s774] sm:$0xff]
    %v776 = vld [vmem:[%s774 + $0x8] sm:$0xff]
    %v777 = vunpack.c.l.bf16 %v775
    %v778 = vunpack.c.h.bf16 %v775
    %v779 = vunpack.c.l.bf16 %v776
    %v780 = vunpack.c.h.bf16 %v776
    %v781 = vpack.c.bf16 %v773, %v773
    %782 = vmatprep.subr.bf16.mxu0 %v601
    %783 = vmatpush1.bf16.msra.mxu0 %v600
    %784 = vmatprep.subr.bf16.mxu0 %v605
    %785 = vmatpush1.bf16.msra.mxu0 %v604
    %786 = vmatprep.subr.bf16.mxu0 %v609
    %787 = vmatpush1.bf16.msra.mxu0 %v608
    %788 = vmatprep.subr.bf16.mxu0 %v613
    %789 = vmatpush1.bf16.msra.mxu0 %v612
    %790 = vmatprep.subr.bf16.mxu0 %v617
    %791 = vmatpush1.bf16.msra.mxu0 %v616
    %792 = vmatprep.subr.bf16.mxu0 %v621
    %793 = vmatpush1.bf16.msra.mxu0 %v620
    %794 = vmatprep.subr.bf16.mxu0 %v625
    %795 = vmatpush1.bf16.msra.mxu0 %v624
    %796 = vmatprep.subr.bf16.mxu0 %v629
    %797 = vmatpush1.bf16.msra.mxu0 %v628
    %798 = vmatprep.subr.bf16.mxu0 0
    %799 = vmatpush1.bf16.msra.mxu0 0
    %800 = vmatprep.subr.bf16.mxu0 0
    %801 = vmatpush1.bf16.msra.mxu0 0
    %802 = vmatprep.subr.bf16.mxu0 0
    %803 = vmatpush1.bf16.msra.mxu0 0
    %804 = vmatprep.subr.bf16.mxu0 0
    %805 = vmatpush1.bf16.msra.mxu0 0
    %806 = vmatprep.subr.bf16.mxu0 0
    %807 = vmatpush1.bf16.msra.mxu0 0
    %808 = vmatprep.subr.bf16.mxu0 0
    %809 = vmatpush1.bf16.msra.mxu0 0
    %810 = vmatprep.subr.bf16.mxu0 0
    %811 = vmatpush1.bf16.msra.mxu0 0
    %812 = vmatprep.subr.bf16.mxu0 0
    %813 = vmatpush1.bf16.msra.mxu0 0
    %814 = vmatprep.mubr.bf16.mxu0 0
    %815 = vmatmul.mubr.bf16.gmra.mrb[0].mxu0 %v781
    %v816 = vpop.f32.mrb[0].mxu0
    %v817 = vadd.f32 0.0, %v816
    %v818 = vpop.f32.mrb[0].mxu0
    %v819 = vadd.f32 0.0, %v818
    %v820 = vpop.f32.mrb[0].mxu0
    %v821 = vpop.f32.mrb[0].mxu0
    %822 = vdwg.mxu0
    %823 = vmatprep.subr.bf16.mxu0 %v603
    %824 = vmatpush1.bf16.msra.mxu0 %v602
    %825 = vmatprep.subr.bf16.mxu0 %v607
    %826 = vmatpush1.bf16.msra.mxu0 %v606
    %827 = vmatprep.subr.bf16.mxu0 %v611
    %828 = vmatpush1.bf16.msra.mxu0 %v610
    %829 = vmatprep.subr.bf16.mxu0 %v615
    %830 = vmatpush1.bf16.msra.mxu0 %v614
    %831 = vmatprep.subr.bf16.mxu0 %v619
    %832 = vmatpush1.bf16.msra.mxu0 %v618
    %833 = vmatprep.subr.bf16.mxu0 %v623
    %834 = vmatpush1.bf16.msra.mxu0 %v622
    %835 = vmatprep.subr.bf16.mxu0 %v627
    %836 = vmatpush1.bf16.msra.mxu0 %v626
    %837 = vmatprep.subr.bf16.mxu0 %v631
    %838 = vmatpush1.bf16.msra.mxu0 %v630
    %839 = vmatprep.subr.bf16.mxu0 0
    %840 = vmatpush1.bf16.msra.mxu0 0
    %841 = vmatprep.subr.bf16.mxu0 0
    %842 = vmatpush1.bf16.msra.mxu0 0
    %843 = vmatprep.subr.bf16.mxu0 0
    %844 = vmatpush1.bf16.msra.mxu0 0
    %845 = vmatprep.subr.bf16.mxu0 0
    %846 = vmatpush1.bf16.msra.mxu0 0
    %847 = vmatprep.subr.bf16.mxu0 0
    %848 = vmatpush1.bf16.msra.mxu0 0
    %849 = vmatprep.subr.bf16.mxu0 0
    %850 = vmatpush1.bf16.msra.mxu0 0
    %851 = vmatprep.subr.bf16.mxu0 0
    %852 = vmatpush1.bf16.msra.mxu0 0
    %853 = vmatprep.subr.bf16.mxu0 0
    %854 = vmatpush1.bf16.msra.mxu0 0
    %855 = vmatprep.mubr.bf16.mxu0 0
    %856 = vmatmul.mubr.bf16.gmra.mrb[0].mxu0 %v781
    %v857 = vpop.f32.mrb[0].mxu0
    %v858 = vadd.f32 0.0, %v857
    %v859 = vpop.f32.mrb[0].mxu0
    %v860 = vadd.f32 0.0, %v859
    %v861 = vpop.f32.mrb[0].mxu0
    %v862 = vpop.f32.mrb[0].mxu0
    %863 = vdwg.mxu0
    %v864 = vadd.f32 %v777, %v817
    %v865 = vadd.f32 %v778, %v819
    %v866 = vadd.f32 %v779, %v858
    %v867 = vadd.f32 %v780, %v860
    %v868 = vxor.u32 %v864, 2147483648
    %v869 = vmul.f32 %v868, 1.442695
    %v870 = vpow.pop %v869
    %v871 = vadd.f32 %v870, 1.0
    %v872 = vrcp.pop %v871
    %v873 = vmul.f32 1.0, %v872
    %v874 = vxor.u32 %v865, 2147483648
    %v875 = vmul.f32 %v874, 1.442695
    %v876 = vpow.pop %v875
    %v877 = vadd.f32 %v876, 1.0
    %v878 = vrcp.pop %v877
    %v879 = vmul.f32 1.0, %v878
    %v880 = vtanh.pop %v866
    %v881 = vxor.u32 %v867, 2147483648
    %v882 = vmul.f32 %v881, 1.442695
    %v883 = vpow.pop %v882
    %v884 = vadd.f32 %v883, 1.0
    %v885 = vrcp.pop %v884
    %v886 = vmul.f32 1.0, %v885
    %v887 = vmul.f32 %v879, %v771
    %v888 = vmul.f32 %v873, %v880
    %v889 = vadd.f32 %v887, %v888
    %v890 = vtanh.pop %v889
    %v891 = vmul.f32 %v886, %v890
    %s892 = scalar_lea.vmem [#allocation2], 32
    %v893 = vld [vmem:[%s892] sm:$0xff]
    %v894 = vld [vmem:[%s892 + $0x8] sm:$0xff]
    %v895 = vunpack.c.l.bf16 %v893
    %v896 = vunpack.c.h.bf16 %v893
    %v897 = vunpack.c.l.bf16 %v894
    %v898 = vunpack.c.h.bf16 %v894
    %v899 = vpack.c.bf16 %v891, %v891
    %900 = vmatprep.subr.bf16.mxu0 %v601
    %901 = vmatpush1.bf16.msra.mxu0 %v600
    %902 = vmatprep.subr.bf16.mxu0 %v605
    %903 = vmatpush1.bf16.msra.mxu0 %v604
    %904 = vmatprep.subr.bf16.mxu0 %v609
    %905 = vmatpush1.bf16.msra.mxu0 %v608
    %906 = vmatprep.subr.bf16.mxu0 %v613
    %907 = vmatpush1.bf16.msra.mxu0 %v612
    %908 = vmatprep.subr.bf16.mxu0 %v617
    %909 = vmatpush1.bf16.msra.mxu0 %v616
    %910 = vmatprep.subr.bf16.mxu0 %v621
    %911 = vmatpush1.bf16.msra.mxu0 %v620
    %912 = vmatprep.subr.bf16.mxu0 %v625
    %913 = vmatpush1.bf16.msra.mxu0 %v624
    %914 = vmatprep.subr.bf16.mxu0 %v629
    %915 = vmatpush1.bf16.msra.mxu0 %v628
    %916 = vmatprep.subr.bf16.mxu0 0
    %917 = vmatpush1.bf16.msra.mxu0 0
    %918 = vmatprep.subr.bf16.mxu0 0
    %919 = vmatpush1.bf16.msra.mxu0 0
    %920 = vmatprep.subr.bf16.mxu0 0
    %921 = vmatpush1.bf16.msra.mxu0 0
    %922 = vmatprep.subr.bf16.mxu0 0
    %923 = vmatpush1.bf16.msra.mxu0 0
    %924 = vmatprep.subr.bf16.mxu0 0
    %925 = vmatpush1.bf16.msra.mxu0 0
    %926 = vmatprep.subr.bf16.mxu0 0
    %927 = vmatpush1.bf16.msra.mxu0 0
    %928 = vmatprep.subr.bf16.mxu0 0
    %929 = vmatpush1.bf16.msra.mxu0 0
    %930 = vmatprep.subr.bf16.mxu0 0
    %931 = vmatpush1.bf16.msra.mxu0 0
    %932 = vmatprep.mubr.bf16.mxu0 0
    %933 = vmatmul.mubr.bf16.gmra.mrb[0].mxu0 %v899
    %v934 = vpop.f32.mrb[0].mxu0
    %v935 = vadd.f32 0.0, %v934
    %v936 = vpop.f32.mrb[0].mxu0
    %v937 = vadd.f32 0.0, %v936
    %v938 = vpop.f32.mrb[0].mxu0
    %v939 = vpop.f32.mrb[0].mxu0
    %940 = vdwg.mxu0
    %941 = vmatprep.subr.bf16.mxu0 %v603
    %942 = vmatpush1.bf16.msra.mxu0 %v602
    %943 = vmatprep.subr.bf16.mxu0 %v607
    %944 = vmatpush1.bf16.msra.mxu0 %v606
    %945 = vmatprep.subr.bf16.mxu0 %v611
    %946 = vmatpush1.bf16.msra.mxu0 %v610
    %947 = vmatprep.subr.bf16.mxu0 %v615
    %948 = vmatpush1.bf16.msra.mxu0 %v614
    %949 = vmatprep.subr.bf16.mxu0 %v619
    %950 = vmatpush1.bf16.msra.mxu0 %v618
    %951 = vmatprep.subr.bf16.mxu0 %v623
    %952 = vmatpush1.bf16.msra.mxu0 %v622
    %953 = vmatprep.subr.bf16.mxu0 %v627
    %954 = vmatpush1.bf16.msra.mxu0 %v626
    %955 = vmatprep.subr.bf16.mxu0 %v631
    %956 = vmatpush1.bf16.msra.mxu0 %v630
    %957 = vmatprep.subr.bf16.mxu0 0
    %958 = vmatpush1.bf16.msra.mxu0 0
    %959 = vmatprep.subr.bf16.mxu0 0
    %960 = vmatpush1.bf16.msra.mxu0 0
    %961 = vmatprep.subr.bf16.mxu0 0
    %962 = vmatpush1.bf16.msra.mxu0 0
    %963 = vmatprep.subr.bf16.mxu0 0
    %964 = vmatpush1.bf16.msra.mxu0 0
    %965 = vmatprep.subr.bf16.mxu0 0
    %966 = vmatpush1.bf16.msra.mxu0 0
    %967 = vmatprep.subr.bf16.mxu0 0
    %968 = vmatpush1.bf16.msra.mxu0 0
    %969 = vmatprep.subr.bf16.mxu0 0
    %970 = vmatpush1.bf16.msra.mxu0 0
    %971 = vmatprep.subr.bf16.mxu0 0
    %972 = vmatpush1.bf16.msra.mxu0 0
    %973 = vmatprep.mubr.bf16.mxu0 0
    %974 = vmatmul.mubr.bf16.gmra.mrb[0].mxu0 %v899
    %v975 = vpop.f32.mrb[0].mxu0
    %v976 = vadd.f32 0.0, %v975
    %v977 = vpop.f32.mrb[0].mxu0
    %v978 = vadd.f32 0.0, %v977
    %v979 = vpop.f32.mrb[0].mxu0
    %v980 = vpop.f32.mrb[0].mxu0
    %981 = vdwg.mxu0
    %v982 = vadd.f32 %v895, %v935
    %v983 = vadd.f32 %v896, %v937
    %v984 = vadd.f32 %v897, %v976
    %v985 = vadd.f32 %v898, %v978
    %v986 = vxor.u32 %v982, 2147483648
    %v987 = vmul.f32 %v986, 1.442695
    %v988 = vpow.pop %v987
    %v989 = vadd.f32 %v988, 1.0
    %v990 = vrcp.pop %v989
    %v991 = vmul.f32 1.0, %v990
    %v992 = vxor.u32 %v983, 2147483648
    %v993 = vmul.f32 %v992, 1.442695
    %v994 = vpow.pop %v993
    %v995 = vadd.f32 %v994, 1.0
    %v996 = vrcp.pop %v995
    %v997 = vmul.f32 1.0, %v996
    %v998 = vtanh.pop %v984
    %v999 = vxor.u32 %v985, 2147483648
    %v1000 = vmul.f32 %v999, 1.442695
    %v1001 = vpow.pop %v1000
    %v1002 = vadd.f32 %v1001, 1.0
    %v1003 = vrcp.pop %v1002
    %v1004 = vmul.f32 1.0, %v1003
    %v1005 = vmul.f32 %v997, %v889
    %v1006 = vmul.f32 %v991, %v998
    %v1007 = vadd.f32 %v1005, %v1006
    %v1008 = vtanh.pop %v1007
    %v1009 = vmul.f32 %v1004, %v1008
    %s1010 = scalar_lea.vmem [#allocation2], 48
    %v1011 = vld [vmem:[%s1010] sm:$0xff]
    %v1012 = vld [vmem:[%s1010 + $0x8] sm:$0xff]
    %v1013 = vunpack.c.l.bf16 %v1011
    %v1014 = vunpack.c.h.bf16 %v1011
    %v1015 = vunpack.c.l.bf16 %v1012
    %v1016 = vunpack.c.h.bf16 %v1012
    %v1017 = vpack.c.bf16 %v1009, %v1009
    %1018 = vmatprep.subr.bf16.mxu0 %v601
    %1019 = vmatpush1.bf16.msra.mxu0 %v600
    %1020 = vmatprep.subr.bf16.mxu0 %v605
    %1021 = vmatpush1.bf16.msra.mxu0 %v604
    %1022 = vmatprep.subr.bf16.mxu0 %v609
    %1023 = vmatpush1.bf16.msra.mxu0 %v608
    %1024 = vmatprep.subr.bf16.mxu0 %v613
    %1025 = vmatpush1.bf16.msra.mxu0 %v612
    %1026 = vmatprep.subr.bf16.mxu0 %v617
    %1027 = vmatpush1.bf16.msra.mxu0 %v616
    %1028 = vmatprep.subr.bf16.mxu0 %v621
    %1029 = vmatpush1.bf16.msra.mxu0 %v620
    %1030 = vmatprep.subr.bf16.mxu0 %v625
    %1031 = vmatpush1.bf16.msra.mxu0 %v624
    %1032 = vmatprep.subr.bf16.mxu0 %v629
    %1033 = vmatpush1.bf16.msra.mxu0 %v628
    %1034 = vmatprep.subr.bf16.mxu0 0
    %1035 = vmatpush1.bf16.msra.mxu0 0
    %1036 = vmatprep.subr.bf16.mxu0 0
    %1037 = vmatpush1.bf16.msra.mxu0 0
    %1038 = vmatprep.subr.bf16.mxu0 0
    %1039 = vmatpush1.bf16.msra.mxu0 0
    %1040 = vmatprep.subr.bf16.mxu0 0
    %1041 = vmatpush1.bf16.msra.mxu0 0
    %1042 = vmatprep.subr.bf16.mxu0 0
    %1043 = vmatpush1.bf16.msra.mxu0 0
    %1044 = vmatprep.subr.bf16.mxu0 0
    %1045 = vmatpush1.bf16.msra.mxu0 0
    %1046 = vmatprep.subr.bf16.mxu0 0
    %1047 = vmatpush1.bf16.msra.mxu0 0
    %1048 = vmatprep.subr.bf16.mxu0 0
    %1049 = vmatpush1.bf16.msra.mxu0 0
    %1050 = vmatprep.mubr.bf16.mxu0 0
    %1051 = vmatmul.mubr.bf16.gmra.mrb[0].mxu0 %v1017
    %v1052 = vpop.f32.mrb[0].mxu0
    %v1053 = vadd.f32 0.0, %v1052
    %v1054 = vpop.f32.mrb[0].mxu0
    %v1055 = vadd.f32 0.0, %v1054
    %v1056 = vpop.f32.mrb[0].mxu0
    %v1057 = vpop.f32.mrb[0].mxu0
    %1058 = vdwg.mxu0
    %1059 = vmatprep.subr.bf16.mxu0 %v603
    %1060 = vmatpush1.bf16.msra.mxu0 %v602
    %1061 = vmatprep.subr.bf16.mxu0 %v607
    %1062 = vmatpush1.bf16.msra.mxu0 %v606
    %1063 = vmatprep.subr.bf16.mxu0 %v611
    %1064 = vmatpush1.bf16.msra.mxu0 %v610
    %1065 = vmatprep.subr.bf16.mxu0 %v615
    %1066 = vmatpush1.bf16.msra.mxu0 %v614
    %1067 = vmatprep.subr.bf16.mxu0 %v619
    %1068 = vmatpush1.bf16.msra.mxu0 %v618
    %1069 = vmatprep.subr.bf16.mxu0 %v623
    %1070 = vmatpush1.bf16.msra.mxu0 %v622
    %1071 = vmatprep.subr.bf16.mxu0 %v627
    %1072 = vmatpush1.bf16.msra.mxu0 %v626
    %1073 = vmatprep.subr.bf16.mxu0 %v631
    %1074 = vmatpush1.bf16.msra.mxu0 %v630
    %1075 = vmatprep.subr.bf16.mxu0 0
    %1076 = vmatpush1.bf16.msra.mxu0 0
    %1077 = vmatprep.subr.bf16.mxu0 0
    %1078 = vmatpush1.bf16.msra.mxu0 0
    %1079 = vmatprep.subr.bf16.mxu0 0
    %1080 = vmatpush1.bf16.msra.mxu0 0
    %1081 = vmatprep.subr.bf16.mxu0 0
    %1082 = vmatpush1.bf16.msra.mxu0 0
    %1083 = vmatprep.subr.bf16.mxu0 0
    %1084 = vmatpush1.bf16.msra.mxu0 0
    %1085 = vmatprep.subr.bf16.mxu0 0
    %1086 = vmatpush1.bf16.msra.mxu0 0
    %1087 = vmatprep.subr.bf16.mxu0 0
    %1088 = vmatpush1.bf16.msra.mxu0 0
    %1089 = vmatprep.subr.bf16.mxu0 0
    %1090 = vmatpush1.bf16.msra.mxu0 0
    %1091 = vmatprep.mubr.bf16.mxu0 0
    %1092 = vmatmul.mubr.bf16.gmra.mrb[0].mxu0 %v1017
    %v1093 = vpop.f32.mrb[0].mxu0
    %v1094 = vadd.f32 0.0, %v1093
    %v1095 = vpop.f32.mrb[0].mxu0
    %v1096 = vadd.f32 0.0, %v1095
    %v1097 = vpop.f32.mrb[0].mxu0
    %v1098 = vpop.f32.mrb[0].mxu0
    %1099 = vdwg.mxu0
    %v1100 = vadd.f32 %v1013, %v1053
    %v1101 = vadd.f32 %v1014, %v1055
    %v1102 = vadd.f32 %v1015, %v1094
    %v1103 = vadd.f32 %v1016, %v1096
    %v1104 = vxor.u32 %v1100, 2147483648
    %v1105 = vmul.f32 %v1104, 1.442695
    %v1106 = vpow.pop %v1105
    %v1107 = vadd.f32 %v1106, 1.0
    %v1108 = vrcp.pop %v1107
    %v1109 = vmul.f32 1.0, %v1108
    %v1110 = vxor.u32 %v1101, 2147483648
    %v1111 = vmul.f32 %v1110, 1.442695
    %v1112 = vpow.pop %v1111
    %v1113 = vadd.f32 %v1112, 1.0
    %v1114 = vrcp.pop %v1113
    %v1115 = vmul.f32 1.0, %v1114
    %v1116 = vtanh.pop %v1102
    %v1117 = vxor.u32 %v1103, 2147483648
    %v1118 = vmul.f32 %v1117, 1.442695
    %v1119 = vpow.pop %v1118
    %v1120 = vadd.f32 %v1119, 1.0
    %v1121 = vrcp.pop %v1120
    %v1122 = vmul.f32 1.0, %v1121
    %v1123 = vmul.f32 %v1115, %v1007
    %v1124 = vmul.f32 %v1109, %v1116
    %v1125 = vadd.f32 %v1123, %v1124
    %v1126 = vtanh.pop %v1125
    %v1127 = vmul.f32 %v1122, %v1126
    %s1128 = scalar_lea.vmem [#allocation2], 64
    %v1129 = vld [vmem:[%s1128] sm:$0xff]
    %v1130 = vld [vmem:[%s1128 + $0x8] sm:$0xff]
    %v1131 = vunpack.c.l.bf16 %v1129
    %v1132 = vunpack.c.h.bf16 %v1129
    %v1133 = vunpack.c.l.bf16 %v1130
    %v1134 = vunpack.c.h.bf16 %v1130
    %v1135 = vpack.c.bf16 %v1127, %v1127
    %1136 = vmatprep.subr.bf16.mxu0 %v601
    %1137 = vmatpush1.bf16.msra.mxu0 %v600
    %1138 = vmatprep.subr.bf16.mxu0 %v605
    %1139 = vmatpush1.bf16.msra.mxu0 %v604
    %1140 = vmatprep.subr.bf16.mxu0 %v609
    %1141 = vmatpush1.bf16.msra.mxu0 %v608
    %1142 = vmatprep.subr.bf16.mxu0 %v613
    %1143 = vmatpush1.bf16.msra.mxu0 %v612
    %1144 = vmatprep.subr.bf16.mxu0 %v617
    %1145 = vmatpush1.bf16.msra.mxu0 %v616
    %1146 = vmatprep.subr.bf16.mxu0 %v621
    %1147 = vmatpush1.bf16.msra.mxu0 %v620
    %1148 = vmatprep.subr.bf16.mxu0 %v625
    %1149 = vmatpush1.bf16.msra.mxu0 %v624
    %1150 = vmatprep.subr.bf16.mxu0 %v629
    %1151 = vmatpush1.bf16.msra.mxu0 %v628
    %1152 = vmatprep.subr.bf16.mxu0 0
    %1153 = vmatpush1.bf16.msra.mxu0 0
    %1154 = vmatprep.subr.bf16.mxu0 0
    %1155 = vmatpush1.bf16.msra.mxu0 0
    %1156 = vmatprep.subr.bf16.mxu0 0
    %1157 = vmatpush1.bf16.msra.mxu0 0
    %1158 = vmatprep.subr.bf16.mxu0 0
    %1159 = vmatpush1.bf16.msra.mxu0 0
    %1160 = vmatprep.subr.bf16.mxu0 0
    %1161 = vmatpush1.bf16.msra.mxu0 0
    %1162 = vmatprep.subr.bf16.mxu0 0
    %1163 = vmatpush1.bf16.msra.mxu0 0
    %1164 = vmatprep.subr.bf16.mxu0 0
    %1165 = vmatpush1.bf16.msra.mxu0 0
    %1166 = vmatprep.subr.bf16.mxu0 0
    %1167 = vmatpush1.bf16.msra.mxu0 0
    %1168 = vmatprep.mubr.bf16.mxu0 0
    %1169 = vmatmul.mubr.bf16.gmra.mrb[0].mxu0 %v1135
    %v1170 = vpop.f32.mrb[0].mxu0
    %v1171 = vadd.f32 0.0, %v1170
    %v1172 = vpop.f32.mrb[0].mxu0
    %v1173 = vadd.f32 0.0, %v1172
    %v1174 = vpop.f32.mrb[0].mxu0
    %v1175 = vpop.f32.mrb[0].mxu0
    %1176 = vdwg.mxu0
    %1177 = vmatprep.subr.bf16.mxu0 %v603
    %1178 = vmatpush1.bf16.msra.mxu0 %v602
    %1179 = vmatprep.subr.bf16.mxu0 %v607
    %1180 = vmatpush1.bf16.msra.mxu0 %v606
    %1181 = vmatprep.subr.bf16.mxu0 %v611
    %1182 = vmatpush1.bf16.msra.mxu0 %v610
    %1183 = vmatprep.subr.bf16.mxu0 %v615
    %1184 = vmatpush1.bf16.msra.mxu0 %v614
    %1185 = vmatprep.subr.bf16.mxu0 %v619
    %1186 = vmatpush1.bf16.msra.mxu0 %v618
    %1187 = vmatprep.subr.bf16.mxu0 %v623
    %1188 = vmatpush1.bf16.msra.mxu0 %v622
    %1189 = vmatprep.subr.bf16.mxu0 %v627
    %1190 = vmatpush1.bf16.msra.mxu0 %v626
    %1191 = vmatprep.subr.bf16.mxu0 %v631
    %1192 = vmatpush1.bf16.msra.mxu0 %v630
    %1193 = vmatprep.subr.bf16.mxu0 0
    %1194 = vmatpush1.bf16.msra.mxu0 0
    %1195 = vmatprep.subr.bf16.mxu0 0
    %1196 = vmatpush1.bf16.msra.mxu0 0
    %1197 = vmatprep.subr.bf16.mxu0 0
    %1198 = vmatpush1.bf16.msra.mxu0 0
    %1199 = vmatprep.subr.bf16.mxu0 0
    %1200 = vmatpush1.bf16.msra.mxu0 0
    %1201 = vmatprep.subr.bf16.mxu0 0
    %1202 = vmatpush1.bf16.msra.mxu0 0
    %1203 = vmatprep.subr.bf16.mxu0 0
    %1204 = vmatpush1.bf16.msra.mxu0 0
    %1205 = vmatprep.subr.bf16.mxu0 0
    %1206 = vmatpush1.bf16.msra.mxu0 0
    %1207 = vmatprep.subr.bf16.mxu0 0
    %1208 = vmatpush1.bf16.msra.mxu0 0
    %1209 = vmatprep.mubr.bf16.mxu0 0
    %1210 = vmatmul.mubr.bf16.gmra.mrb[0].mxu0 %v1135
    %v1211 = vpop.f32.mrb[0].mxu0
    %v1212 = vadd.f32 0.0, %v1211
    %v1213 = vpop.f32.mrb[0].mxu0
    %v1214 = vadd.f32 0.0, %v1213
    %v1215 = vpop.f32.mrb[0].mxu0
    %v1216 = vpop.f32.mrb[0].mxu0
    %1217 = vdwg.mxu0
    %v1218 = vadd.f32 %v1131, %v1171
    %v1219 = vadd.f32 %v1132, %v1173
    %v1220 = vadd.f32 %v1133, %v1212
    %v1221 = vadd.f32 %v1134, %v1214
    %v1222 = vxor.u32 %v1218, 2147483648
    %v1223 = vmul.f32 %v1222, 1.442695
    %v1224 = vpow.pop %v1223
    %v1225 = vadd.f32 %v1224, 1.0
    %v1226 = vrcp.pop %v1225
    %v1227 = vmul.f32 1.0, %v1226
    %v1228 = vxor.u32 %v1219, 2147483648
    %v1229 = vmul.f32 %v1228, 1.442695
    %v1230 = vpow.pop %v1229
    %v1231 = vadd.f32 %v1230, 1.0
    %v1232 = vrcp.pop %v1231
    %v1233 = vmul.f32 1.0, %v1232
    %v1234 = vtanh.pop %v1220
    %v1235 = vxor.u32 %v1221, 2147483648
    %v1236 = vmul.f32 %v1235, 1.442695
    %v1237 = vpow.pop %v1236
    %v1238 = vadd.f32 %v1237, 1.0
    %v1239 = vrcp.pop %v1238
    %v1240 = vmul.f32 1.0, %v1239
    %v1241 = vmul.f32 %v1233, %v1125
    %v1242 = vmul.f32 %v1227, %v1234
    %v1243 = vadd.f32 %v1241, %v1242
    %v1244 = vtanh.pop %v1243
    %v1245 = vmul.f32 %v1240, %v1244
    %s1246 = scalar_lea.vmem [#allocation2], 80
    %v1247 = vld [vmem:[%s1246] sm:$0xff]
    %v1248 = vld [vmem:[%s1246 + $0x8] sm:$0xff]
    %v1249 = vunpack.c.l.bf16 %v1247
    %v1250 = vunpack.c.h.bf16 %v1247
    %v1251 = vunpack.c.l.bf16 %v1248
    %v1252 = vunpack.c.h.bf16 %v1248
    %v1253 = vpack.c.bf16 %v1245, %v1245
    %1254 = vmatprep.subr.bf16.mxu0 %v601
    %1255 = vmatpush1.bf16.msra.mxu0 %v600
    %1256 = vmatprep.subr.bf16.mxu0 %v605
    %1257 = vmatpush1.bf16.msra.mxu0 %v604
    %1258 = vmatprep.subr.bf16.mxu0 %v609
    %1259 = vmatpush1.bf16.msra.mxu0 %v608
    %1260 = vmatprep.subr.bf16.mxu0 %v613
    %1261 = vmatpush1.bf16.msra.mxu0 %v612
    %1262 = vmatprep.subr.bf16.mxu0 %v617
    %1263 = vmatpush1.bf16.msra.mxu0 %v616
    %1264 = vmatprep.subr.bf16.mxu0 %v621
    %1265 = vmatpush1.bf16.msra.mxu0 %v620
    %1266 = vmatprep.subr.bf16.mxu0 %v625
    %1267 = vmatpush1.bf16.msra.mxu0 %v624
    %1268 = vmatprep.subr.bf16.mxu0 %v629
    %1269 = vmatpush1.bf16.msra.mxu0 %v628
    %1270 = vmatprep.subr.bf16.mxu0 0
    %1271 = vmatpush1.bf16.msra.mxu0 0
    %1272 = vmatprep.subr.bf16.mxu0 0
    %1273 = vmatpush1.bf16.msra.mxu0 0
    %1274 = vmatprep.subr.bf16.mxu0 0
    %1275 = vmatpush1.bf16.msra.mxu0 0
    %1276 = vmatprep.subr.bf16.mxu0 0
    %1277 = vmatpush1.bf16.msra.mxu0 0
    %1278 = vmatprep.subr.bf16.mxu0 0
    %1279 = vmatpush1.bf16.msra.mxu0 0
    %1280 = vmatprep.subr.bf16.mxu0 0
    %1281 = vmatpush1.bf16.msra.mxu0 0
    %1282 = vmatprep.subr.bf16.mxu0 0
    %1283 = vmatpush1.bf16.msra.mxu0 0
    %1284 = vmatprep.subr.bf16.mxu0 0
    %1285 = vmatpush1.bf16.msra.mxu0 0
    %1286 = vmatprep.mubr.bf16.mxu0 0
    %1287 = vmatmul.mubr.bf16.gmra.mrb[0].mxu0 %v1253
    %v1288 = vpop.f32.mrb[0].mxu0
    %v1289 = vadd.f32 0.0, %v1288
    %v1290 = vpop.f32.mrb[0].mxu0
    %v1291 = vadd.f32 0.0, %v1290
    %v1292 = vpop.f32.mrb[0].mxu0
    %v1293 = vpop.f32.mrb[0].mxu0
    %1294 = vdwg.mxu0
    %1295 = vmatprep.subr.bf16.mxu0 %v603
    %1296 = vmatpush1.bf16.msra.mxu0 %v602
    %1297 = vmatprep.subr.bf16.mxu0 %v607
    %1298 = vmatpush1.bf16.msra.mxu0 %v606
    %1299 = vmatprep.subr.bf16.mxu0 %v611
    %1300 = vmatpush1.bf16.msra.mxu0 %v610
    %1301 = vmatprep.subr.bf16.mxu0 %v615
    %1302 = vmatpush1.bf16.msra.mxu0 %v614
    %1303 = vmatprep.subr.bf16.mxu0 %v619
    %1304 = vmatpush1.bf16.msra.mxu0 %v618
    %1305 = vmatprep.subr.bf16.mxu0 %v623
    %1306 = vmatpush1.bf16.msra.mxu0 %v622
    %1307 = vmatprep.subr.bf16.mxu0 %v627
    %1308 = vmatpush1.bf16.msra.mxu0 %v626
    %1309 = vmatprep.subr.bf16.mxu0 %v631
    %1310 = vmatpush1.bf16.msra.mxu0 %v630
    %1311 = vmatprep.subr.bf16.mxu0 0
    %1312 = vmatpush1.bf16.msra.mxu0 0
    %1313 = vmatprep.subr.bf16.mxu0 0
    %1314 = vmatpush1.bf16.msra.mxu0 0
    %1315 = vmatprep.subr.bf16.mxu0 0
    %1316 = vmatpush1.bf16.msra.mxu0 0
    %1317 = vmatprep.subr.bf16.mxu0 0
    %1318 = vmatpush1.bf16.msra.mxu0 0
    %1319 = vmatprep.subr.bf16.mxu0 0
    %1320 = vmatpush1.bf16.msra.mxu0 0
    %1321 = vmatprep.subr.bf16.mxu0 0
    %1322 = vmatpush1.bf16.msra.mxu0 0
    %1323 = vmatprep.subr.bf16.mxu0 0
    %1324 = vmatpush1.bf16.msra.mxu0 0
    %1325 = vmatprep.subr.bf16.mxu0 0
    %1326 = vmatpush1.bf16.msra.mxu0 0
    %1327 = vmatprep.mubr.bf16.mxu0 0
    %1328 = vmatmul.mubr.bf16.gmra.mrb[0].mxu0 %v1253
    %v1329 = vpop.f32.mrb[0].mxu0
    %v1330 = vadd.f32 0.0, %v1329
    %v1331 = vpop.f32.mrb[0].mxu0
    %v1332 = vadd.f32 0.0, %v1331
    %v1333 = vpop.f32.mrb[0].mxu0
    %v1334 = vpop.f32.mrb[0].mxu0
    %1335 = vdwg.mxu0
    %v1336 = vadd.f32 %v1249, %v1289
    %v1337 = vadd.f32 %v1250, %v1291
    %v1338 = vadd.f32 %v1251, %v1330
    %v1339 = vadd.f32 %v1252, %v1332
    %v1340 = vxor.u32 %v1336, 2147483648
    %v1341 = vmul.f32 %v1340, 1.442695
    %v1342 = vpow.pop %v1341
    %v1343 = vadd.f32 %v1342, 1.0
    %v1344 = vrcp.pop %v1343
    %v1345 = vmul.f32 1.0, %v1344
    %v1346 = vxor.u32 %v1337, 2147483648
    %v1347 = vmul.f32 %v1346, 1.442695
    %v1348 = vpow.pop %v1347
    %v1349 = vadd.f32 %v1348, 1.0
    %v1350 = vrcp.pop %v1349
    %v1351 = vmul.f32 1.0, %v1350
    %v1352 = vtanh.pop %v1338
    %v1353 = vxor.u32 %v1339, 2147483648
    %v1354 = vmul.f32 %v1353, 1.442695
    %v1355 = vpow.pop %v1354
    %v1356 = vadd.f32 %v1355, 1.0
    %v1357 = vrcp.pop %v1356
    %v1358 = vmul.f32 1.0, %v1357
    %v1359 = vmul.f32 %v1351, %v1243
    %v1360 = vmul.f32 %v1345, %v1352
    %v1361 = vadd.f32 %v1359, %v1360
    %v1362 = vtanh.pop %v1361
    %v1363 = vmul.f32 %v1358, %v1362
    %s1364 = scalar_lea.vmem [#allocation2], 96
    %v1365 = vld [vmem:[%s1364] sm:$0xff]
    %v1366 = vld [vmem:[%s1364 + $0x8] sm:$0xff]
    %v1367 = vunpack.c.l.bf16 %v1365
    %v1368 = vunpack.c.h.bf16 %v1365
    %v1369 = vunpack.c.l.bf16 %v1366
    %v1370 = vunpack.c.h.bf16 %v1366
    %v1371 = vpack.c.bf16 %v1363, %v1363
    %1372 = vmatprep.subr.bf16.mxu0 %v601
    %1373 = vmatpush1.bf16.msra.mxu0 %v600
    %1374 = vmatprep.subr.bf16.mxu0 %v605
    %1375 = vmatpush1.bf16.msra.mxu0 %v604
    %1376 = vmatprep.subr.bf16.mxu0 %v609
    %1377 = vmatpush1.bf16.msra.mxu0 %v608
    %1378 = vmatprep.subr.bf16.mxu0 %v613
    %1379 = vmatpush1.bf16.msra.mxu0 %v612
    %1380 = vmatprep.subr.bf16.mxu0 %v617
    %1381 = vmatpush1.bf16.msra.mxu0 %v616
    %1382 = vmatprep.subr.bf16.mxu0 %v621
    %1383 = vmatpush1.bf16.msra.mxu0 %v620
    %1384 = vmatprep.subr.bf16.mxu0 %v625
    %1385 = vmatpush1.bf16.msra.mxu0 %v624
    %1386 = vmatprep.subr.bf16.mxu0 %v629
    %1387 = vmatpush1.bf16.msra.mxu0 %v628
    %1388 = vmatprep.subr.bf16.mxu0 0
    %1389 = vmatpush1.bf16.msra.mxu0 0
    %1390 = vmatprep.subr.bf16.mxu0 0
    %1391 = vmatpush1.bf16.msra.mxu0 0
    %1392 = vmatprep.subr.bf16.mxu0 0
    %1393 = vmatpush1.bf16.msra.mxu0 0
    %1394 = vmatprep.subr.bf16.mxu0 0
    %1395 = vmatpush1.bf16.msra.mxu0 0
    %1396 = vmatprep.subr.bf16.mxu0 0
    %1397 = vmatpush1.bf16.msra.mxu0 0
    %1398 = vmatprep.subr.bf16.mxu0 0
    %1399 = vmatpush1.bf16.msra.mxu0 0
    %1400 = vmatprep.subr.bf16.mxu0 0
    %1401 = vmatpush1.bf16.msra.mxu0 0
    %1402 = vmatprep.subr.bf16.mxu0 0
    %1403 = vmatpush1.bf16.msra.mxu0 0
    %1404 = vmatprep.mubr.bf16.mxu0 0
    %1405 = vmatmul.mubr.bf16.gmra.mrb[0].mxu0 %v1371
    %v1406 = vpop.f32.mrb[0].mxu0
    %v1407 = vadd.f32 0.0, %v1406
    %v1408 = vpop.f32.mrb[0].mxu0
    %v1409 = vadd.f32 0.0, %v1408
    %v1410 = vpop.f32.mrb[0].mxu0
    %v1411 = vpop.f32.mrb[0].mxu0
    %1412 = vdwg.mxu0
    %1413 = vmatprep.subr.bf16.mxu0 %v603
    %1414 = vmatpush1.bf16.msra.mxu0 %v602
    %1415 = vmatprep.subr.bf16.mxu0 %v607
    %1416 = vmatpush1.bf16.msra.mxu0 %v606
    %1417 = vmatprep.subr.bf16.mxu0 %v611
    %1418 = vmatpush1.bf16.msra.mxu0 %v610
    %1419 = vmatprep.subr.bf16.mxu0 %v615
    %1420 = vmatpush1.bf16.msra.mxu0 %v614
    %1421 = vmatprep.subr.bf16.mxu0 %v619
    %1422 = vmatpush1.bf16.msra.mxu0 %v618
    %1423 = vmatprep.subr.bf16.mxu0 %v623
    %1424 = vmatpush1.bf16.msra.mxu0 %v622
    %1425 = vmatprep.subr.bf16.mxu0 %v627
    %1426 = vmatpush1.bf16.msra.mxu0 %v626
    %1427 = vmatprep.subr.bf16.mxu0 %v631
    %1428 = vmatpush1.bf16.msra.mxu0 %v630
    %1429 = vmatprep.subr.bf16.mxu0 0
    %1430 = vmatpush1.bf16.msra.mxu0 0
    %1431 = vmatprep.subr.bf16.mxu0 0
    %1432 = vmatpush1.bf16.msra.mxu0 0
    %1433 = vmatprep.subr.bf16.mxu0 0
    %1434 = vmatpush1.bf16.msra.mxu0 0
    %1435 = vmatprep.subr.bf16.mxu0 0
    %1436 = vmatpush1.bf16.msra.mxu0 0
    %1437 = vmatprep.subr.bf16.mxu0 0
    %1438 = vmatpush1.bf16.msra.mxu0 0
    %1439 = vmatprep.subr.bf16.mxu0 0
    %1440 = vmatpush1.bf16.msra.mxu0 0
    %1441 = vmatprep.subr.bf16.mxu0 0
    %1442 = vmatpush1.bf16.msra.mxu0 0
    %1443 = vmatprep.subr.bf16.mxu0 0
    %1444 = vmatpush1.bf16.msra.mxu0 0
    %1445 = vmatprep.mubr.bf16.mxu0 0
    %1446 = vmatmul.mubr.bf16.gmra.mrb[0].mxu0 %v1371
    %v1447 = vpop.f32.mrb[0].mxu0
    %v1448 = vadd.f32 0.0, %v1447
    %v1449 = vpop.f32.mrb[0].mxu0
    %v1450 = vadd.f32 0.0, %v1449
    %v1451 = vpop.f32.mrb[0].mxu0
    %v1452 = vpop.f32.mrb[0].mxu0
    %1453 = vdwg.mxu0
    %v1454 = vadd.f32 %v1367, %v1407
    %v1455 = vadd.f32 %v1368, %v1409
    %v1456 = vadd.f32 %v1369, %v1448
    %v1457 = vadd.f32 %v1370, %v1450
    %v1458 = vxor.u32 %v1454, 2147483648
    %v1459 = vmul.f32 %v1458, 1.442695
    %v1460 = vpow.pop %v1459
    %v1461 = vadd.f32 %v1460, 1.0
    %v1462 = vrcp.pop %v1461
    %v1463 = vmul.f32 1.0, %v1462
    %v1464 = vxor.u32 %v1455, 2147483648
    %v1465 = vmul.f32 %v1464, 1.442695
    %v1466 = vpow.pop %v1465
    %v1467 = vadd.f32 %v1466, 1.0
    %v1468 = vrcp.pop %v1467
    %v1469 = vmul.f32 1.0, %v1468
    %v1470 = vtanh.pop %v1456
    %v1471 = vxor.u32 %v1457, 2147483648
    %v1472 = vmul.f32 %v1471, 1.442695
    %v1473 = vpow.pop %v1472
    %v1474 = vadd.f32 %v1473, 1.0
    %v1475 = vrcp.pop %v1474
    %v1476 = vmul.f32 1.0, %v1475
    %v1477 = vmul.f32 %v1469, %v1361
    %v1478 = vmul.f32 %v1463, %v1470
    %v1479 = vadd.f32 %v1477, %v1478
    %v1480 = vtanh.pop %v1479
    %v1481 = vmul.f32 %v1476, %v1480
    %s1482 = scalar_lea.vmem [#allocation2], 112
    %v1483 = vld [vmem:[%s1482] sm:$0xff]
    %v1484 = vld [vmem:[%s1482 + $0x8] sm:$0xff]
    %v1485 = vunpack.c.l.bf16 %v1483
    %v1486 = vunpack.c.h.bf16 %v1483
    %v1487 = vunpack.c.l.bf16 %v1484
    %v1488 = vunpack.c.h.bf16 %v1484
    %v1489 = vpack.c.bf16 %v1481, %v1481
    %1490 = vmatprep.subr.bf16.mxu0 %v601
    %1491 = vmatpush1.bf16.msra.mxu0 %v600
    %1492 = vmatprep.subr.bf16.mxu0 %v605
    %1493 = vmatpush1.bf16.msra.mxu0 %v604
    %1494 = vmatprep.subr.bf16.mxu0 %v609
    %1495 = vmatpush1.bf16.msra.mxu0 %v608
    %1496 = vmatprep.subr.bf16.mxu0 %v613
    %1497 = vmatpush1.bf16.msra.mxu0 %v612
    %1498 = vmatprep.subr.bf16.mxu0 %v617
    %1499 = vmatpush1.bf16.msra.mxu0 %v616
    %1500 = vmatprep.subr.bf16.mxu0 %v621
    %1501 = vmatpush1.bf16.msra.mxu0 %v620
    %1502 = vmatprep.subr.bf16.mxu0 %v625
    %1503 = vmatpush1.bf16.msra.mxu0 %v624
    %1504 = vmatprep.subr.bf16.mxu0 %v629
    %1505 = vmatpush1.bf16.msra.mxu0 %v628
    %1506 = vmatprep.subr.bf16.mxu0 0
    %1507 = vmatpush1.bf16.msra.mxu0 0
    %1508 = vmatprep.subr.bf16.mxu0 0
    %1509 = vmatpush1.bf16.msra.mxu0 0
    %1510 = vmatprep.subr.bf16.mxu0 0
    %1511 = vmatpush1.bf16.msra.mxu0 0
    %1512 = vmatprep.subr.bf16.mxu0 0
    %1513 = vmatpush1.bf16.msra.mxu0 0
    %1514 = vmatprep.subr.bf16.mxu0 0
    %1515 = vmatpush1.bf16.msra.mxu0 0
    %1516 = vmatprep.subr.bf16.mxu0 0
    %1517 = vmatpush1.bf16.msra.mxu0 0
    %1518 = vmatprep.subr.bf16.mxu0 0
    %1519 = vmatpush1.bf16.msra.mxu0 0
    %1520 = vmatprep.subr.bf16.mxu0 0
    %1521 = vmatpush1.bf16.msra.mxu0 0
    %1522 = vmatprep.mubr.bf16.mxu0 0
    %1523 = vmatmul.mubr.bf16.gmra.mrb[0].mxu0 %v1489
    %v1524 = vpop.f32.mrb[0].mxu0
    %v1525 = vadd.f32 0.0, %v1524
    %v1526 = vpop.f32.mrb[0].mxu0
    %v1527 = vadd.f32 0.0, %v1526
    %v1528 = vpop.f32.mrb[0].mxu0
    %v1529 = vpop.f32.mrb[0].mxu0
    %1530 = vdwg.mxu0
    %1531 = vmatprep.subr.bf16.mxu0 %v603
    %1532 = vmatpush1.bf16.msra.mxu0 %v602
    %1533 = vmatprep.subr.bf16.mxu0 %v607
    %1534 = vmatpush1.bf16.msra.mxu0 %v606
    %1535 = vmatprep.subr.bf16.mxu0 %v611
    %1536 = vmatpush1.bf16.msra.mxu0 %v610
    %1537 = vmatprep.subr.bf16.mxu0 %v615
    %1538 = vmatpush1.bf16.msra.mxu0 %v614
    %1539 = vmatprep.subr.bf16.mxu0 %v619
    %1540 = vmatpush1.bf16.msra.mxu0 %v618
    %1541 = vmatprep.subr.bf16.mxu0 %v623
    %1542 = vmatpush1.bf16.msra.mxu0 %v622
    %1543 = vmatprep.subr.bf16.mxu0 %v627
    %1544 = vmatpush1.bf16.msra.mxu0 %v626
    %1545 = vmatprep.subr.bf16.mxu0 %v631
    %1546 = vmatpush1.bf16.msra.mxu0 %v630
    %1547 = vmatprep.subr.bf16.mxu0 0
    %1548 = vmatpush1.bf16.msra.mxu0 0
    %1549 = vmatprep.subr.bf16.mxu0 0
    %1550 = vmatpush1.bf16.msra.mxu0 0
    %1551 = vmatprep.subr.bf16.mxu0 0
    %1552 = vmatpush1.bf16.msra.mxu0 0
    %1553 = vmatprep.subr.bf16.mxu0 0
    %1554 = vmatpush1.bf16.msra.mxu0 0
    %1555 = vmatprep.subr.bf16.mxu0 0
    %1556 = vmatpush1.bf16.msra.mxu0 0
    %1557 = vmatprep.subr.bf16.mxu0 0
    %1558 = vmatpush1.bf16.msra.mxu0 0
    %1559 = vmatprep.subr.bf16.mxu0 0
    %1560 = vmatpush1.bf16.msra.mxu0 0
    %1561 = vmatprep.subr.bf16.mxu0 0
    %1562 = vmatpush1.bf16.msra.mxu0 0
    %1563 = vmatprep.mubr.bf16.mxu0 0
    %1564 = vmatmul.mubr.bf16.gmra.mrb[0].mxu0 %v1489
    %v1565 = vpop.f32.mrb[0].mxu0
    %v1566 = vadd.f32 0.0, %v1565
    %v1567 = vpop.f32.mrb[0].mxu0
    %v1568 = vadd.f32 0.0, %v1567
    %v1569 = vpop.f32.mrb[0].mxu0
    %v1570 = vpop.f32.mrb[0].mxu0
    %1571 = vdwg.mxu0
    %v1572 = vadd.f32 %v1485, %v1525
    %v1573 = vadd.f32 %v1486, %v1527
    %v1574 = vadd.f32 %v1487, %v1566
    %v1575 = vadd.f32 %v1488, %v1568
    %v1576 = vxor.u32 %v1572, 2147483648
    %v1577 = vmul.f32 %v1576, 1.442695
    %v1578 = vpow.pop %v1577
    %v1579 = vadd.f32 %v1578, 1.0
    %v1580 = vrcp.pop %v1579
    %v1581 = vmul.f32 1.0, %v1580
    %v1582 = vxor.u32 %v1573, 2147483648
    %v1583 = vmul.f32 %v1582, 1.442695
    %v1584 = vpow.pop %v1583
    %v1585 = vadd.f32 %v1584, 1.0
    %v1586 = vrcp.pop %v1585
    %v1587 = vmul.f32 1.0, %v1586
    %v1588 = vtanh.pop %v1574
    %v1589 = vxor.u32 %v1575, 2147483648
    %v1590 = vmul.f32 %v1589, 1.442695
    %v1591 = vpow.pop %v1590
    %v1592 = vadd.f32 %v1591, 1.0
    %v1593 = vrcp.pop %v1592
    %v1594 = vmul.f32 1.0, %v1593
    %v1595 = vmul.f32 %v1587, %v1479
    %v1596 = vmul.f32 %v1581, %v1588
    %v1597 = vadd.f32 %v1595, %v1596
    %v1598 = vtanh.pop %v1597
    %v1599 = vmul.f32 %v1594, %v1598
    %1600 = vst [vmem:[#allocation3] sm:$0xff] %v1599
    %1601 = vst [vmem:[#allocation4] sm:$0xff] %v1597
    // Predicated region
    $region46: #{tpu_custom_call.1} parent=1 // pred_check
      %p1602 = pneg %p80
    $region47: #{tpu_custom_call.1} parent=1 // pred_check_branch
      %1604 = sbr.rel (%p1602) target = $region49
    $region48: #{tpu_custom_call.1} parent=1 // pred_region
      %v1605 = vld [vmem:[#allocation3] sm:$0xff]
      %v1606 = vpack.c.bf16 %v1605, %v1605
      %v1607 = vld [vmem:[#allocation11] sm:$0xff]
      %v1608 = vld [vmem:[#allocation11 + $0x8] sm:$0xff]
      %v1609 = vld [vmem:[#allocation11 + $0x10] sm:$0xff]
      %v1610 = vld [vmem:[#allocation11 + $0x18] sm:$0xff]
      %v1611 = vld [vmem:[#allocation11 + $0x20] sm:$0xff]
      %v1612 = vld [vmem:[#allocation11 + $0x28] sm:$0xff]
      %v1613 = vld [vmem:[#allocation11 + $0x30] sm:$0xff]
      %v1614 = vld [vmem:[#allocation11 + $0x38] sm:$0xff]
      %v1615 = vld [vmem:[#allocation11 + $0x40] sm:$0xff]
      %v1616 = vld [vmem:[#allocation11 + $0x48] sm:$0xff]
      %v1617 = vld [vmem:[#allocation11 + $0x50] sm:$0xff]
      %v1618 = vld [vmem:[#allocation11 + $0x58] sm:$0xff]
      %v1619 = vld [vmem:[#allocation11 + $0x60] sm:$0xff]
      %v1620 = vld [vmem:[#allocation11 + $0x68] sm:$0xff]
      %v1621 = vld [vmem:[#allocation11 + $0x70] sm:$0xff]
      %v1622 = vld [vmem:[#allocation11 + $0x78] sm:$0xff]
      %v1623 = vld [vmem:[#allocation11 + $0x80] sm:$0xff]
      %v1624 = vld [vmem:[#allocation11 + $0x88] sm:$0xff]
      %v1625 = vld [vmem:[#allocation11 + $0x90] sm:$0xff]
      %v1626 = vld [vmem:[#allocation11 + $0x98] sm:$0xff]
      %v1627 = vld [vmem:[#allocation11 + $0xa0] sm:$0xff]
      %v1628 = vld [vmem:[#allocation11 + $0xa8] sm:$0xff]
      %v1629 = vld [vmem:[#allocation11 + $0xb0] sm:$0xff]
      %v1630 = vld [vmem:[#allocation11 + $0xb8] sm:$0xff]
      %v1631 = vld [vmem:[#allocation11 + $0xc0] sm:$0xff]
      %v1632 = vld [vmem:[#allocation11 + $0xc8] sm:$0xff]
      %v1633 = vld [vmem:[#allocation11 + $0xd0] sm:$0xff]
      %v1634 = vld [vmem:[#allocation11 + $0xd8] sm:$0xff]
      %v1635 = vld [vmem:[#allocation11 + $0xe0] sm:$0xff]
      %v1636 = vld [vmem:[#allocation11 + $0xe8] sm:$0xff]
      %v1637 = vld [vmem:[#allocation11 + $0xf0] sm:$0xff]
      %v1638 = vld [vmem:[#allocation11 + $0xf8] sm:$0xff]
      %v1639 = vld [vmem:[%s5] sm:$0xf]
      %v1641 = vlaneseq
      %v1642 = vshrl.u32 %v1641, 7
      %v1643 = vsub.s32 0, %v1642
      %v1644 = vrot.slane %v1639, %v1643
      %v1645 = vlaneseq
      %v1646 = vshrl.u32 %v1645, 7
      %v1647 = vsub.s32 1, %v1646
      %v1648 = vrot.slane %v1639, %v1647
      %v1649 = vlaneseq
      %v1650 = vshrl.u32 %v1649, 7
      %v1651 = vsub.s32 2, %v1650
      %v1652 = vrot.slane %v1639, %v1651
      %v1653 = vlaneseq
      %v1654 = vshrl.u32 %v1653, 7
      %v1655 = vsub.s32 3, %v1654
      %v1656 = vrot.slane %v1639, %v1655
      %v1693 = vunpack.c.l.b16 %v1607
      %v1694 = vunpack.c.h.b16 %v1607
      %v1695 = vunpack.c.l.b16 %v1608
      %v1696 = vunpack.c.h.b16 %v1608
      %v1697 = vunpack.c.l.b16 %v1609
      %v1698 = vunpack.c.h.b16 %v1609
      %v1699 = vunpack.c.l.b16 %v1610
      %v1700 = vunpack.c.h.b16 %v1610
      %v1701 = vunpack.c.l.b16 %v1611
      %v1702 = vunpack.c.h.b16 %v1611
      %v1703 = vunpack.c.l.b16 %v1612
      %v1704 = vunpack.c.h.b16 %v1612
      %v1705 = vunpack.c.l.b16 %v1613
      %v1706 = vunpack.c.h.b16 %v1613
      %v1707 = vunpack.c.l.b16 %v1614
      %v1708 = vunpack.c.h.b16 %v1614
      %v1709 = vunpack.c.l.b16 %v1615
      %v1710 = vunpack.c.h.b16 %v1615
      %v1711 = vunpack.c.l.b16 %v1616
      %v1712 = vunpack.c.h.b16 %v1616
      %v1713 = vunpack.c.l.b16 %v1617
      %v1714 = vunpack.c.h.b16 %v1617
      %v1715 = vunpack.c.l.b16 %v1618
      %v1716 = vunpack.c.h.b16 %v1618
      %v1717 = vunpack.c.l.b16 %v1619
      %v1718 = vunpack.c.h.b16 %v1619
      %v1719 = vunpack.c.l.b16 %v1620
      %v1720 = vunpack.c.h.b16 %v1620
      %v1721 = vunpack.c.l.b16 %v1621
      %v1722 = vunpack.c.h.b16 %v1621
      %v1723 = vunpack.c.l.b16 %v1622
      %v1724 = vunpack.c.h.b16 %v1622
      %v1725 = vunpack.c.l.b16 %v1623
      %v1726 = vunpack.c.h.b16 %v1623
      %v1727 = vunpack.c.l.b16 %v1624
      %v1728 = vunpack.c.h.b16 %v1624
      %v1729 = vunpack.c.l.b16 %v1625
      %v1730 = vunpack.c.h.b16 %v1625
      %v1731 = vunpack.c.l.b16 %v1626
      %v1732 = vunpack.c.h.b16 %v1626
      %v1733 = vunpack.c.l.b16 %v1627
      %v1734 = vunpack.c.h.b16 %v1627
      %v1735 = vunpack.c.l.b16 %v1628
      %v1736 = vunpack.c.h.b16 %v1628
      %v1737 = vunpack.c.l.b16 %v1629
      %v1738 = vunpack.c.h.b16 %v1629
      %v1739 = vunpack.c.l.b16 %v1630
      %v1740 = vunpack.c.h.b16 %v1630
      %v1741 = vunpack.c.l.b16 %v1631
      %v1742 = vunpack.c.h.b16 %v1631
      %v1743 = vunpack.c.l.b16 %v1632
      %v1744 = vunpack.c.h.b16 %v1632
      %v1745 = vunpack.c.l.b16 %v1633
      %v1746 = vunpack.c.h.b16 %v1633
      %v1747 = vunpack.c.l.b16 %v1634
      %v1748 = vunpack.c.h.b16 %v1634
      %v1749 = vunpack.c.l.b16 %v1635
      %v1750 = vunpack.c.h.b16 %v1635
      %v1751 = vunpack.c.l.b16 %v1636
      %v1752 = vunpack.c.h.b16 %v1636
      %v1753 = vunpack.c.l.b16 %v1637
      %v1754 = vunpack.c.h.b16 %v1637
      %v1755 = vunpack.c.l.b16 %v1638
      %v1756 = vunpack.c.h.b16 %v1638
      %v1757 = vpack.c.b16 %v1697, %v1693
      %v1758 = vpack.c.b16 %v1698, %v1694
      %v1759 = vpack.c.b16 %v1699, %v1695
      %v1760 = vpack.c.b16 %v1700, %v1696
      %v1761 = vpack.c.b16 %v1705, %v1701
      %v1762 = vpack.c.b16 %v1706, %v1702
      %v1763 = vpack.c.b16 %v1707, %v1703
      %v1764 = vpack.c.b16 %v1708, %v1704
      %v1765 = vpack.c.b16 %v1713, %v1709
      %v1766 = vpack.c.b16 %v1714, %v1710
      %v1767 = vpack.c.b16 %v1715, %v1711
      %v1768 = vpack.c.b16 %v1716, %v1712
      %v1769 = vpack.c.b16 %v1721, %v1717
      %v1770 = vpack.c.b16 %v1722, %v1718
      %v1771 = vpack.c.b16 %v1723, %v1719
      %v1772 = vpack.c.b16 %v1724, %v1720
      %v1773 = vpack.c.b16 %v1729, %v1725
      %v1774 = vpack.c.b16 %v1730, %v1726
      %v1775 = vpack.c.b16 %v1731, %v1727
      %v1776 = vpack.c.b16 %v1732, %v1728
      %v1777 = vpack.c.b16 %v1737, %v1733
      %v1778 = vpack.c.b16 %v1738, %v1734
      %v1779 = vpack.c.b16 %v1739, %v1735
      %v1780 = vpack.c.b16 %v1740, %v1736
      %v1781 = vpack.c.b16 %v1745, %v1741
      %v1782 = vpack.c.b16 %v1746, %v1742
      %v1783 = vpack.c.b16 %v1747, %v1743
      %v1784 = vpack.c.b16 %v1748, %v1744
      %v1785 = vpack.c.b16 %v1753, %v1749
      %v1786 = vpack.c.b16 %v1754, %v1750
      %v1787 = vpack.c.b16 %v1755, %v1751
      %v1788 = vpack.c.b16 %v1756, %v1752
      %1821 = vmatprep.subr.bf16.mxu0 %v1758
      %1822 = vmatpush1.bf16.msra.mxu0 %v1757
      %1823 = vmatprep.subr.bf16.mxu0 %v1762
      %1824 = vmatpush1.bf16.msra.mxu0 %v1761
      %1825 = vmatprep.subr.bf16.mxu0 %v1766
      %1826 = vmatpush1.bf16.msra.mxu0 %v1765
      %1827 = vmatprep.subr.bf16.mxu0 %v1770
      %1828 = vmatpush1.bf16.msra.mxu0 %v1769
      %1829 = vmatprep.subr.bf16.mxu0 %v1774
      %1830 = vmatpush1.bf16.msra.mxu0 %v1773
      %1831 = vmatprep.subr.bf16.mxu0 %v1778
      %1832 = vmatpush1.bf16.msra.mxu0 %v1777
      %1833 = vmatprep.subr.bf16.mxu0 %v1782
      %1834 = vmatpush1.bf16.msra.mxu0 %v1781
      %1835 = vmatprep.subr.bf16.mxu0 %v1786
      %1836 = vmatpush1.bf16.msra.mxu0 %v1785
      %1837 = vmatprep.subr.bf16.mxu0 0
      %1838 = vmatpush1.bf16.msra.mxu0 0
      %1839 = vmatprep.subr.bf16.mxu0 0
      %1840 = vmatpush1.bf16.msra.mxu0 0
      %1841 = vmatprep.subr.bf16.mxu0 0
      %1842 = vmatpush1.bf16.msra.mxu0 0
      %1843 = vmatprep.subr.bf16.mxu0 0
      %1844 = vmatpush1.bf16.msra.mxu0 0
      %1845 = vmatprep.subr.bf16.mxu0 0
      %1846 = vmatpush1.bf16.msra.mxu0 0
      %1847 = vmatprep.subr.bf16.mxu0 0
      %1848 = vmatpush1.bf16.msra.mxu0 0
      %1849 = vmatprep.subr.bf16.mxu0 0
      %1850 = vmatpush1.bf16.msra.mxu0 0
      %1851 = vmatprep.subr.bf16.mxu0 0
      %1852 = vmatpush1.bf16.msra.mxu0 0
      %1853 = vmatprep.mubr.bf16.mxu0 0
      %1854 = vmatmul.mubr.bf16.gmra.mrb[0].mxu0 %v1606
      %v1855 = vpop.f32.mrb[0].mxu0
      %v1856 = vadd.f32 %v1644, %v1855
      %v1857 = vpop.f32.mrb[0].mxu0
      %v1858 = vadd.f32 %v1648, %v1857
      %v1859 = vpop.f32.mrb[0].mxu0
      %v1860 = vpop.f32.mrb[0].mxu0
      %1861 = vdwg.mxu0
      %1862 = vmatprep.subr.bf16.mxu0 %v1760
      %1863 = vmatpush1.bf16.msra.mxu0 %v1759
      %1864 = vmatprep.subr.bf16.mxu0 %v1764
      %1865 = vmatpush1.bf16.msra.mxu0 %v1763
      %1866 = vmatprep.subr.bf16.mxu0 %v1768
      %1867 = vmatpush1.bf16.msra.mxu0 %v1767
      %1868 = vmatprep.subr.bf16.mxu0 %v1772
      %1869 = vmatpush1.bf16.msra.mxu0 %v1771
      %1870 = vmatprep.subr.bf16.mxu0 %v1776
      %1871 = vmatpush1.bf16.msra.mxu0 %v1775
      %1872 = vmatprep.subr.bf16.mxu0 %v1780
      %1873 = vmatpush1.bf16.msra.mxu0 %v1779
      %1874 = vmatprep.subr.bf16.mxu0 %v1784
      %1875 = vmatpush1.bf16.msra.mxu0 %v1783
      %1876 = vmatprep.subr.bf16.mxu0 %v1788
      %1877 = vmatpush1.bf16.msra.mxu0 %v1787
      %1878 = vmatprep.subr.bf16.mxu0 0
      %1879 = vmatpush1.bf16.msra.mxu0 0
      %1880 = vmatprep.subr.bf16.mxu0 0
      %1881 = vmatpush1.bf16.msra.mxu0 0
      %1882 = vmatprep.subr.bf16.mxu0 0
      %1883 = vmatpush1.bf16.msra.mxu0 0
      %1884 = vmatprep.subr.bf16.mxu0 0
      %1885 = vmatpush1.bf16.msra.mxu0 0
      %1886 = vmatprep.subr.bf16.mxu0 0
      %1887 = vmatpush1.bf16.msra.mxu0 0
      %1888 = vmatprep.subr.bf16.mxu0 0
      %1889 = vmatpush1.bf16.msra.mxu0 0
      %1890 = vmatprep.subr.bf16.mxu0 0
      %1891 = vmatpush1.bf16.msra.mxu0 0
      %1892 = vmatprep.subr.bf16.mxu0 0
      %1893 = vmatpush1.bf16.msra.mxu0 0
      %1894 = vmatprep.mubr.bf16.mxu0 0
      %1895 = vmatmul.mubr.bf16.gmra.mrb[0].mxu0 %v1606
      %v1896 = vpop.f32.mrb[0].mxu0
      %v1897 = vadd.f32 %v1652, %v1896
      %v1898 = vpop.f32.mrb[0].mxu0
      %v1899 = vadd.f32 %v1656, %v1898
      %v1900 = vpop.f32.mrb[0].mxu0
      %v1901 = vpop.f32.mrb[0].mxu0
      %1902 = vdwg.mxu0
      %1903 = vst [vmem:[#allocation13] sm:$0xff] %v1856
      %1904 = vst [vmem:[#allocation13 + $0x8] sm:$0xff] %v1858
      %1905 = vst [vmem:[#allocation13 + $0x10] sm:$0xff] %v1897
      %1906 = vst [vmem:[#allocation13 + $0x18] sm:$0xff] %v1899
    $region49: #{tpu_custom_call.1} parent=1 // pred_fallthru
      _
    // Predicated region
    $region50: #{tpu_custom_call.1} parent=1 // pred_check
      _
    $region51: #{tpu_custom_call.1} parent=1 // pred_check_branch
      %1908 = sbr.rel (0) target = $region53
    $region52: #{tpu_custom_call.1} parent=1 // pred_region
      %s1910 = ssub.s32 512, 512
      %1911 = vsyncadd [#allocation7], %s1910
      %s1913 = sshll.u32 [#allocation13], 4
      %s1914 = int_to_ptr.vmem [resolvable:$true] %s1913
      %1916 = dma.vmem_to_hbm [thread:$0]  %s1914, 512, %s6, [#allocation7]
    $region53: #{tpu_custom_call.1} parent=1 // pred_fallthru
      _
    // Predicated region
    $region54: #{tpu_custom_call.1} parent=1 // pred_check
      _
    $region55: #{tpu_custom_call.1} parent=1 // pred_check_branch
      %1918 = sbr.rel (0) target = $region57
    $region56: #{tpu_custom_call.1} parent=1 // pred_region
      %1919 = dma.done [#allocation7], 512
    $region57: #{tpu_custom_call.1} parent=1 // pred_fallthru
      _
    %1920 = vsyncpa [#allocation6], 1
    %1921 = vsyncpa [#allocation9], 1
    %1922 = vsyncpa [#allocation12], 1
    %1923 = vsyncpa [#allocation7], 1

// kernel: tpu_custom_call.1
$region0: #{tpu_custom_call.1}
  #allocation0 [shape = 'u32[]', space=smem, size = 0x4, offset = 0x4, fixed_abs, tag = 'smem constant byte address 0x4 - core index']
  #allocation1 [shape = 'u32[144,128]{1,0:T(1,128)}', space=vmem, size = 0x12000, scoped, tag = 'internal scratch']
  #allocation2 [shape = 'bf16[8,8,512]{2,1,0:T(8,128)(2,1)}', space=vmem, size = 0x10000, scoped, tag = 'scratch operand']
  #allocation3 [shape = 'f32[8,128]{1,0:T(8,128)}', space=vmem, size = 0x1000, scoped, tag = 'scratch operand']
  #allocation4 [shape = 'f32[8,128]{1,0:T(8,128)}', space=vmem, size = 0x1000, scoped, tag = 'scratch operand']
  %s0 = inlined_call_operand.hbm [shape: bf16[8,8,16], index: 0, kind: input, shape index: {}]
  %s1 = inlined_call_operand.hbm [shape: bf16[16,512], index: 1, kind: input, shape index: {}]
  %s2 = inlined_call_operand.hbm [shape: bf16[128,512], index: 2, kind: input, shape index: {}]
  %s3 = inlined_call_operand.vmem [shape: f32[1,512], index: 3, kind: input, shape index: {}]
  %s4 = inlined_call_operand.hbm [shape: bf16[128,512], index: 4, kind: input, shape index: {}]
  %s5 = inlined_call_operand.vmem [shape: f32[1,512], index: 5, kind: input, shape index: {}]
  %s6 = inlined_call_operand.hbm [shape: f32[8,512], index: 6, kind: output, shape index: {}]
  %s7 = sld [smem:[#allocation0]]
  $region58: #{tpu_custom_call.1} parent=0
    _
  %s9 = ssub.s32 1, %s7
  %s10 = scalar_select 0, %s9, %s7
  $region1: #{tpu_custom_call.1} parent=0
    #allocation5 [shape = 'u8[16384]{0}', space=vmem, size = 0x4000, scoped, tag = 'input window, operand 0, single buffered']
    #allocation6 [shape = 's32[1]{0}', space=sflag, size = 0x4, scoped, tag = 'scoped memory for tpu_custom_call.1']
    #allocation7 [shape = 's32[1]{0}', space=sflag, size = 0x4, scoped, tag = 'scoped memory for tpu_custom_call.1']
    #allocation8 [shape = 'u8[16384]{0}', space=vmem, size = 0x4000, scoped, tag = 'input window, operand 1, single buffered']
    #allocation9 [shape = 's32[1]{0}', space=sflag, size = 0x4, scoped, tag = 'scoped memory for tpu_custom_call.1']
    #allocation10 [shape = 'u8[131072]{0}', space=vmem, size = 0x20000, scoped, tag = 'input window, operand 2, single buffered']
    #allocation11 [shape = 'u8[131072]{0}', space=vmem, size = 0x20000, scoped, tag = 'input window, operand 4, single buffered']
    #allocation12 [shape = 's32[1]{0}', space=sflag, size = 0x4, scoped, tag = 'scoped memory for tpu_custom_call.1']
    #allocation13 [shape = 'u8[16384]{0}', space=vmem, size = 0x4000, scoped, tag = 'output window, operand 0, single buffered']
    %11 = vsyncpa [#allocation6], 0
    %12 = vsyncpa [#allocation9], 0
    %13 = vsyncpa [#allocation12], 0
    %14 = vsyncpa [#allocation7], 0
    // Predicated region
    $region2: #{tpu_custom_call.1} parent=1 // pred_check
      _
    $region3: #{tpu_custom_call.1} parent=1 // pred_check_branch
      %16 = sbr.rel (0) target = $region5
    $region4: #{tpu_custom_call.1} parent=1 // pred_region
      %s18 = ssub.s32 512, 512
      %19 = vsyncadd [#allocation6], %s18
      %s20 = sshll.u32 [#allocation5], 4
      %s21 = int_to_ptr.vmem [resolvable:$true] %s20
      %26 = dma.hbm_to_vmem [thread:$0]  %s0, 512, %s21, [#allocation6], 64, 64, 4
    $region5: #{tpu_custom_call.1} parent=1 // pred_fallthru
      _
    // Predicated region
    $region6: #{tpu_custom_call.1} parent=1 // pred_check
      _
    $region7: #{tpu_custom_call.1} parent=1 // pred_check_branch
      %28 = sbr.rel (0) target = $region9
    $region8: #{tpu_custom_call.1} parent=1 // pred_region
      %s30 = ssub.s32 512, 512
      %31 = vsyncadd [#allocation9], %s30
      %s32 = sshll.u32 [#allocation8], 4
      %s33 = int_to_ptr.vmem [resolvable:$true] %s32
      %38 = dma.hbm_to_vmem [thread:$0]  %s1, 512, %s33, [#allocation9], 256, 256, 16
    $region9: #{tpu_custom_call.1} parent=1 // pred_fallthru
      _
    // Predicated region
    $region10: #{tpu_custom_call.1} parent=1 // pred_check
      _
    $region11: #{tpu_custom_call.1} parent=1 // pred_check_branch
      %40 = sbr.rel (0) target = $region13
    $region12: #{tpu_custom_call.1} parent=1 // pred_region
      %s42 = ssub.s32 4096, 4096
      %43 = vsyncadd [#allocation9], %s42
      %s44 = sshll.u32 [#allocation10], 4
      %s45 = int_to_ptr.vmem [resolvable:$true] %s44
      %50 = dma.hbm_to_vmem [thread:$0]  %s2, 4096, %s45, [#allocation9], 256, 256, 16
    $region13: #{tpu_custom_call.1} parent=1 // pred_fallthru
      _
    // Predicated region
    $region14: #{tpu_custom_call.1} parent=1 // pred_check
      _
    $region15: #{tpu_custom_call.1} parent=1 // pred_check_branch
      %52 = sbr.rel (0) target = $region17
    $region16: #{tpu_custom_call.1} parent=1 // pred_region
      _
    $region17: #{tpu_custom_call.1} parent=1 // pred_fallthru
      _
    // Predicated region
    $region18: #{tpu_custom_call.1} parent=1 // pred_check
      _
    $region19: #{tpu_custom_call.1} parent=1 // pred_check_branch
      %54 = sbr.rel (0) target = $region21
    $region20: #{tpu_custom_call.1} parent=1 // pred_region
      %s56 = ssub.s32 4096, 4096
      %57 = vsyncadd [#allocation12], %s56
      %s58 = sshll.u32 [#allocation11], 4
      %s59 = int_to_ptr.vmem [resolvable:$true] %s58
      %64 = dma.hbm_to_vmem [thread:$0]  %s4, 4096, %s59, [#allocation12], 256, 256, 16
    $region21: #{tpu_custom_call.1} parent=1 // pred_fallthru
      _
    // Predicated region
    $region22: #{tpu_custom_call.1} parent=1 // pred_check
      _
    $region23: #{tpu_custom_call.1} parent=1 // pred_check_branch
      %66 = sbr.rel (0) target = $region25
    $region24: #{tpu_custom_call.1} parent=1 // pred_region
      _
    $region25: #{tpu_custom_call.1} parent=1 // pred_fallthru
      _
    // Predicated region
    $region26: #{tpu_custom_call.1} parent=1 // pred_check
      _
    $region27: #{tpu_custom_call.1} parent=1 // pred_check_branch
      %68 = sbr.rel (0) target = $region29
    $region28: #{tpu_custom_call.1} parent=1 // pred_region
      %69 = dma.done [#allocation6], 512
    $region29: #{tpu_custom_call.1} parent=1 // pred_fallthru
      _
    // Predicated region
    $region30: #{tpu_custom_call.1} parent=1 // pred_check
      _
    $region31: #{tpu_custom_call.1} parent=1 // pred_check_branch
      %71 = sbr.rel (0) target = $region33
    $region32: #{tpu_custom_call.1} parent=1 // pred_region
      %72 = dma.done [#allocation9], 512
    $region33: #{tpu_custom_call.1} parent=1 // pred_fallthru
      _
    // Predicated region
    $region34: #{tpu_custom_call.1} parent=1 // pred_check
      _
    $region35: #{tpu_custom_call.1} parent=1 // pred_check_branch
      %74 = sbr.rel (0) target = $region37
    $region36: #{tpu_custom_call.1} parent=1 // pred_region
      %75 = dma.done [#allocation9], 4096
    $region37: #{tpu_custom_call.1} parent=1 // pred_fallthru
      _
    // Predicated region
    $region38: #{tpu_custom_call.1} parent=1 // pred_check
      _
    $region39: #{tpu_custom_call.1} parent=1 // pred_check_branch
      %77 = sbr.rel (0) target = $region41
    $region40: #{tpu_custom_call.1} parent=1 // pred_region
      %78 = dma.done [#allocation12], 4096
    $region41: #{tpu_custom_call.1} parent=1 // pred_fallthru
      _
    %p80 = scmp.eq.s32.totalorder 0, 0
    // Predicated region
    $region42: #{tpu_custom_call.1} parent=1 // pred_check
      %p81 = pneg %p80
    $region43: #{tpu_custom_call.1} parent=1 // pred_check_branch
      %83 = sbr.rel (%p81) target = $region45
    $region44: #{tpu_custom_call.1} parent=1 // pred_region
      %84 = vst [vmem:[#allocation3] sm:$0xff] 0.0
      %85 = vst [vmem:[#allocation4] sm:$0xff] 0.0
    $region45: #{tpu_custom_call.1} parent=1 // pred_fallthru
      _
    %v86 = vld [vmem:[#allocation5] sm:$0xf]
    %v87 = vld [vmem:[#allocation5 + $0x4] sm:$0xf]
    %v88 = vld [vmem:[#allocation5 + $0x8] sm:$0xf]
    %v89 = vld [vmem:[#allocation5 + $0xc] sm:$0xf]
    %v90 = vld [vmem:[#allocation5 + $0x10] sm:$0xf]
    %v91 = vld [vmem:[#allocation5 + $0x14] sm:$0xf]
    %v92 = vld [vmem:[#allocation5 + $0x18] sm:$0xf]
    %v93 = vld [vmem:[#allocation5 + $0x1c] sm:$0xf]
    %v94 = vld [vmem:[#allocation8] sm:$0xff]
    %v95 = vld [vmem:[#allocation8 + $0x8] sm:$0xff]
    %v96 = vld [vmem:[#allocation8 + $0x10] sm:$0xff]
    %v97 = vld [vmem:[#allocation8 + $0x18] sm:$0xff]
    %v98 = vld [vmem:[%s3] sm:$0xf]
    %v100 = vlaneseq
    %v101 = vshrl.u32 %v100, 7
    %v102 = vsub.s32 0, %v101
    %v103 = vrot.slane %v98, %v102
    %v104 = vlaneseq
    %v105 = vshrl.u32 %v104, 7
    %v106 = vsub.s32 1, %v105
    %v107 = vrot.slane %v98, %v106
    %v108 = vlaneseq
    %v109 = vshrl.u32 %v108, 7
    %v110 = vsub.s32 2, %v109
    %v111 = vrot.slane %v98, %v110
    %v112 = vlaneseq
    %v113 = vshrl.u32 %v112, 7
    %v114 = vsub.s32 3, %v113
    %v115 = vrot.slane %v98, %v114
    %v128 = vunpack.c.l.b16 %v86
    %v129 = vunpack.c.l.b16 %v87
    %v130 = vunpack.c.l.b16 %v88
    %v131 = vunpack.c.l.b16 %v89
    %v132 = vunpack.c.l.b16 %v90
    %v133 = vunpack.c.l.b16 %v91
    %v134 = vunpack.c.l.b16 %v92
    %v135 = vunpack.c.l.b16 %v93
    %v136 = vpack.c.b16 %v129, %v128
    %v137 = vpack.c.b16 %v131, %v130
    %v138 = vpack.c.b16 %v133, %v132
    %v139 = vpack.c.b16 %v135, %v134
    %v144 = vunpack.c.l.b16 %v94
    %v145 = vunpack.c.h.b16 %v94
    %v146 = vunpack.c.l.b16 %v95
    %v147 = vunpack.c.h.b16 %v95
    %v148 = vunpack.c.l.b16 %v96
    %v149 = vunpack.c.h.b16 %v96
    %v150 = vunpack.c.l.b16 %v97
    %v151 = vunpack.c.h.b16 %v97
    %v152 = vpack.c.b16 %v148, %v144
    %v153 = vpack.c.b16 %v149, %v145
    %v154 = vpack.c.b16 %v150, %v146
    %v155 = vpack.c.b16 %v151, %v147
    %vm160 = vcmask 130048
    %v162 = vsel %vm160, %v136, 0
    %v165 = vsel %vm160, %v137, 0
    %v168 = vsel %vm160, %v138, 0
    %v171 = vsel %vm160, %v139, 0
    %173 = vmatprep.subr.bf16.mxu0 %v153
    %174 = vmatpush1.bf16.msra.mxu0 %v152
    %175 = vmatprep.subr.bf16.mxu0 0
    %176 = vmatpush1.bf16.msra.mxu0 0
    %177 = vmatprep.subr.bf16.mxu0 0
    %178 = vmatpush1.bf16.msra.mxu0 0
    %179 = vmatprep.subr.bf16.mxu0 0
    %180 = vmatpush1.bf16.msra.mxu0 0
    %181 = vmatprep.subr.bf16.mxu0 0
    %182 = vmatpush1.bf16.msra.mxu0 0
    %183 = vmatprep.subr.bf16.mxu0 0
    %184 = vmatpush1.bf16.msra.mxu0 0
    %185 = vmatprep.subr.bf16.mxu0 0
    %186 = vmatpush1.bf16.msra.mxu0 0
    %187 = vmatprep.subr.bf16.mxu0 0
    %188 = vmatpush1.bf16.msra.mxu0 0
    %189 = vmatprep.subr.bf16.mxu0 0
    %190 = vmatpush1.bf16.msra.mxu0 0
    %191 = vmatprep.subr.bf16.mxu0 0
    %192 = vmatpush1.bf16.msra.mxu0 0
    %193 = vmatprep.subr.bf16.mxu0 0
    %194 = vmatpush1.bf16.msra.mxu0 0
    %195 = vmatprep.subr.bf16.mxu0 0
    %196 = vmatpush1.bf16.msra.mxu0 0
    %197 = vmatprep.subr.bf16.mxu0 0
    %198 = vmatpush1.bf16.msra.mxu0 0
    %199 = vmatprep.subr.bf16.mxu0 0
    %200 = vmatpush1.bf16.msra.mxu0 0
    %201 = vmatprep.subr.bf16.mxu0 0
    %202 = vmatpush1.bf16.msra.mxu0 0
    %203 = vmatprep.subr.bf16.mxu0 0
    %204 = vmatpush1.bf16.msra.mxu0 0
    %205 = vmatprep.mubr.bf16.mxu0 0
    %206 = vmatmul.mubr.bf16.gmra.mrb[0].mxu0 %v162
    %v207 = vpop.f32.mrb[0].mxu0
    %v208 = vadd.f32 %v103, %v207
    %v209 = vpop.f32.mrb[0].mxu0
    %v210 = vadd.f32 %v107, %v209
    %v211 = vpop.f32.mrb[0].mxu0
    %v212 = vadd.f32 %v103, %v211
    %v213 = vpop.f32.mrb[0].mxu0
    %v214 = vadd.f32 %v107, %v213
    %215 = vmatprep.mubr.bf16.mxu0 0
    %216 = vmatmul.mubr.bf16.gmra.mrb[0].mxu0 %v165
    %v217 = vpop.f32.mrb[0].mxu0
    %v218 = vadd.f32 %v103, %v217
    %v219 = vpop.f32.mrb[0].mxu0
    %v220 = vadd.f32 %v107, %v219
    %v221 = vpop.f32.mrb[0].mxu0
    %v222 = vadd.f32 %v103, %v221
    %v223 = vpop.f32.mrb[0].mxu0
    %v224 = vadd.f32 %v107, %v223
    %225 = vmatprep.mubr.bf16.mxu0 0
    %226 = vmatmul.mubr.bf16.gmra.mrb[0].mxu0 %v168
    %v227 = vpop.f32.mrb[0].mxu0
    %v228 = vadd.f32 %v103, %v227
    %v229 = vpop.f32.mrb[0].mxu0
    %v230 = vadd.f32 %v107, %v229
    %v231 = vpop.f32.mrb[0].mxu0
    %v232 = vadd.f32 %v103, %v231
    %v233 = vpop.f32.mrb[0].mxu0
    %v234 = vadd.f32 %v107, %v233
    %235 = vmatprep.mubr.bf16.mxu0 0
    %236 = vmatmul.mubr.bf16.gmra.mrb[0].mxu0 %v171
    %v237 = vpop.f32.mrb[0].mxu0
    %v238 = vadd.f32 %v103, %v237
    %v239 = vpop.f32.mrb[0].mxu0
    %v240 = vadd.f32 %v107, %v239
    %v241 = vpop.f32.mrb[0].mxu0
    %v242 = vadd.f32 %v103, %v241
    %v243 = vpop.f32.mrb[0].mxu0
    %v244 = vadd.f32 %v107, %v243
    %245 = vdwg.mxu0
    %246 = vmatprep.subr.bf16.mxu0 %v155
    %247 = vmatpush1.bf16.msra.mxu0 %v154
    %248 = vmatprep.subr.bf16.mxu0 0
    %249 = vmatpush1.bf16.msra.mxu0 0
    %250 = vmatprep.subr.bf16.mxu0 0
    %251 = vmatpush1.bf16.msra.mxu0 0
    %252 = vmatprep.subr.bf16.mxu0 0
    %253 = vmatpush1.bf16.msra.mxu0 0
    %254 = vmatprep.subr.bf16.mxu0 0
    %255 = vmatpush1.bf16.msra.mxu0 0
    %256 = vmatprep.subr.bf16.mxu0 0
    %257 = vmatpush1.bf16.msra.mxu0 0
    %258 = vmatprep.subr.bf16.mxu0 0
    %259 = vmatpush1.bf16.msra.mxu0 0
    %260 = vmatprep.subr.bf16.mxu0 0
    %261 = vmatpush1.bf16.msra.mxu0 0
    %262 = vmatprep.subr.bf16.mxu0 0
    %263 = vmatpush1.bf16.msra.mxu0 0
    %264 = vmatprep.subr.bf16.mxu0 0
    %265 = vmatpush1.bf16.msra.mxu0 0
    %266 = vmatprep.subr.bf16.mxu0 0
    %267 = vmatpush1.bf16.msra.mxu0 0
    %268 = vmatprep.subr.bf16.mxu0 0
    %269 = vmatpush1.bf16.msra.mxu0 0
    %270 = vmatprep.subr.bf16.mxu0 0
    %271 = vmatpush1.bf16.msra.mxu0 0
    %272 = vmatprep.subr.bf16.mxu0 0
    %273 = vmatpush1.bf16.msra.mxu0 0
    %274 = vmatprep.subr.bf16.mxu0 0
    %275 = vmatpush1.bf16.msra.mxu0 0
    %276 = vmatprep.subr.bf16.mxu0 0
    %277 = vmatpush1.bf16.msra.mxu0 0
    %278 = vmatprep.mubr.bf16.mxu0 0
    %279 = vmatmul.mubr.bf16.gmra.mrb[0].mxu0 %v162
    %v280 = vpop.f32.mrb[0].mxu0
    %v281 = vadd.f32 %v111, %v280
    %v282 = vpop.f32.mrb[0].mxu0
    %v283 = vadd.f32 %v115, %v282
    %v284 = vpop.f32.mrb[0].mxu0
    %v285 = vadd.f32 %v111, %v284
    %v286 = vpop.f32.mrb[0].mxu0
    %v287 = vadd.f32 %v115, %v286
    %288 = vmatprep.mubr.bf16.mxu0 0
    %289 = vmatmul.mubr.bf16.gmra.mrb[0].mxu0 %v165
    %v290 = vpop.f32.mrb[0].mxu0
    %v291 = vadd.f32 %v111, %v290
    %v292 = vpop.f32.mrb[0].mxu0
    %v293 = vadd.f32 %v115, %v292
    %v294 = vpop.f32.mrb[0].mxu0
    %v295 = vadd.f32 %v111, %v294
    %v296 = vpop.f32.mrb[0].mxu0
    %v297 = vadd.f32 %v115, %v296
    %298 = vmatprep.mubr.bf16.mxu0 0
    %299 = vmatmul.mubr.bf16.gmra.mrb[0].mxu0 %v168
    %v300 = vpop.f32.mrb[0].mxu0
    %v301 = vadd.f32 %v111, %v300
    %v302 = vpop.f32.mrb[0].mxu0
    %v303 = vadd.f32 %v115, %v302
    %v304 = vpop.f32.mrb[0].mxu0
    %v305 = vadd.f32 %v111, %v304
    %v306 = vpop.f32.mrb[0].mxu0
    %v307 = vadd.f32 %v115, %v306
    %308 = vmatprep.mubr.bf16.mxu0 0
    %309 = vmatmul.mubr.bf16.gmra.mrb[0].mxu0 %v171
    %v310 = vpop.f32.mrb[0].mxu0
    %v311 = vadd.f32 %v111, %v310
    %v312 = vpop.f32.mrb[0].mxu0
    %v313 = vadd.f32 %v115, %v312
    %v314 = vpop.f32.mrb[0].mxu0
    %v315 = vadd.f32 %v111, %v314
    %v316 = vpop.f32.mrb[0].mxu0
    %v317 = vadd.f32 %v115, %v316
    %318 = vdwg.mxu0
    %v319 = vpack.c.bf16 %v208, %v208
    %v320 = vpack.c.bf16 %v210, %v210
    %v321 = vpack.c.bf16 %v281, %v281
    %v322 = vpack.c.bf16 %v283, %v283
    %v323 = vpack.c.bf16 %v212, %v212
    %v324 = vpack.c.bf16 %v214, %v214
    %v325 = vpack.c.bf16 %v285, %v285
    %v326 = vpack.c.bf16 %v287, %v287
    %v327 = vpack.c.bf16 %v218, %v218
    %v328 = vpack.c.bf16 %v220, %v220
    %v329 = vpack.c.bf16 %v291, %v291
    %v330 = vpack.c.bf16 %v293, %v293
    %v331 = vpack.c.bf16 %v222, %v222
    %v332 = vpack.c.bf16 %v224, %v224
    %v333 = vpack.c.bf16 %v295, %v295
    %v334 = vpack.c.bf16 %v297, %v297
    %v335 = vpack.c.bf16 %v228, %v228
    %v336 = vpack.c.bf16 %v230, %v230
    %v337 = vpack.c.bf16 %v301, %v301
    %v338 = vpack.c.bf16 %v303, %v303
    %v339 = vpack.c.bf16 %v232, %v232
    %v340 = vpack.c.bf16 %v234, %v234
    %v341 = vpack.c.bf16 %v305, %v305
    %v342 = vpack.c.bf16 %v307, %v307
    %v343 = vpack.c.bf16 %v238, %v238
    %v344 = vpack.c.bf16 %v240, %v240
    %v345 = vpack.c.bf16 %v311, %v311
    %v346 = vpack.c.bf16 %v313, %v313
    %v347 = vpack.c.bf16 %v242, %v242
    %v348 = vpack.c.bf16 %v244, %v244
    %v349 = vpack.c.bf16 %v315, %v315
    %v350 = vpack.c.bf16 %v317, %v317
    %v383 = vunpack.c.l.b16 %v319
    %v384 = vunpack.c.l.b16 %v320
    %v385 = vunpack.c.l.b16 %v321
    %v386 = vunpack.c.l.b16 %v322
    %v387 = vunpack.c.l.b16 %v323
    %v388 = vunpack.c.l.b16 %v324
    %v389 = vunpack.c.l.b16 %v325
    %v390 = vunpack.c.l.b16 %v326
    %v391 = vunpack.c.l.b16 %v327
    %v392 = vunpack.c.l.b16 %v328
    %v393 = vunpack.c.l.b16 %v329
    %v394 = vunpack.c.l.b16 %v330
    %v395 = vunpack.c.l.b16 %v331
    %v396 = vunpack.c.l.b16 %v332
    %v397 = vunpack.c.l.b16 %v333
    %v398 = vunpack.c.l.b16 %v334
    %v399 = vunpack.c.l.b16 %v335
    %v400 = vunpack.c.l.b16 %v336
    %v401 = vunpack.c.l.b16 %v337
    %v402 = vunpack.c.l.b16 %v338
    %v403 = vunpack.c.l.b16 %v339
    %v404 = vunpack.c.l.b16 %v340
    %v405 = vunpack.c.l.b16 %v341
    %v406 = vunpack.c.l.b16 %v342
    %v407 = vunpack.c.l.b16 %v343
    %v408 = vunpack.c.l.b16 %v344
    %v409 = vunpack.c.l.b16 %v345
    %v410 = vunpack.c.l.b16 %v346
    %v411 = vunpack.c.l.b16 %v347
    %v412 = vunpack.c.l.b16 %v348
    %v413 = vunpack.c.l.b16 %v349
    %v414 = vunpack.c.l.b16 %v350
    %v415 = vpack.c.b16 %v384, %v383
    %v416 = vpack.c.b16 %v386, %v385
    %v417 = vpack.c.b16 %v388, %v387
    %v418 = vpack.c.b16 %v390, %v389
    %v419 = vpack.c.b16 %v392, %v391
    %v420 = vpack.c.b16 %v394, %v393
    %v421 = vpack.c.b16 %v396, %v395
    %v422 = vpack.c.b16 %v398, %v397
    %v423 = vpack.c.b16 %v400, %v399
    %v424 = vpack.c.b16 %v402, %v401
    %v425 = vpack.c.b16 %v404, %v403
    %v426 = vpack.c.b16 %v406, %v405
    %v427 = vpack.c.b16 %v408, %v407
    %v428 = vpack.c.b16 %v410, %v409
    %v429 = vpack.c.b16 %v412, %v411
    %v430 = vpack.c.b16 %v414, %v413
    %447 = vst [vmem:[#allocation2] sm:$0xff] %v415
    %448 = vst [vmem:[#allocation2 + $0x8] sm:$0xff] %v416
    %449 = vst [vmem:[#allocation2 + $0x10] sm:$0xff] %v417
    %450 = vst [vmem:[#allocation2 + $0x18] sm:$0xff] %v418
    %451 = vst [vmem:[#allocation2 + $0x20] sm:$0xff] %v419
    %452 = vst [vmem:[#allocation2 + $0x28] sm:$0xff] %v420
    %453 = vst [vmem:[#allocation2 + $0x30] sm:$0xff] %v421
    %454 = vst [vmem:[#allocation2 + $0x38] sm:$0xff] %v422
    %455 = vst [vmem:[#allocation2 + $0x40] sm:$0xff] %v423
    %456 = vst [vmem:[#allocation2 + $0x48] sm:$0xff] %v424
    %457 = vst [vmem:[#allocation2 + $0x50] sm:$0xff] %v425
    %458 = vst [vmem:[#allocation2 + $0x58] sm:$0xff] %v426
    %459 = vst [vmem:[#allocation2 + $0x60] sm:$0xff] %v427
    %460 = vst [vmem:[#allocation2 + $0x68] sm:$0xff] %v428
    %461 = vst [vmem:[#allocation2 + $0x70] sm:$0xff] %v429
    %462 = vst [vmem:[#allocation2 + $0x78] sm:$0xff] %v430
    %v463 = vld [vmem:[#allocation10] sm:$0xff]
    %v464 = vld [vmem:[#allocation10 + $0x8] sm:$0xff]
    %v465 = vld [vmem:[#allocation10 + $0x10] sm:$0xff]
    %v466 = vld [vmem:[#allocation10 + $0x18] sm:$0xff]
    %v467 = vld [vmem:[#allocation10 + $0x20] sm:$0xff]
    %v468 = vld [vmem:[#allocation10 + $0x28] sm:$0xff]
    %v469 = vld [vmem:[#allocation10 + $0x30] sm:$0xff]
    %v470 = vld [vmem:[#allocation10 + $0x38] sm:$0xff]
    %v471 = vld [vmem:[#allocation10 + $0x40] sm:$0xff]
    %v472 = vld [vmem:[#allocation10 + $0x48] sm:$0xff]
    %v473 = vld [vmem:[#allocation10 + $0x50] sm:$0xff]
    %v474 = vld [vmem:[#allocation10 + $0x58] sm:$0xff]
    %v475 = vld [vmem:[#allocation10 + $0x60] sm:$0xff]
    %v476 = vld [vmem:[#allocation10 + $0x68] sm:$0xff]
    %v477 = vld [vmem:[#allocation10 + $0x70] sm:$0xff]
    %v478 = vld [vmem:[#allocation10 + $0x78] sm:$0xff]
    %v479 = vld [vmem:[#allocation10 + $0x80] sm:$0xff]
    %v480 = vld [vmem:[#allocation10 + $0x88] sm:$0xff]
    %v481 = vld [vmem:[#allocation10 + $0x90] sm:$0xff]
    %v482 = vld [vmem:[#allocation10 + $0x98] sm:$0xff]
    %v483 = vld [vmem:[#allocation10 + $0xa0] sm:$0xff]
    %v484 = vld [vmem:[#allocation10 + $0xa8] sm:$0xff]
    %v485 = vld [vmem:[#allocation10 + $0xb0] sm:$0xff]
    %v486 = vld [vmem:[#allocation10 + $0xb8] sm:$0xff]
    %v487 = vld [vmem:[#allocation10 + $0xc0] sm:$0xff]
    %v488 = vld [vmem:[#allocation10 + $0xc8] sm:$0xff]
    %v489 = vld [vmem:[#allocation10 + $0xd0] sm:$0xff]
    %v490 = vld [vmem:[#allocation10 + $0xd8] sm:$0xff]
    %v491 = vld [vmem:[#allocation10 + $0xe0] sm:$0xff]
    %v492 = vld [vmem:[#allocation10 + $0xe8] sm:$0xff]
    %v493 = vld [vmem:[#allocation10 + $0xf0] sm:$0xff]
    %v494 = vld [vmem:[#allocation10 + $0xf8] sm:$0xff]
    %v495 = vld [vmem:[#allocation3] sm:$0xff]
    %v496 = vld [vmem:[#allocation4] sm:$0xff]
    %v497 = vld [vmem:[#allocation2] sm:$0xff]
    %v498 = vld [vmem:[#allocation2 + $0x8] sm:$0xff]
    %v499 = vunpack.c.l.bf16 %v497
    %v500 = vunpack.c.h.bf16 %v497
    %v501 = vunpack.c.l.bf16 %v498
    %v502 = vunpack.c.h.bf16 %v498
    %v503 = vpack.c.bf16 %v495, %v495
    %v536 = vunpack.c.l.b16 %v463
    %v537 = vunpack.c.h.b16 %v463
    %v538 = vunpack.c.l.b16 %v464
    %v539 = vunpack.c.h.b16 %v464
    %v540 = vunpack.c.l.b16 %v465
    %v541 = vunpack.c.h.b16 %v465
    %v542 = vunpack.c.l.b16 %v466
    %v543 = vunpack.c.h.b16 %v466
    %v544 = vunpack.c.l.b16 %v467
    %v545 = vunpack.c.h.b16 %v467
    %v546 = vunpack.c.l.b16 %v468
    %v547 = vunpack.c.h.b16 %v468
    %v548 = vunpack.c.l.b16 %v469
    %v549 = vunpack.c.h.b16 %v469
    %v550 = vunpack.c.l.b16 %v470
    %v551 = vunpack.c.h.b16 %v470
    %v552 = vunpack.c.l.b16 %v471
    %v553 = vunpack.c.h.b16 %v471
    %v554 = vunpack.c.l.b16 %v472
    %v555 = vunpack.c.h.b16 %v472
    %v556 = vunpack.c.l.b16 %v473
    %v557 = vunpack.c.h.b16 %v473
    %v558 = vunpack.c.l.b16 %v474
    %v559 = vunpack.c.h.b16 %v474
    %v560 = vunpack.c.l.b16 %v475
    %v561 = vunpack.c.h.b16 %v475
    %v562 = vunpack.c.l.b16 %v476
    %v563 = vunpack.c.h.b16 %v476
    %v564 = vunpack.c.l.b16 %v477
    %v565 = vunpack.c.h.b16 %v477
    %v566 = vunpack.c.l.b16 %v478
    %v567 = vunpack.c.h.b16 %v478
    %v568 = vunpack.c.l.b16 %v479
    %v569 = vunpack.c.h.b16 %v479
    %v570 = vunpack.c.l.b16 %v480
    %v571 = vunpack.c.h.b16 %v480
    %v572 = vunpack.c.l.b16 %v481
    %v573 = vunpack.c.h.b16 %v481
    %v574 = vunpack.c.l.b16 %v482
    %v575 = vunpack.c.h.b16 %v482
    %v576 = vunpack.c.l.b16 %v483
    %v577 = vunpack.c.h.b16 %v483
    %v578 = vunpack.c.l.b16 %v484
    %v579 = vunpack.c.h.b16 %v484
    %v580 = vunpack.c.l.b16 %v485
    %v581 = vunpack.c.h.b16 %v485
    %v582 = vunpack.c.l.b16 %v486
    %v583 = vunpack.c.h.b16 %v486
    %v584 = vunpack.c.l.b16 %v487
    %v585 = vunpack.c.h.b16 %v487
    %v586 = vunpack.c.l.b16 %v488
    %v587 = vunpack.c.h.b16 %v488
    %v588 = vunpack.c.l.b16 %v489
    %v589 = vunpack.c.h.b16 %v489
    %v590 = vunpack.c.l.b16 %v490
    %v591 = vunpack.c.h.b16 %v490
    %v592 = vunpack.c.l.b16 %v491
    %v593 = vunpack.c.h.b16 %v491
    %v594 = vunpack.c.l.b16 %v492
    %v595 = vunpack.c.h.b16 %v492
    %v596 = vunpack.c.l.b16 %v493
    %v597 = vunpack.c.h.b16 %v493
    %v598 = vunpack.c.l.b16 %v494
    %v599 = vunpack.c.h.b16 %v494
    %v600 = vpack.c.b16 %v540, %v536
    %v601 = vpack.c.b16 %v541, %v537
    %v602 = vpack.c.b16 %v542, %v538
    %v603 = vpack.c.b16 %v543, %v539
    %v604 = vpack.c.b16 %v548, %v544
    %v605 = vpack.c.b16 %v549, %v545
    %v606 = vpack.c.b16 %v550, %v546
    %v607 = vpack.c.b16 %v551, %v547
    %v608 = vpack.c.b16 %v556, %v552
    %v609 = vpack.c.b16 %v557, %v553
    %v610 = vpack.c.b16 %v558, %v554
    %v611 = vpack.c.b16 %v559, %v555
    %v612 = vpack.c.b16 %v564, %v560
    %v613 = vpack.c.b16 %v565, %v561
    %v614 = vpack.c.b16 %v566, %v562
    %v615 = vpack.c.b16 %v567, %v563
    %v616 = vpack.c.b16 %v572, %v568
    %v617 = vpack.c.b16 %v573, %v569
    %v618 = vpack.c.b16 %v574, %v570
    %v619 = vpack.c.b16 %v575, %v571
    %v620 = vpack.c.b16 %v580, %v576
    %v621 = vpack.c.b16 %v581, %v577
    %v622 = vpack.c.b16 %v582, %v578
    %v623 = vpack.c.b16 %v583, %v579
    %v624 = vpack.c.b16 %v588, %v584
    %v625 = vpack.c.b16 %v589, %v585
    %v626 = vpack.c.b16 %v590, %v586
    %v627 = vpack.c.b16 %v591, %v587
    %v628 = vpack.c.b16 %v596, %v592
    %v629 = vpack.c.b16 %v597, %v593
    %v630 = vpack.c.b16 %v598, %v594
    %v631 = vpack.c.b16 %v599, %v595
    %664 = vmatprep.subr.bf16.mxu0 %v601
    %665 = vmatpush1.bf16.msra.mxu0 %v600
    %666 = vmatprep.subr.bf16.mxu0 %v605
    %667 = vmatpush1.bf16.msra.mxu0 %v604
    %668 = vmatprep.subr.bf16.mxu0 %v609
    %669 = vmatpush1.bf16.msra.mxu0 %v608
    %670 = vmatprep.subr.bf16.mxu0 %v613
    %671 = vmatpush1.bf16.msra.mxu0 %v612
    %672 = vmatprep.subr.bf16.mxu0 %v617
    %673 = vmatpush1.bf16.msra.mxu0 %v616
    %674 = vmatprep.subr.bf16.mxu0 %v621
    %675 = vmatpush1.bf16.msra.mxu0 %v620
    %676 = vmatprep.subr.bf16.mxu0 %v625
    %677 = vmatpush1.bf16.msra.mxu0 %v624
    %678 = vmatprep.subr.bf16.mxu0 %v629
    %679 = vmatpush1.bf16.msra.mxu0 %v628
    %680 = vmatprep.subr.bf16.mxu0 0
    %681 = vmatpush1.bf16.msra.mxu0 0
    %682 = vmatprep.subr.bf16.mxu0 0
    %683 = vmatpush1.bf16.msra.mxu0 0
    %684 = vmatprep.subr.bf16.mxu0 0
    %685 = vmatpush1.bf16.msra.mxu0 0
    %686 = vmatprep.subr.bf16.mxu0 0
    %687 = vmatpush1.bf16.msra.mxu0 0
    %688 = vmatprep.subr.bf16.mxu0 0
    %689 = vmatpush1.bf16.msra.mxu0 0
    %690 = vmatprep.subr.bf16.mxu0 0
    %691 = vmatpush1.bf16.msra.mxu0 0
    %692 = vmatprep.subr.bf16.mxu0 0
    %693 = vmatpush1.bf16.msra.mxu0 0
    %694 = vmatprep.subr.bf16.mxu0 0
    %695 = vmatpush1.bf16.msra.mxu0 0
    %696 = vmatprep.mubr.bf16.mxu0 0
    %697 = vmatmul.mubr.bf16.gmra.mrb[0].mxu0 %v503
    %v698 = vpop.f32.mrb[0].mxu0
    %v699 = vadd.f32 0.0, %v698
    %v700 = vpop.f32.mrb[0].mxu0
    %v701 = vadd.f32 0.0, %v700
    %v702 = vpop.f32.mrb[0].mxu0
    %v703 = vpop.f32.mrb[0].mxu0
    %704 = vdwg.mxu0
    %705 = vmatprep.subr.bf16.mxu0 %v603
    %706 = vmatpush1.bf16.msra.mxu0 %v602
    %707 = vmatprep.subr.bf16.mxu0 %v607
    %708 = vmatpush1.bf16.msra.mxu0 %v606
    %709 = vmatprep.subr.bf16.mxu0 %v611
    %710 = vmatpush1.bf16.msra.mxu0 %v610
    %711 = vmatprep.subr.bf16.mxu0 %v615
    %712 = vmatpush1.bf16.msra.mxu0 %v614
    %713 = vmatprep.subr.bf16.mxu0 %v619
    %714 = vmatpush1.bf16.msra.mxu0 %v618
    %715 = vmatprep.subr.bf16.mxu0 %v623
    %716 = vmatpush1.bf16.msra.mxu0 %v622
    %717 = vmatprep.subr.bf16.mxu0 %v627
    %718 = vmatpush1.bf16.msra.mxu0 %v626
    %719 = vmatprep.subr.bf16.mxu0 %v631
    %720 = vmatpush1.bf16.msra.mxu0 %v630
    %721 = vmatprep.subr.bf16.mxu0 0
    %722 = vmatpush1.bf16.msra.mxu0 0
    %723 = vmatprep.subr.bf16.mxu0 0
    %724 = vmatpush1.bf16.msra.mxu0 0
    %725 = vmatprep.subr.bf16.mxu0 0
    %726 = vmatpush1.bf16.msra.mxu0 0
    %727 = vmatprep.subr.bf16.mxu0 0
    %728 = vmatpush1.bf16.msra.mxu0 0
    %729 = vmatprep.subr.bf16.mxu0 0
    %730 = vmatpush1.bf16.msra.mxu0 0
    %731 = vmatprep.subr.bf16.mxu0 0
    %732 = vmatpush1.bf16.msra.mxu0 0
    %733 = vmatprep.subr.bf16.mxu0 0
    %734 = vmatpush1.bf16.msra.mxu0 0
    %735 = vmatprep.subr.bf16.mxu0 0
    %736 = vmatpush1.bf16.msra.mxu0 0
    %737 = vmatprep.mubr.bf16.mxu0 0
    %738 = vmatmul.mubr.bf16.gmra.mrb[0].mxu0 %v503
    %v739 = vpop.f32.mrb[0].mxu0
    %v740 = vadd.f32 0.0, %v739
    %v741 = vpop.f32.mrb[0].mxu0
    %v742 = vadd.f32 0.0, %v741
    %v743 = vpop.f32.mrb[0].mxu0
    %v744 = vpop.f32.mrb[0].mxu0
    %745 = vdwg.mxu0
    %v746 = vadd.f32 %v499, %v699
    %v747 = vadd.f32 %v500, %v701
    %v748 = vadd.f32 %v501, %v740
    %v749 = vadd.f32 %v502, %v742
    %v750 = vxor.u32 %v746, 2147483648
    %v751 = vmul.f32 %v750, 1.442695
    %v752 = vpow.pop %v751
    %v753 = vadd.f32 %v752, 1.0
    %v754 = vrcp.pop %v753
    %v755 = vmul.f32 1.0, %v754
    %v756 = vxor.u32 %v747, 2147483648
    %v757 = vmul.f32 %v756, 1.442695
    %v758 = vpow.pop %v757
    %v759 = vadd.f32 %v758, 1.0
    %v760 = vrcp.pop %v759
    %v761 = vmul.f32 1.0, %v760
    %v762 = vtanh.pop %v748
    %v763 = vxor.u32 %v749, 2147483648
    %v764 = vmul.f32 %v763, 1.442695
    %v765 = vpow.pop %v764
    %v766 = vadd.f32 %v765, 1.0
    %v767 = vrcp.pop %v766
    %v768 = vmul.f32 1.0, %v767
    %v769 = vmul.f32 %v761, %v496
    %v770 = vmul.f32 %v755, %v762
    %v771 = vadd.f32 %v769, %v770
    %v772 = vtanh.pop %v771
    %v773 = vmul.f32 %v768, %v772
    %s774 = scalar_lea.vmem [#allocation2], 16
    %v775 = vld [vmem:[%s774] sm:$0xff]
    %v776 = vld [vmem:[%s774 + $0x8] sm:$0xff]
    %v777 = vunpack.c.l.bf16 %v775
    %v778 = vunpack.c.h.bf16 %v775
    %v779 = vunpack.c.l.bf16 %v776
    %v780 = vunpack.c.h.bf16 %v776
    %v781 = vpack.c.bf16 %v773, %v773
    %782 = vmatprep.subr.bf16.mxu0 %v601
    %783 = vmatpush1.bf16.msra.mxu0 %v600
    %784 = vmatprep.subr.bf16.mxu0 %v605
    %785 = vmatpush1.bf16.msra.mxu0 %v604
    %786 = vmatprep.subr.bf16.mxu0 %v609
    %787 = vmatpush1.bf16.msra.mxu0 %v608
    %788 = vmatprep.subr.bf16.mxu0 %v613
    %789 = vmatpush1.bf16.msra.mxu0 %v612
    %790 = vmatprep.subr.bf16.mxu0 %v617
    %791 = vmatpush1.bf16.msra.mxu0 %v616
    %792 = vmatprep.subr.bf16.mxu0 %v621
    %793 = vmatpush1.bf16.msra.mxu0 %v620
    %794 = vmatprep.subr.bf16.mxu0 %v625
    %795 = vmatpush1.bf16.msra.mxu0 %v624
    %796 = vmatprep.subr.bf16.mxu0 %v629
    %797 = vmatpush1.bf16.msra.mxu0 %v628
    %798 = vmatprep.subr.bf16.mxu0 0
    %799 = vmatpush1.bf16.msra.mxu0 0
    %800 = vmatprep.subr.bf16.mxu0 0
    %801 = vmatpush1.bf16.msra.mxu0 0
    %802 = vmatprep.subr.bf16.mxu0 0
    %803 = vmatpush1.bf16.msra.mxu0 0
    %804 = vmatprep.subr.bf16.mxu0 0
    %805 = vmatpush1.bf16.msra.mxu0 0
    %806 = vmatprep.subr.bf16.mxu0 0
    %807 = vmatpush1.bf16.msra.mxu0 0
    %808 = vmatprep.subr.bf16.mxu0 0
    %809 = vmatpush1.bf16.msra.mxu0 0
    %810 = vmatprep.subr.bf16.mxu0 0
    %811 = vmatpush1.bf16.msra.mxu0 0
    %812 = vmatprep.subr.bf16.mxu0 0
    %813 = vmatpush1.bf16.msra.mxu0 0
    %814 = vmatprep.mubr.bf16.mxu0 0
    %815 = vmatmul.mubr.bf16.gmra.mrb[0].mxu0 %v781
    %v816 = vpop.f32.mrb[0].mxu0
    %v817 = vadd.f32 0.0, %v816
    %v818 = vpop.f32.mrb[0].mxu0
    %v819 = vadd.f32 0.0, %v818
    %v820 = vpop.f32.mrb[0].mxu0
    %v821 = vpop.f32.mrb[0].mxu0
    %822 = vdwg.mxu0
    %823 = vmatprep.subr.bf16.mxu0 %v603
    %824 = vmatpush1.bf16.msra.mxu0 %v602
    %825 = vmatprep.subr.bf16.mxu0 %v607
    %826 = vmatpush1.bf16.msra.mxu0 %v606
    %827 = vmatprep.subr.bf16.mxu0 %v611
    %828 = vmatpush1.bf16.msra.mxu0 %v610
    %829 = vmatprep.subr.bf16.mxu0 %v615
    %830 = vmatpush1.bf16.msra.mxu0 %v614
    %831 = vmatprep.subr.bf16.mxu0 %v619
    %832 = vmatpush1.bf16.msra.mxu0 %v618
    %833 = vmatprep.subr.bf16.mxu0 %v623
    %834 = vmatpush1.bf16.msra.mxu0 %v622
    %835 = vmatprep.subr.bf16.mxu0 %v627
    %836 = vmatpush1.bf16.msra.mxu0 %v626
    %837 = vmatprep.subr.bf16.mxu0 %v631
    %838 = vmatpush1.bf16.msra.mxu0 %v630
    %839 = vmatprep.subr.bf16.mxu0 0
    %840 = vmatpush1.bf16.msra.mxu0 0
    %841 = vmatprep.subr.bf16.mxu0 0
    %842 = vmatpush1.bf16.msra.mxu0 0
    %843 = vmatprep.subr.bf16.mxu0 0
    %844 = vmatpush1.bf16.msra.mxu0 0
    %845 = vmatprep.subr.bf16.mxu0 0
    %846 = vmatpush1.bf16.msra.mxu0 0
    %847 = vmatprep.subr.bf16.mxu0 0
    %848 = vmatpush1.bf16.msra.mxu0 0
    %849 = vmatprep.subr.bf16.mxu0 0
    %850 = vmatpush1.bf16.msra.mxu0 0
    %851 = vmatprep.subr.bf16.mxu0 0
    %852 = vmatpush1.bf16.msra.mxu0 0
    %853 = vmatprep.subr.bf16.mxu0 0
    %854 = vmatpush1.bf16.msra.mxu0 0
    %855 = vmatprep.mubr.bf16.mxu0 0
    %856 = vmatmul.mubr.bf16.gmra.mrb[0].mxu0 %v781
    %v857 = vpop.f32.mrb[0].mxu0
    %v858 = vadd.f32 0.0, %v857
    %v859 = vpop.f32.mrb[0].mxu0
    %v860 = vadd.f32 0.0, %v859
    %v861 = vpop.f32.mrb[0].mxu0
    %v862 = vpop.f32.mrb[0].mxu0
    %863 = vdwg.mxu0
    %v864 = vadd.f32 %v777, %v817
    %v865 = vadd.f32 %v778, %v819
    %v866 = vadd.f32 %v779, %v858
    %v867 = vadd.f32 %v780, %v860
    %v868 = vxor.u32 %v864, 2147483648
    %v869 = vmul.f32 %v868, 1.442695
    %v870 = vpow.pop %v869
    %v871 = vadd.f32 %v870, 1.0
    %v872 = vrcp.pop %v871
    %v873 = vmul.f32 1.0, %v872
    %v874 = vxor.u32 %v865, 2147483648
    %v875 = vmul.f32 %v874, 1.442695
    %v876 = vpow.pop %v875
    %v877 = vadd.f32 %v876, 1.0
    %v878 = vrcp.pop %v877
    %v879 = vmul.f32 1.0, %v878
    %v880 = vtanh.pop %v866
    %v881 = vxor.u32 %v867, 2147483648
    %v882 = vmul.f32 %v881, 1.442695
    %v883 = vpow.pop %v882
    %v884 = vadd.f32 %v883, 1.0
    %v885 = vrcp.pop %v884
    %v886 = vmul.f32 1.0, %v885
    %v887 = vmul.f32 %v879, %v771
    %v888 = vmul.f32 %v873, %v880
    %v889 = vadd.f32 %v887, %v888
    %v890 = vtanh.pop %v889
    %v891 = vmul.f32 %v886, %v890
    %s892 = scalar_lea.vmem [#allocation2], 32
    %v893 = vld [vmem:[%s892] sm:$0xff]
    %v894 = vld [vmem:[%s892 + $0x8] sm:$0xff]
    %v895 = vunpack.c.l.bf16 %v893
    %v896 = vunpack.c.h.bf16 %v893
    %v897 = vunpack.c.l.bf16 %v894
    %v898 = vunpack.c.h.bf16 %v894
    %v899 = vpack.c.bf16 %v891, %v891
    %900 = vmatprep.subr.bf16.mxu0 %v601
    %901 = vmatpush1.bf16.msra.mxu0 %v600
    %902 = vmatprep.subr.bf16.mxu0 %v605
    %903 = vmatpush1.bf16.msra.mxu0 %v604
    %904 = vmatprep.subr.bf16.mxu0 %v609
    %905 = vmatpush1.bf16.msra.mxu0 %v608
    %906 = vmatprep.subr.bf16.mxu0 %v613
    %907 = vmatpush1.bf16.msra.mxu0 %v612
    %908 = vmatprep.subr.bf16.mxu0 %v617
    %909 = vmatpush1.bf16.msra.mxu0 %v616
    %910 = vmatprep.subr.bf16.mxu0 %v621
    %911 = vmatpush1.bf16.msra.mxu0 %v620
    %912 = vmatprep.subr.bf16.mxu0 %v625
    %913 = vmatpush1.bf16.msra.mxu0 %v624
    %914 = vmatprep.subr.bf16.mxu0 %v629
    %915 = vmatpush1.bf16.msra.mxu0 %v628
    %916 = vmatprep.subr.bf16.mxu0 0
    %917 = vmatpush1.bf16.msra.mxu0 0
    %918 = vmatprep.subr.bf16.mxu0 0
    %919 = vmatpush1.bf16.msra.mxu0 0
    %920 = vmatprep.subr.bf16.mxu0 0
    %921 = vmatpush1.bf16.msra.mxu0 0
    %922 = vmatprep.subr.bf16.mxu0 0
    %923 = vmatpush1.bf16.msra.mxu0 0
    %924 = vmatprep.subr.bf16.mxu0 0
    %925 = vmatpush1.bf16.msra.mxu0 0
    %926 = vmatprep.subr.bf16.mxu0 0
    %927 = vmatpush1.bf16.msra.mxu0 0
    %928 = vmatprep.subr.bf16.mxu0 0
    %929 = vmatpush1.bf16.msra.mxu0 0
    %930 = vmatprep.subr.bf16.mxu0 0
    %931 = vmatpush1.bf16.msra.mxu0 0
    %932 = vmatprep.mubr.bf16.mxu0 0
    %933 = vmatmul.mubr.bf16.gmra.mrb[0].mxu0 %v899
    %v934 = vpop.f32.mrb[0].mxu0
    %v935 = vadd.f32 0.0, %v934
    %v936 = vpop.f32.mrb[0].mxu0
    %v937 = vadd.f32 0.0, %v936
    %v938 = vpop.f32.mrb[0].mxu0
    %v939 = vpop.f32.mrb[0].mxu0
    %940 = vdwg.mxu0
    %941 = vmatprep.subr.bf16.mxu0 %v603
    %942 = vmatpush1.bf16.msra.mxu0 %v602
    %943 = vmatprep.subr.bf16.mxu0 %v607
    %944 = vmatpush1.bf16.msra.mxu0 %v606
    %945 = vmatprep.subr.bf16.mxu0 %v611
    %946 = vmatpush1.bf16.msra.mxu0 %v610
    %947 = vmatprep.subr.bf16.mxu0 %v615
    %948 = vmatpush1.bf16.msra.mxu0 %v614
    %949 = vmatprep.subr.bf16.mxu0 %v619
    %950 = vmatpush1.bf16.msra.mxu0 %v618
    %951 = vmatprep.subr.bf16.mxu0 %v623
    %952 = vmatpush1.bf16.msra.mxu0 %v622
    %953 = vmatprep.subr.bf16.mxu0 %v627
    %954 = vmatpush1.bf16.msra.mxu0 %v626
    %955 = vmatprep.subr.bf16.mxu0 %v631
    %956 = vmatpush1.bf16.msra.mxu0 %v630
    %957 = vmatprep.subr.bf16.mxu0 0
    %958 = vmatpush1.bf16.msra.mxu0 0
    %959 = vmatprep.subr.bf16.mxu0 0
    %960 = vmatpush1.bf16.msra.mxu0 0
    %961 = vmatprep.subr.bf16.mxu0 0
    %962 = vmatpush1.bf16.msra.mxu0 0
    %963 = vmatprep.subr.bf16.mxu0 0
    %964 = vmatpush1.bf16.msra.mxu0 0
    %965 = vmatprep.subr.bf16.mxu0 0
    %966 = vmatpush1.bf16.msra.mxu0 0
    %967 = vmatprep.subr.bf16.mxu0 0
    %968 = vmatpush1.bf16.msra.mxu0 0
    %969 = vmatprep.subr.bf16.mxu0 0
    %970 = vmatpush1.bf16.msra.mxu0 0
    %971 = vmatprep.subr.bf16.mxu0 0
    %972 = vmatpush1.bf16.msra.mxu0 0
    %973 = vmatprep.mubr.bf16.mxu0 0
    %974 = vmatmul.mubr.bf16.gmra.mrb[0].mxu0 %v899
    %v975 = vpop.f32.mrb[0].mxu0
    %v976 = vadd.f32 0.0, %v975
    %v977 = vpop.f32.mrb[0].mxu0
    %v978 = vadd.f32 0.0, %v977
    %v979 = vpop.f32.mrb[0].mxu0
    %v980 = vpop.f32.mrb[0].mxu0
    %981 = vdwg.mxu0
    %v982 = vadd.f32 %v895, %v935
    %v983 = vadd.f32 %v896, %v937
    %v984 = vadd.f32 %v897, %v976
    %v985 = vadd.f32 %v898, %v978
    %v986 = vxor.u32 %v982, 2147483648
    %v987 = vmul.f32 %v986, 1.442695
    %v988 = vpow.pop %v987
    %v989 = vadd.f32 %v988, 1.0
    %v990 = vrcp.pop %v989
    %v991 = vmul.f32 1.0, %v990
    %v992 = vxor.u32 %v983, 2147483648
    %v993 = vmul.f32 %v992, 1.442695
    %v994 = vpow.pop %v993
    %v995 = vadd.f32 %v994, 1.0
    %v996 = vrcp.pop %v995
    %v997 = vmul.f32 1.0, %v996
    %v998 = vtanh.pop %v984
    %v999 = vxor.u32 %v985, 2147483648
    %v1000 = vmul.f32 %v999, 1.442695
    %v1001 = vpow.pop %v1000
    %v1002 = vadd.f32 %v1001, 1.0
    %v1003 = vrcp.pop %v1002
    %v1004 = vmul.f32 1.0, %v1003
    %v1005 = vmul.f32 %v997, %v889
    %v1006 = vmul.f32 %v991, %v998
    %v1007 = vadd.f32 %v1005, %v1006
    %v1008 = vtanh.pop %v1007
    %v1009 = vmul.f32 %v1004, %v1008
    %s1010 = scalar_lea.vmem [#allocation2], 48
    %v1011 = vld [vmem:[%s1010] sm:$0xff]
    %v1012 = vld [vmem:[%s1010 + $0x8] sm:$0xff]
    %v1013 = vunpack.c.l.bf16 %v1011
    %v1014 = vunpack.c.h.bf16 %v1011
    %v1015 = vunpack.c.l.bf16 %v1012
    %v1016 = vunpack.c.h.bf16 %v1012
    %v1017 = vpack.c.bf16 %v1009, %v1009
    %1018 = vmatprep.subr.bf16.mxu0 %v601
    %1019 = vmatpush1.bf16.msra.mxu0 %v600
    %1020 = vmatprep.subr.bf16.mxu0 %v605
    %1021 = vmatpush1.bf16.msra.mxu0 %v604
    %1022 = vmatprep.subr.bf16.mxu0 %v609
    %1023 = vmatpush1.bf16.msra.mxu0 %v608
    %1024 = vmatprep.subr.bf16.mxu0 %v613
    %1025 = vmatpush1.bf16.msra.mxu0 %v612
    %1026 = vmatprep.subr.bf16.mxu0 %v617
    %1027 = vmatpush1.bf16.msra.mxu0 %v616
    %1028 = vmatprep.subr.bf16.mxu0 %v621
    %1029 = vmatpush1.bf16.msra.mxu0 %v620
    %1030 = vmatprep.subr.bf16.mxu0 %v625
    %1031 = vmatpush1.bf16.msra.mxu0 %v624
    %1032 = vmatprep.subr.bf16.mxu0 %v629
    %1033 = vmatpush1.bf16.msra.mxu0 %v628
    %1034 = vmatprep.subr.bf16.mxu0 0
    %1035 = vmatpush1.bf16.msra.mxu0 0
    %1036 = vmatprep.subr.bf16.mxu0 0
    %1037 = vmatpush1.bf16.msra.mxu0 0
    %1038 = vmatprep.subr.bf16.mxu0 0
    %1039 = vmatpush1.bf16.msra.mxu0 0
    %1040 = vmatprep.subr.bf16.mxu0 0
    %1041 = vmatpush1.bf16.msra.mxu0 0
    %1042 = vmatprep.subr.bf16.mxu0 0
    %1043 = vmatpush1.bf16.msra.mxu0 0
    %1044 = vmatprep.subr.bf16.mxu0 0
    %1045 = vmatpush1.bf16.msra.mxu0 0
    %1046 = vmatprep.subr.bf16.mxu0 0
    %1047 = vmatpush1.bf16.msra.mxu0 0
    %1048 = vmatprep.subr.bf16.mxu0 0
    %1049 = vmatpush1.bf16.msra.mxu0 0
    %1050 = vmatprep.mubr.bf16.mxu0 0
    %1051 = vmatmul.mubr.bf16.gmra.mrb[0].mxu0 %v1017
    %v1052 = vpop.f32.mrb[0].mxu0
    %v1053 = vadd.f32 0.0, %v1052
    %v1054 = vpop.f32.mrb[0].mxu0
    %v1055 = vadd.f32 0.0, %v1054
    %v1056 = vpop.f32.mrb[0].mxu0
    %v1057 = vpop.f32.mrb[0].mxu0
    %1058 = vdwg.mxu0
    %1059 = vmatprep.subr.bf16.mxu0 %v603
    %1060 = vmatpush1.bf16.msra.mxu0 %v602
    %1061 = vmatprep.subr.bf16.mxu0 %v607
    %1062 = vmatpush1.bf16.msra.mxu0 %v606
    %1063 = vmatprep.subr.bf16.mxu0 %v611
    %1064 = vmatpush1.bf16.msra.mxu0 %v610
    %1065 = vmatprep.subr.bf16.mxu0 %v615
    %1066 = vmatpush1.bf16.msra.mxu0 %v614
    %1067 = vmatprep.subr.bf16.mxu0 %v619
    %1068 = vmatpush1.bf16.msra.mxu0 %v618
    %1069 = vmatprep.subr.bf16.mxu0 %v623
    %1070 = vmatpush1.bf16.msra.mxu0 %v622
    %1071 = vmatprep.subr.bf16.mxu0 %v627
    %1072 = vmatpush1.bf16.msra.mxu0 %v626
    %1073 = vmatprep.subr.bf16.mxu0 %v631
    %1074 = vmatpush1.bf16.msra.mxu0 %v630
    %1075 = vmatprep.subr.bf16.mxu0 0
    %1076 = vmatpush1.bf16.msra.mxu0 0
    %1077 = vmatprep.subr.bf16.mxu0 0
    %1078 = vmatpush1.bf16.msra.mxu0 0
    %1079 = vmatprep.subr.bf16.mxu0 0
    %1080 = vmatpush1.bf16.msra.mxu0 0
    %1081 = vmatprep.subr.bf16.mxu0 0
    %1082 = vmatpush1.bf16.msra.mxu0 0
    %1083 = vmatprep.subr.bf16.mxu0 0
    %1084 = vmatpush1.bf16.msra.mxu0 0
    %1085 = vmatprep.subr.bf16.mxu0 0
    %1086 = vmatpush1.bf16.msra.mxu0 0
    %1087 = vmatprep.subr.bf16.mxu0 0
    %1088 = vmatpush1.bf16.msra.mxu0 0
    %1089 = vmatprep.subr.bf16.mxu0 0
    %1090 = vmatpush1.bf16.msra.mxu0 0
    %1091 = vmatprep.mubr.bf16.mxu0 0
    %1092 = vmatmul.mubr.bf16.gmra.mrb[0].mxu0 %v1017
    %v1093 = vpop.f32.mrb[0].mxu0
    %v1094 = vadd.f32 0.0, %v1093
    %v1095 = vpop.f32.mrb[0].mxu0
    %v1096 = vadd.f32 0.0, %v1095
    %v1097 = vpop.f32.mrb[0].mxu0
    %v1098 = vpop.f32.mrb[0].mxu0
    %1099 = vdwg.mxu0
    %v1100 = vadd.f32 %v1013, %v1053
    %v1101 = vadd.f32 %v1014, %v1055
    %v1102 = vadd.f32 %v1015, %v1094
    %v1103 = vadd.f32 %v1016, %v1096
    %v1104 = vxor.u32 %v1100, 2147483648
    %v1105 = vmul.f32 %v1104, 1.442695
    %v1106 = vpow.pop %v1105
    %v1107 = vadd.f32 %v1106, 1.0
    %v1108 = vrcp.pop %v1107
    %v1109 = vmul.f32 1.0, %v1108
    %v1110 = vxor.u32 %v1101, 2147483648
    %v1111 = vmul.f32 %v1110, 1.442695
    %v1112 = vpow.pop %v1111
    %v1113 = vadd.f32 %v1112, 1.0
    %v1114 = vrcp.pop %v1113
    %v1115 = vmul.f32 1.0, %v1114
    %v1116 = vtanh.pop %v1102
    %v1117 = vxor.u32 %v1103, 2147483648
    %v1118 = vmul.f32 %v1117, 1.442695
    %v1119 = vpow.pop %v1118
    %v1120 = vadd.f32 %v1119, 1.0
    %v1121 = vrcp.pop %v1120
    %v1122 = vmul.f32 1.0, %v1121
    %v1123 = vmul.f32 %v1115, %v1007
    %v1124 = vmul.f32 %v1109, %v1116
    %v1125 = vadd.f32 %v1123, %v1124
    %v1126 = vtanh.pop %v1125
    %v1127 = vmul.f32 %v1122, %v1126
    %s1128 = scalar_lea.vmem [#allocation2], 64
    %v1129 = vld [vmem:[%s1128] sm:$0xff]
    %v1130 = vld [vmem:[%s1128 + $0x8] sm:$0xff]
    %v1131 = vunpack.c.l.bf16 %v1129
    %v1132 = vunpack.c.h.bf16 %v1129
    %v1133 = vunpack.c.l.bf16 %v1130
    %v1134 = vunpack.c.h.bf16 %v1130
    %v1135 = vpack.c.bf16 %v1127, %v1127
    %1136 = vmatprep.subr.bf16.mxu0 %v601
    %1137 = vmatpush1.bf16.msra.mxu0 %v600
    %1138 = vmatprep.subr.bf16.mxu0 %v605
    %1139 = vmatpush1.bf16.msra.mxu0 %v604
    %1140 = vmatprep.subr.bf16.mxu0 %v609
    %1141 = vmatpush1.bf16.msra.mxu0 %v608
    %1142 = vmatprep.subr.bf16.mxu0 %v613
    %1143 = vmatpush1.bf16.msra.mxu0 %v612
    %1144 = vmatprep.subr.bf16.mxu0 %v617
    %1145 = vmatpush1.bf16.msra.mxu0 %v616
    %1146 = vmatprep.subr.bf16.mxu0 %v621
    %1147 = vmatpush1.bf16.msra.mxu0 %v620
    %1148 = vmatprep.subr.bf16.mxu0 %v625
    %1149 = vmatpush1.bf16.msra.mxu0 %v624
    %1150 = vmatprep.subr.bf16.mxu0 %v629
    %1151 = vmatpush1.bf16.msra.mxu0 %v628
    %1152 = vmatprep.subr.bf16.mxu0 0
    %1153 = vmatpush1.bf16.msra.mxu0 0
    %1154 = vmatprep.subr.bf16.mxu0 0
    %1155 = vmatpush1.bf16.msra.mxu0 0
    %1156 = vmatprep.subr.bf16.mxu0 0
    %1157 = vmatpush1.bf16.msra.mxu0 0
    %1158 = vmatprep.subr.bf16.mxu0 0
    %1159 = vmatpush1.bf16.msra.mxu0 0
    %1160 = vmatprep.subr.bf16.mxu0 0
    %1161 = vmatpush1.bf16.msra.mxu0 0
    %1162 = vmatprep.subr.bf16.mxu0 0
    %1163 = vmatpush1.bf16.msra.mxu0 0
    %1164 = vmatprep.subr.bf16.mxu0 0
    %1165 = vmatpush1.bf16.msra.mxu0 0
    %1166 = vmatprep.subr.bf16.mxu0 0
    %1167 = vmatpush1.bf16.msra.mxu0 0
    %1168 = vmatprep.mubr.bf16.mxu0 0
    %1169 = vmatmul.mubr.bf16.gmra.mrb[0].mxu0 %v1135
    %v1170 = vpop.f32.mrb[0].mxu0
    %v1171 = vadd.f32 0.0, %v1170
    %v1172 = vpop.f32.mrb[0].mxu0
    %v1173 = vadd.f32 0.0, %v1172
    %v1174 = vpop.f32.mrb[0].mxu0
    %v1175 = vpop.f32.mrb[0].mxu0
    %1176 = vdwg.mxu0
    %1177 = vmatprep.subr.bf16.mxu0 %v603
    %1178 = vmatpush1.bf16.msra.mxu0 %v602
    %1179 = vmatprep.subr.bf16.mxu0 %v607
    %1180 = vmatpush1.bf16.msra.mxu0 %v606
    %1181 = vmatprep.subr.bf16.mxu0 %v611
    %1182 = vmatpush1.bf16.msra.mxu0 %v610
    %1183 = vmatprep.subr.bf16.mxu0 %v615
    %1184 = vmatpush1.bf16.msra.mxu0 %v614
    %1185 = vmatprep.subr.bf16.mxu0 %v619
    %1186 = vmatpush1.bf16.msra.mxu0 %v618
    %1187 = vmatprep.subr.bf16.mxu0 %v623
    %1188 = vmatpush1.bf16.msra.mxu0 %v622
    %1189 = vmatprep.subr.bf16.mxu0 %v627
    %1190 = vmatpush1.bf16.msra.mxu0 %v626
    %1191 = vmatprep.subr.bf16.mxu0 %v631
    %1192 = vmatpush1.bf16.msra.mxu0 %v630
    %1193 = vmatprep.subr.bf16.mxu0 0
    %1194 = vmatpush1.bf16.msra.mxu0 0
    %1195 = vmatprep.subr.bf16.mxu0 0
    %1196 = vmatpush1.bf16.msra.mxu0 0
    %1197 = vmatprep.subr.bf16.mxu0 0
    %1198 = vmatpush1.bf16.msra.mxu0 0
    %1199 = vmatprep.subr.bf16.mxu0 0
    %1200 = vmatpush1.bf16.msra.mxu0 0
    %1201 = vmatprep.subr.bf16.mxu0 0
    %1202 = vmatpush1.bf16.msra.mxu0 0
    %1203 = vmatprep.subr.bf16.mxu0 0
    %1204 = vmatpush1.bf16.msra.mxu0 0
    %1205 = vmatprep.subr.bf16.mxu0 0
    %1206 = vmatpush1.bf16.msra.mxu0 0
    %1207 = vmatprep.subr.bf16.mxu0 0
    %1208 = vmatpush1.bf16.msra.mxu0 0
    %1209 = vmatprep.mubr.bf16.mxu0 0
    %1210 = vmatmul.mubr.bf16.gmra.mrb[0].mxu0 %v1135
    %v1211 = vpop.f32.mrb[0].mxu0
    %v1212 = vadd.f32 0.0, %v1211
    %v1213 = vpop.f32.mrb[0].mxu0
    %v1214 = vadd.f32 0.0, %v1213
    %v1215 = vpop.f32.mrb[0].mxu0
    %v1216 = vpop.f32.mrb[0].mxu0
    %1217 = vdwg.mxu0
    %v1218 = vadd.f32 %v1131, %v1171
    %v1219 = vadd.f32 %v1132, %v1173
    %v1220 = vadd.f32 %v1133, %v1212
    %v1221 = vadd.f32 %v1134, %v1214
    %v1222 = vxor.u32 %v1218, 2147483648
    %v1223 = vmul.f32 %v1222, 1.442695
    %v1224 = vpow.pop %v1223
    %v1225 = vadd.f32 %v1224, 1.0
    %v1226 = vrcp.pop %v1225
    %v1227 = vmul.f32 1.0, %v1226
    %v1228 = vxor.u32 %v1219, 2147483648
    %v1229 = vmul.f32 %v1228, 1.442695
    %v1230 = vpow.pop %v1229
    %v1231 = vadd.f32 %v1230, 1.0
    %v1232 = vrcp.pop %v1231
    %v1233 = vmul.f32 1.0, %v1232
    %v1234 = vtanh.pop %v1220
    %v1235 = vxor.u32 %v1221, 2147483648
    %v1236 = vmul.f32 %v1235, 1.442695
    %v1237 = vpow.pop %v1236
    %v1238 = vadd.f32 %v1237, 1.0
    %v1239 = vrcp.pop %v1238
    %v1240 = vmul.f32 1.0, %v1239
    %v1241 = vmul.f32 %v1233, %v1125
    %v1242 = vmul.f32 %v1227, %v1234
    %v1243 = vadd.f32 %v1241, %v1242
    %v1244 = vtanh.pop %v1243
    %v1245 = vmul.f32 %v1240, %v1244
    %s1246 = scalar_lea.vmem [#allocation2], 80
    %v1247 = vld [vmem:[%s1246] sm:$0xff]
    %v1248 = vld [vmem:[%s1246 + $0x8] sm:$0xff]
    %v1249 = vunpack.c.l.bf16 %v1247
    %v1250 = vunpack.c.h.bf16 %v1247
    %v1251 = vunpack.c.l.bf16 %v1248
    %v1252 = vunpack.c.h.bf16 %v1248
    %v1253 = vpack.c.bf16 %v1245, %v1245
    %1254 = vmatprep.subr.bf16.mxu0 %v601
    %1255 = vmatpush1.bf16.msra.mxu0 %v600
    %1256 = vmatprep.subr.bf16.mxu0 %v605
    %1257 = vmatpush1.bf16.msra.mxu0 %v604
    %1258 = vmatprep.subr.bf16.mxu0 %v609
    %1259 = vmatpush1.bf16.msra.mxu0 %v608
    %1260 = vmatprep.subr.bf16.mxu0 %v613
    %1261 = vmatpush1.bf16.msra.mxu0 %v612
    %1262 = vmatprep.subr.bf16.mxu0 %v617
    %1263 = vmatpush1.bf16.msra.mxu0 %v616
    %1264 = vmatprep.subr.bf16.mxu0 %v621
    %1265 = vmatpush1.bf16.msra.mxu0 %v620
    %1266 = vmatprep.subr.bf16.mxu0 %v625
    %1267 = vmatpush1.bf16.msra.mxu0 %v624
    %1268 = vmatprep.subr.bf16.mxu0 %v629
    %1269 = vmatpush1.bf16.msra.mxu0 %v628
    %1270 = vmatprep.subr.bf16.mxu0 0
    %1271 = vmatpush1.bf16.msra.mxu0 0
    %1272 = vmatprep.subr.bf16.mxu0 0
    %1273 = vmatpush1.bf16.msra.mxu0 0
    %1274 = vmatprep.subr.bf16.mxu0 0
    %1275 = vmatpush1.bf16.msra.mxu0 0
    %1276 = vmatprep.subr.bf16.mxu0 0
    %1277 = vmatpush1.bf16.msra.mxu0 0
    %1278 = vmatprep.subr.bf16.mxu0 0
    %1279 = vmatpush1.bf16.msra.mxu0 0
    %1280 = vmatprep.subr.bf16.mxu0 0
    %1281 = vmatpush1.bf16.msra.mxu0 0
    %1282 = vmatprep.subr.bf16.mxu0 0
    %1283 = vmatpush1.bf16.msra.mxu0 0
    %1284 = vmatprep.subr.bf16.mxu0 0
    %1285 = vmatpush1.bf16.msra.mxu0 0
    %1286 = vmatprep.mubr.bf16.mxu0 0
    %1287 = vmatmul.mubr.bf16.gmra.mrb[0].mxu0 %v1253
    %v1288 = vpop.f32.mrb[0].mxu0
    %v1289 = vadd.f32 0.0, %v1288
    %v1290 = vpop.f32.mrb[0].mxu0
    %v1291 = vadd.f32 0.0, %v1290
    %v1292 = vpop.f32.mrb[0].mxu0
    %v1293 = vpop.f32.mrb[0].mxu0
    %1294 = vdwg.mxu0
    %1295 = vmatprep.subr.bf16.mxu0 %v603
    %1296 = vmatpush1.bf16.msra.mxu0 %v602
    %1297 = vmatprep.subr.bf16.mxu0 %v607
    %1298 = vmatpush1.bf16.msra.mxu0 %v606
    %1299 = vmatprep.subr.bf16.mxu0 %v611
    %1300 = vmatpush1.bf16.msra.mxu0 %v610
    %1301 = vmatprep.subr.bf16.mxu0 %v615
    %1302 = vmatpush1.bf16.msra.mxu0 %v614
    %1303 = vmatprep.subr.bf16.mxu0 %v619
    %1304 = vmatpush1.bf16.msra.mxu0 %v618
    %1305 = vmatprep.subr.bf16.mxu0 %v623
    %1306 = vmatpush1.bf16.msra.mxu0 %v622
    %1307 = vmatprep.subr.bf16.mxu0 %v627
    %1308 = vmatpush1.bf16.msra.mxu0 %v626
    %1309 = vmatprep.subr.bf16.mxu0 %v631
    %1310 = vmatpush1.bf16.msra.mxu0 %v630
    %1311 = vmatprep.subr.bf16.mxu0 0
    %1312 = vmatpush1.bf16.msra.mxu0 0
    %1313 = vmatprep.subr.bf16.mxu0 0
    %1314 = vmatpush1.bf16.msra.mxu0 0
    %1315 = vmatprep.subr.bf16.mxu0 0
    %1316 = vmatpush1.bf16.msra.mxu0 0
    %1317 = vmatprep.subr.bf16.mxu0 0
    %1318 = vmatpush1.bf16.msra.mxu0 0
    %1319 = vmatprep.subr.bf16.mxu0 0
    %1320 = vmatpush1.bf16.msra.mxu0 0
    %1321 = vmatprep.subr.bf16.mxu0 0
    %1322 = vmatpush1.bf16.msra.mxu0 0
    %1323 = vmatprep.subr.bf16.mxu0 0
    %1324 = vmatpush1.bf16.msra.mxu0 0
    %1325 = vmatprep.subr.bf16.mxu0 0
    %1326 = vmatpush1.bf16.msra.mxu0 0
    %1327 = vmatprep.mubr.bf16.mxu0 0
    %1328 = vmatmul.mubr.bf16.gmra.mrb[0].mxu0 %v1253
    %v1329 = vpop.f32.mrb[0].mxu0
    %v1330 = vadd.f32 0.0, %v1329
    %v1331 = vpop.f32.mrb[0].mxu0
    %v1332 = vadd.f32 0.0, %v1331
    %v1333 = vpop.f32.mrb[0].mxu0
    %v1334 = vpop.f32.mrb[0].mxu0
    %1335 = vdwg.mxu0
    %v1336 = vadd.f32 %v1249, %v1289
    %v1337 = vadd.f32 %v1250, %v1291
    %v1338 = vadd.f32 %v1251, %v1330
    %v1339 = vadd.f32 %v1252, %v1332
    %v1340 = vxor.u32 %v1336, 2147483648
    %v1341 = vmul.f32 %v1340, 1.442695
    %v1342 = vpow.pop %v1341
    %v1343 = vadd.f32 %v1342, 1.0
    %v1344 = vrcp.pop %v1343
    %v1345 = vmul.f32 1.0, %v1344
    %v1346 = vxor.u32 %v1337, 2147483648
    %v1347 = vmul.f32 %v1346, 1.442695
    %v1348 = vpow.pop %v1347
    %v1349 = vadd.f32 %v1348, 1.0
    %v1350 = vrcp.pop %v1349
    %v1351 = vmul.f32 1.0, %v1350
    %v1352 = vtanh.pop %v1338
    %v1353 = vxor.u32 %v1339, 2147483648
    %v1354 = vmul.f32 %v1353, 1.442695
    %v1355 = vpow.pop %v1354
    %v1356 = vadd.f32 %v1355, 1.0
    %v1357 = vrcp.pop %v1356
    %v1358 = vmul.f32 1.0, %v1357
    %v1359 = vmul.f32 %v1351, %v1243
    %v1360 = vmul.f32 %v1345, %v1352
    %v1361 = vadd.f32 %v1359, %v1360
    %v1362 = vtanh.pop %v1361
    %v1363 = vmul.f32 %v1358, %v1362
    %s1364 = scalar_lea.vmem [#allocation2], 96
    %v1365 = vld [vmem:[%s1364] sm:$0xff]
    %v1366 = vld [vmem:[%s1364 + $0x8] sm:$0xff]
    %v1367 = vunpack.c.l.bf16 %v1365
    %v1368 = vunpack.c.h.bf16 %v1365
    %v1369 = vunpack.c.l.bf16 %v1366
    %v1370 = vunpack.c.h.bf16 %v1366
    %v1371 = vpack.c.bf16 %v1363, %v1363
    %1372 = vmatprep.subr.bf16.mxu0 %v601
    %1373 = vmatpush1.bf16.msra.mxu0 %v600
    %1374 = vmatprep.subr.bf16.mxu0 %v605
    %1375 = vmatpush1.bf16.msra.mxu0 %v604
    %1376 = vmatprep.subr.bf16.mxu0 %v609
    %1377 = vmatpush1.bf16.msra.mxu0 %v608
    %1378 = vmatprep.subr.bf16.mxu0 %v613
    %1379 = vmatpush1.bf16.msra.mxu0 %v612
    %1380 = vmatprep.subr.bf16.mxu0 %v617
    %1381 = vmatpush1.bf16.msra.mxu0 %v616
    %1382 = vmatprep.subr.bf16.mxu0 %v621
    %1383 = vmatpush1.bf16.msra.mxu0 %v620
    %1384 = vmatprep.subr.bf16.mxu0 %v625
    %1385 = vmatpush1.bf16.msra.mxu0 %v624
    %1386 = vmatprep.subr.bf16.mxu0 %v629
    %1387 = vmatpush1.bf16.msra.mxu0 %v628
    %1388 = vmatprep.subr.bf16.mxu0 0
    %1389 = vmatpush1.bf16.msra.mxu0 0
    %1390 = vmatprep.subr.bf16.mxu0 0
    %1391 = vmatpush1.bf16.msra.mxu0 0
    %1392 = vmatprep.subr.bf16.mxu0 0
    %1393 = vmatpush1.bf16.msra.mxu0 0
    %1394 = vmatprep.subr.bf16.mxu0 0
    %1395 = vmatpush1.bf16.msra.mxu0 0
    %1396 = vmatprep.subr.bf16.mxu0 0
    %1397 = vmatpush1.bf16.msra.mxu0 0
    %1398 = vmatprep.subr.bf16.mxu0 0
    %1399 = vmatpush1.bf16.msra.mxu0 0
    %1400 = vmatprep.subr.bf16.mxu0 0
    %1401 = vmatpush1.bf16.msra.mxu0 0
    %1402 = vmatprep.subr.bf16.mxu0 0
    %1403 = vmatpush1.bf16.msra.mxu0 0
    %1404 = vmatprep.mubr.bf16.mxu0 0
    %1405 = vmatmul.mubr.bf16.gmra.mrb[0].mxu0 %v1371
    %v1406 = vpop.f32.mrb[0].mxu0
    %v1407 = vadd.f32 0.0, %v1406
    %v1408 = vpop.f32.mrb[0].mxu0
    %v1409 = vadd.f32 0.0, %v1408
    %v1410 = vpop.f32.mrb[0].mxu0
    %v1411 = vpop.f32.mrb[0].mxu0
    %1412 = vdwg.mxu0
    %1413 = vmatprep.subr.bf16.mxu0 %v603
    %1414 = vmatpush1.bf16.msra.mxu0 %v602
    %1415 = vmatprep.subr.bf16.mxu0 %v607
    %1416 = vmatpush1.bf16.msra.mxu0 %v606
    %1417 = vmatprep.subr.bf16.mxu0 %v611
    %1418 = vmatpush1.bf16.msra.mxu0 %v610
    %1419 = vmatprep.subr.bf16.mxu0 %v615
    %1420 = vmatpush1.bf16.msra.mxu0 %v614
    %1421 = vmatprep.subr.bf16.mxu0 %v619
    %1422 = vmatpush1.bf16.msra.mxu0 %v618
    %1423 = vmatprep.subr.bf16.mxu0 %v623
    %1424 = vmatpush1.bf16.msra.mxu0 %v622
    %1425 = vmatprep.subr.bf16.mxu0 %v627
    %1426 = vmatpush1.bf16.msra.mxu0 %v626
    %1427 = vmatprep.subr.bf16.mxu0 %v631
    %1428 = vmatpush1.bf16.msra.mxu0 %v630
    %1429 = vmatprep.subr.bf16.mxu0 0
    %1430 = vmatpush1.bf16.msra.mxu0 0
    %1431 = vmatprep.subr.bf16.mxu0 0
    %1432 = vmatpush1.bf16.msra.mxu0 0
    %1433 = vmatprep.subr.bf16.mxu0 0
    %1434 = vmatpush1.bf16.msra.mxu0 0
    %1435 = vmatprep.subr.bf16.mxu0 0
    %1436 = vmatpush1.bf16.msra.mxu0 0
    %1437 = vmatprep.subr.bf16.mxu0 0
    %1438 = vmatpush1.bf16.msra.mxu0 0
    %1439 = vmatprep.subr.bf16.mxu0 0
    %1440 = vmatpush1.bf16.msra.mxu0 0
    %1441 = vmatprep.subr.bf16.mxu0 0
    %1442 = vmatpush1.bf16.msra.mxu0 0
    %1443 = vmatprep.subr.bf16.mxu0 0
    %1444 = vmatpush1.bf16.msra.mxu0 0
    %1445 = vmatprep.mubr.bf16.mxu0 0
    %1446 = vmatmul.mubr.bf16.gmra.mrb[0].mxu0 %v1371
    %v1447 = vpop.f32.mrb[0].mxu0
    %v1448 = vadd.f32 0.0, %v1447
    %v1449 = vpop.f32.mrb[0].mxu0
    %v1450 = vadd.f32 0.0, %v1449
    %v1451 = vpop.f32.mrb[0].mxu0
    %v1452 = vpop.f32.mrb[0].mxu0
    %1453 = vdwg.mxu0
    %v1454 = vadd.f32 %v1367, %v1407
    %v1455 = vadd.f32 %v1368, %v1409
    %v1456 = vadd.f32 %v1369, %v1448
    %v1457 = vadd.f32 %v1370, %v1450
    %v1458 = vxor.u32 %v1454, 2147483648
    %v1459 = vmul.f32 %v1458, 1.442695
    %v1460 = vpow.pop %v1459
    %v1461 = vadd.f32 %v1460, 1.0
    %v1462 = vrcp.pop %v1461
    %v1463 = vmul.f32 1.0, %v1462
    %v1464 = vxor.u32 %v1455, 2147483648
    %v1465 = vmul.f32 %v1464, 1.442695
    %v1466 = vpow.pop %v1465
    %v1467 = vadd.f32 %v1466, 1.0
    %v1468 = vrcp.pop %v1467
    %v1469 = vmul.f32 1.0, %v1468
    %v1470 = vtanh.pop %v1456
    %v1471 = vxor.u32 %v1457, 2147483648
    %v1472 = vmul.f32 %v1471, 1.442695
    %v1473 = vpow.pop %v1472
    %v1474 = vadd.f32 %v1473, 1.0
    %v1475 = vrcp.pop %v1474
    %v1476 = vmul.f32 1.0, %v1475
    %v1477 = vmul.f32 %v1469, %v1361
    %v1478 = vmul.f32 %v1463, %v1470
    %v1479 = vadd.f32 %v1477, %v1478
    %v1480 = vtanh.pop %v1479
    %v1481 = vmul.f32 %v1476, %v1480
    %s1482 = scalar_lea.vmem [#allocation2], 112
    %v1483 = vld [vmem:[%s1482] sm:$0xff]
    %v1484 = vld [vmem:[%s1482 + $0x8] sm:$0xff]
    %v1485 = vunpack.c.l.bf16 %v1483
    %v1486 = vunpack.c.h.bf16 %v1483
    %v1487 = vunpack.c.l.bf16 %v1484
    %v1488 = vunpack.c.h.bf16 %v1484
    %v1489 = vpack.c.bf16 %v1481, %v1481
    %1490 = vmatprep.subr.bf16.mxu0 %v601
    %1491 = vmatpush1.bf16.msra.mxu0 %v600
    %1492 = vmatprep.subr.bf16.mxu0 %v605
    %1493 = vmatpush1.bf16.msra.mxu0 %v604
    %1494 = vmatprep.subr.bf16.mxu0 %v609
    %1495 = vmatpush1.bf16.msra.mxu0 %v608
    %1496 = vmatprep.subr.bf16.mxu0 %v613
    %1497 = vmatpush1.bf16.msra.mxu0 %v612
    %1498 = vmatprep.subr.bf16.mxu0 %v617
    %1499 = vmatpush1.bf16.msra.mxu0 %v616
    %1500 = vmatprep.subr.bf16.mxu0 %v621
    %1501 = vmatpush1.bf16.msra.mxu0 %v620
    %1502 = vmatprep.subr.bf16.mxu0 %v625
    %1503 = vmatpush1.bf16.msra.mxu0 %v624
    %1504 = vmatprep.subr.bf16.mxu0 %v629
    %1505 = vmatpush1.bf16.msra.mxu0 %v628
    %1506 = vmatprep.subr.bf16.mxu0 0
    %1507 = vmatpush1.bf16.msra.mxu0 0
    %1508 = vmatprep.subr.bf16.mxu0 0
    %1509 = vmatpush1.bf16.msra.mxu0 0
    %1510 = vmatprep.subr.bf16.mxu0 0
    %1511 = vmatpush1.bf16.msra.mxu0 0
    %1512 = vmatprep.subr.bf16.mxu0 0
    %1513 = vmatpush1.bf16.msra.mxu0 0
    %1514 = vmatprep.subr.bf16.mxu0 0
    %1515 = vmatpush1.bf16.msra.mxu0 0
    %1516 = vmatprep.subr.bf16.mxu0 0
    %1517 = vmatpush1.bf16.msra.mxu0 0
    %1518 = vmatprep.subr.bf16.mxu0 0
    %1519 = vmatpush1.bf16.msra.mxu0 0
    %1520 = vmatprep.subr.bf16.mxu0 0
    %1521 = vmatpush1.bf16.msra.mxu0 0
    %1522 = vmatprep.mubr.bf16.mxu0 0
    %1523 = vmatmul.mubr.bf16.gmra.mrb[0].mxu0 %v1489
    %v1524 = vpop.f32.mrb[0].mxu0
    %v1525 = vadd.f32 0.0, %v1524
    %v1526 = vpop.f32.mrb[0].mxu0
    %v1527 = vadd.f32 0.0, %v1526
    %v1528 = vpop.f32.mrb[0].mxu0
    %v1529 = vpop.f32.mrb[0].mxu0
    %1530 = vdwg.mxu0
    %1531 = vmatprep.subr.bf16.mxu0 %v603
    %1532 = vmatpush1.bf16.msra.mxu0 %v602
    %1533 = vmatprep.subr.bf16.mxu0 %v607
    %1534 = vmatpush1.bf16.msra.mxu0 %v606
    %1535 = vmatprep.subr.bf16.mxu0 %v611
    %1536 = vmatpush1.bf16.msra.mxu0 %v610
    %1537 = vmatprep.subr.bf16.mxu0 %v615
    %1538 = vmatpush1.bf16.msra.mxu0 %v614
    %1539 = vmatprep.subr.bf16.mxu0 %v619
    %1540 = vmatpush1.bf16.msra.mxu0 %v618
    %1541 = vmatprep.subr.bf16.mxu0 %v623
    %1542 = vmatpush1.bf16.msra.mxu0 %v622
    %1543 = vmatprep.subr.bf16.mxu0 %v627
    %1544 = vmatpush1.bf16.msra.mxu0 %v626
    %1545 = vmatprep.subr.bf16.mxu0 %v631
    %1546 = vmatpush1.bf16.msra.mxu0 %v630
    %1547 = vmatprep.subr.bf16.mxu0 0
    %1548 = vmatpush1.bf16.msra.mxu0 0
    %1549 = vmatprep.subr.bf16.mxu0 0
    %1550 = vmatpush1.bf16.msra.mxu0 0
    %1551 = vmatprep.subr.bf16.mxu0 0
    %1552 = vmatpush1.bf16.msra.mxu0 0
    %1553 = vmatprep.subr.bf16.mxu0 0
    %1554 = vmatpush1.bf16.msra.mxu0 0
    %1555 = vmatprep.subr.bf16.mxu0 0
    %1556 = vmatpush1.bf16.msra.mxu0 0
    %1557 = vmatprep.subr.bf16.mxu0 0
    %1558 = vmatpush1.bf16.msra.mxu0 0
    %1559 = vmatprep.subr.bf16.mxu0 0
    %1560 = vmatpush1.bf16.msra.mxu0 0
    %1561 = vmatprep.subr.bf16.mxu0 0
    %1562 = vmatpush1.bf16.msra.mxu0 0
    %1563 = vmatprep.mubr.bf16.mxu0 0
    %1564 = vmatmul.mubr.bf16.gmra.mrb[0].mxu0 %v1489
    %v1565 = vpop.f32.mrb[0].mxu0
    %v1566 = vadd.f32 0.0, %v1565
    %v1567 = vpop.f32.mrb[0].mxu0
    %v1568 = vadd.f32 0.0, %v1567
    %v1569 = vpop.f32.mrb[0].mxu0
    %v1570 = vpop.f32.mrb[0].mxu0
    %1571 = vdwg.mxu0
    %v1572 = vadd.f32 %v1485, %v1525
    %v1573 = vadd.f32 %v1486, %v1527
    %v1574 = vadd.f32 %v1487, %v1566
    %v1575 = vadd.f32 %v1488, %v1568
    %v1576 = vxor.u32 %v1572, 2147483648
    %v1577 = vmul.f32 %v1576, 1.442695
    %v1578 = vpow.pop %v1577
    %v1579 = vadd.f32 %v1578, 1.0
    %v1580 = vrcp.pop %v1579
    %v1581 = vmul.f32 1.0, %v1580
    %v1582 = vxor.u32 %v1573, 2147483648
    %v1583 = vmul.f32 %v1582, 1.442695
    %v1584 = vpow.pop %v1583
    %v1585 = vadd.f32 %v1584, 1.0
    %v1586 = vrcp.pop %v1585
    %v1587 = vmul.f32 1.0, %v1586
    %v1588 = vtanh.pop %v1574
    %v1589 = vxor.u32 %v1575, 2147483648
    %v1590 = vmul.f32 %v1589, 1.442695
    %v1591 = vpow.pop %v1590
    %v1592 = vadd.f32 %v1591, 1.0
    %v1593 = vrcp.pop %v1592
    %v1594 = vmul.f32 1.0, %v1593
    %v1595 = vmul.f32 %v1587, %v1479
    %v1596 = vmul.f32 %v1581, %v1588
    %v1597 = vadd.f32 %v1595, %v1596
    %v1598 = vtanh.pop %v1597
    %v1599 = vmul.f32 %v1594, %v1598
    %1600 = vst [vmem:[#allocation3] sm:$0xff] %v1599
    %1601 = vst [vmem:[#allocation4] sm:$0xff] %v1597
    // Predicated region
    $region46: #{tpu_custom_call.1} parent=1 // pred_check
      %p1602 = pneg %p80
    $region47: #{tpu_custom_call.1} parent=1 // pred_check_branch
      %1604 = sbr.rel (%p1602) target = $region49
    $region48: #{tpu_custom_call.1} parent=1 // pred_region
      %v1605 = vld [vmem:[#allocation3] sm:$0xff]
      %v1606 = vpack.c.bf16 %v1605, %v1605
      %v1607 = vld [vmem:[#allocation11] sm:$0xff]
      %v1608 = vld [vmem:[#allocation11 + $0x8] sm:$0xff]
      %v1609 = vld [vmem:[#allocation11 + $0x10] sm:$0xff]
      %v1610 = vld [vmem:[#allocation11 + $0x18] sm:$0xff]
      %v1611 = vld [vmem:[#allocation11 + $0x20] sm:$0xff]
      %v1612 = vld [vmem:[#allocation11 + $0x28] sm:$0xff]
      %v1613 = vld [vmem:[#allocation11 + $0x30] sm:$0xff]
      %v1614 = vld [vmem:[#allocation11 + $0x38] sm:$0xff]
      %v1615 = vld [vmem:[#allocation11 + $0x40] sm:$0xff]
      %v1616 = vld [vmem:[#allocation11 + $0x48] sm:$0xff]
      %v1617 = vld [vmem:[#allocation11 + $0x50] sm:$0xff]
      %v1618 = vld [vmem:[#allocation11 + $0x58] sm:$0xff]
      %v1619 = vld [vmem:[#allocation11 + $0x60] sm:$0xff]
      %v1620 = vld [vmem:[#allocation11 + $0x68] sm:$0xff]
      %v1621 = vld [vmem:[#allocation11 + $0x70] sm:$0xff]
      %v1622 = vld [vmem:[#allocation11 + $0x78] sm:$0xff]
      %v1623 = vld [vmem:[#allocation11 + $0x80] sm:$0xff]
      %v1624 = vld [vmem:[#allocation11 + $0x88] sm:$0xff]
      %v1625 = vld [vmem:[#allocation11 + $0x90] sm:$0xff]
      %v1626 = vld [vmem:[#allocation11 + $0x98] sm:$0xff]
      %v1627 = vld [vmem:[#allocation11 + $0xa0] sm:$0xff]
      %v1628 = vld [vmem:[#allocation11 + $0xa8] sm:$0xff]
      %v1629 = vld [vmem:[#allocation11 + $0xb0] sm:$0xff]
      %v1630 = vld [vmem:[#allocation11 + $0xb8] sm:$0xff]
      %v1631 = vld [vmem:[#allocation11 + $0xc0] sm:$0xff]
      %v1632 = vld [vmem:[#allocation11 + $0xc8] sm:$0xff]
      %v1633 = vld [vmem:[#allocation11 + $0xd0] sm:$0xff]
      %v1634 = vld [vmem:[#allocation11 + $0xd8] sm:$0xff]
      %v1635 = vld [vmem:[#allocation11 + $0xe0] sm:$0xff]
      %v1636 = vld [vmem:[#allocation11 + $0xe8] sm:$0xff]
      %v1637 = vld [vmem:[#allocation11 + $0xf0] sm:$0xff]
      %v1638 = vld [vmem:[#allocation11 + $0xf8] sm:$0xff]
      %v1639 = vld [vmem:[%s5] sm:$0xf]
      %v1641 = vlaneseq
      %v1642 = vshrl.u32 %v1641, 7
      %v1643 = vsub.s32 0, %v1642
      %v1644 = vrot.slane %v1639, %v1643
      %v1645 = vlaneseq
      %v1646 = vshrl.u32 %v1645, 7
      %v1647 = vsub.s32 1, %v1646
      %v1648 = vrot.slane %v1639, %v1647
      %v1649 = vlaneseq
      %v1650 = vshrl.u32 %v1649, 7
      %v1651 = vsub.s32 2, %v1650
      %v1652 = vrot.slane %v1639, %v1651
      %v1653 = vlaneseq
      %v1654 = vshrl.u32 %v1653, 7
      %v1655 = vsub.s32 3, %v1654
      %v1656 = vrot.slane %v1639, %v1655
      %v1693 = vunpack.c.l.b16 %v1607
      %v1694 = vunpack.c.h.b16 %v1607
      %v1695 = vunpack.c.l.b16 %v1608
      %v1696 = vunpack.c.h.b16 %v1608
      %v1697 = vunpack.c.l.b16 %v1609
      %v1698 = vunpack.c.h.b16 %v1609
      %v1699 = vunpack.c.l.b16 %v1610
      %v1700 = vunpack.c.h.b16 %v1610
      %v1701 = vunpack.c.l.b16 %v1611
      %v1702 = vunpack.c.h.b16 %v1611
      %v1703 = vunpack.c.l.b16 %v1612
      %v1704 = vunpack.c.h.b16 %v1612
      %v1705 = vunpack.c.l.b16 %v1613
      %v1706 = vunpack.c.h.b16 %v1613
      %v1707 = vunpack.c.l.b16 %v1614
      %v1708 = vunpack.c.h.b16 %v1614
      %v1709 = vunpack.c.l.b16 %v1615
      %v1710 = vunpack.c.h.b16 %v1615
      %v1711 = vunpack.c.l.b16 %v1616
      %v1712 = vunpack.c.h.b16 %v1616
      %v1713 = vunpack.c.l.b16 %v1617
      %v1714 = vunpack.c.h.b16 %v1617
      %v1715 = vunpack.c.l.b16 %v1618
      %v1716 = vunpack.c.h.b16 %v1618
      %v1717 = vunpack.c.l.b16 %v1619
      %v1718 = vunpack.c.h.b16 %v1619
      %v1719 = vunpack.c.l.b16 %v1620
      %v1720 = vunpack.c.h.b16 %v1620
      %v1721 = vunpack.c.l.b16 %v1621
      %v1722 = vunpack.c.h.b16 %v1621
      %v1723 = vunpack.c.l.b16 %v1622
      %v1724 = vunpack.c.h.b16 %v1622
      %v1725 = vunpack.c.l.b16 %v1623
      %v1726 = vunpack.c.h.b16 %v1623
      %v1727 = vunpack.c.l.b16 %v1624
      %v1728 = vunpack.c.h.b16 %v1624
      %v1729 = vunpack.c.l.b16 %v1625
      %v1730 = vunpack.c.h.b16 %v1625
      %v1731 = vunpack.c.l.b16 %v1626
      %v1732 = vunpack.c.h.b16 %v1626
      %v1733 = vunpack.c.l.b16 %v1627
      %v1734 = vunpack.c.h.b16 %v1627
      %v1735 = vunpack.c.l.b16 %v1628
      %v1736 = vunpack.c.h.b16 %v1628
      %v1737 = vunpack.c.l.b16 %v1629
      %v1738 = vunpack.c.h.b16 %v1629
      %v1739 = vunpack.c.l.b16 %v1630
      %v1740 = vunpack.c.h.b16 %v1630
      %v1741 = vunpack.c.l.b16 %v1631
      %v1742 = vunpack.c.h.b16 %v1631
      %v1743 = vunpack.c.l.b16 %v1632
      %v1744 = vunpack.c.h.b16 %v1632
      %v1745 = vunpack.c.l.b16 %v1633
      %v1746 = vunpack.c.h.b16 %v1633
      %v1747 = vunpack.c.l.b16 %v1634
      %v1748 = vunpack.c.h.b16 %v1634
      %v1749 = vunpack.c.l.b16 %v1635
      %v1750 = vunpack.c.h.b16 %v1635
      %v1751 = vunpack.c.l.b16 %v1636
      %v1752 = vunpack.c.h.b16 %v1636
      %v1753 = vunpack.c.l.b16 %v1637
      %v1754 = vunpack.c.h.b16 %v1637
      %v1755 = vunpack.c.l.b16 %v1638
      %v1756 = vunpack.c.h.b16 %v1638
      %v1757 = vpack.c.b16 %v1697, %v1693
      %v1758 = vpack.c.b16 %v1698, %v1694
      %v1759 = vpack.c.b16 %v1699, %v1695
      %v1760 = vpack.c.b16 %v1700, %v1696
      %v1761 = vpack.c.b16 %v1705, %v1701
      %v1762 = vpack.c.b16 %v1706, %v1702
      %v1763 = vpack.c.b16 %v1707, %v1703
      %v1764 = vpack.c.b16 %v1708, %v1704
      %v1765 = vpack.c.b16 %v1713, %v1709
      %v1766 = vpack.c.b16 %v1714, %v1710
      %v1767 = vpack.c.b16 %v1715, %v1711
      %v1768 = vpack.c.b16 %v1716, %v1712
      %v1769 = vpack.c.b16 %v1721, %v1717
      %v1770 = vpack.c.b16 %v1722, %v1718
      %v1771 = vpack.c.b16 %v1723, %v1719
      %v1772 = vpack.c.b16 %v1724, %v1720
      %v1773 = vpack.c.b16 %v1729, %v1725
      %v1774 = vpack.c.b16 %v1730, %v1726
      %v1775 = vpack.c.b16 %v1731, %v1727
      %v1776 = vpack.c.b16 %v1732, %v1728
      %v1777 = vpack.c.b16 %v1737, %v1733
      %v1778 = vpack.c.b16 %v1738, %v1734
      %v1779 = vpack.c.b16 %v1739, %v1735
      %v1780 = vpack.c.b16 %v1740, %v1736
      %v1781 = vpack.c.b16 %v1745, %v1741
      %v1782 = vpack.c.b16 %v1746, %v1742
      %v1783 = vpack.c.b16 %v1747, %v1743
      %v1784 = vpack.c.b16 %v1748, %v1744
      %v1785 = vpack.c.b16 %v1753, %v1749
      %v1786 = vpack.c.b16 %v1754, %v1750
      %v1787 = vpack.c.b16 %v1755, %v1751
      %v1788 = vpack.c.b16 %v1756, %v1752
      %1821 = vmatprep.subr.bf16.mxu0 %v1758
      %1822 = vmatpush1.bf16.msra.mxu0 %v1757
      %1823 = vmatprep.subr.bf16.mxu0 %v1762
      %1824 = vmatpush1.bf16.msra.mxu0 %v1761
      %1825 = vmatprep.subr.bf16.mxu0 %v1766
      %1826 = vmatpush1.bf16.msra.mxu0 %v1765
      %1827 = vmatprep.subr.bf16.mxu0 %v1770
      %1828 = vmatpush1.bf16.msra.mxu0 %v1769
      %1829 = vmatprep.subr.bf16.mxu0 %v1774
      %1830 = vmatpush1.bf16.msra.mxu0 %v1773
      %1831 = vmatprep.subr.bf16.mxu0 %v1778
      %1832 = vmatpush1.bf16.msra.mxu0 %v1777
      %1833 = vmatprep.subr.bf16.mxu0 %v1782
      %1834 = vmatpush1.bf16.msra.mxu0 %v1781
      %1835 = vmatprep.subr.bf16.mxu0 %v1786
      %1836 = vmatpush1.bf16.msra.mxu0 %v1785
      %1837 = vmatprep.subr.bf16.mxu0 0
      %1838 = vmatpush1.bf16.msra.mxu0 0
      %1839 = vmatprep.subr.bf16.mxu0 0
      %1840 = vmatpush1.bf16.msra.mxu0 0
      %1841 = vmatprep.subr.bf16.mxu0 0
      %1842 = vmatpush1.bf16.msra.mxu0 0
      %1843 = vmatprep.subr.bf16.mxu0 0
      %1844 = vmatpush1.bf16.msra.mxu0 0
      %1845 = vmatprep.subr.bf16.mxu0 0
      %1846 = vmatpush1.bf16.msra.mxu0 0
      %1847 = vmatprep.subr.bf16.mxu0 0
      %1848 = vmatpush1.bf16.msra.mxu0 0
      %1849 = vmatprep.subr.bf16.mxu0 0
      %1850 = vmatpush1.bf16.msra.mxu0 0
      %1851 = vmatprep.subr.bf16.mxu0 0
      %1852 = vmatpush1.bf16.msra.mxu0 0
      %1853 = vmatprep.mubr.bf16.mxu0 0
      %1854 = vmatmul.mubr.bf16.gmra.mrb[0].mxu0 %v1606
      %v1855 = vpop.f32.mrb[0].mxu0
      %v1856 = vadd.f32 %v1644, %v1855
      %v1857 = vpop.f32.mrb[0].mxu0
      %v1858 = vadd.f32 %v1648, %v1857
      %v1859 = vpop.f32.mrb[0].mxu0
      %v1860 = vpop.f32.mrb[0].mxu0
      %1861 = vdwg.mxu0
      %1862 = vmatprep.subr.bf16.mxu0 %v1760
      %1863 = vmatpush1.bf16.msra.mxu0 %v1759
      %1864 = vmatprep.subr.bf16.mxu0 %v1764
      %1865 = vmatpush1.bf16.msra.mxu0 %v1763
      %1866 = vmatprep.subr.bf16.mxu0 %v1768
      %1867 = vmatpush1.bf16.msra.mxu0 %v1767
      %1868 = vmatprep.subr.bf16.mxu0 %v1772
      %1869 = vmatpush1.bf16.msra.mxu0 %v1771
      %1870 = vmatprep.subr.bf16.mxu0 %v1776
      %1871 = vmatpush1.bf16.msra.mxu0 %v1775
      %1872 = vmatprep.subr.bf16.mxu0 %v1780
      %1873 = vmatpush1.bf16.msra.mxu0 %v1779
      %1874 = vmatprep.subr.bf16.mxu0 %v1784
      %1875 = vmatpush1.bf16.msra.mxu0 %v1783
      %1876 = vmatprep.subr.bf16.mxu0 %v1788
      %1877 = vmatpush1.bf16.msra.mxu0 %v1787
      %1878 = vmatprep.subr.bf16.mxu0 0
      %1879 = vmatpush1.bf16.msra.mxu0 0
      %1880 = vmatprep.subr.bf16.mxu0 0
      %1881 = vmatpush1.bf16.msra.mxu0 0
      %1882 = vmatprep.subr.bf16.mxu0 0
      %1883 = vmatpush1.bf16.msra.mxu0 0
      %1884 = vmatprep.subr.bf16.mxu0 0
      %1885 = vmatpush1.bf16.msra.mxu0 0
      %1886 = vmatprep.subr.bf16.mxu0 0
      %1887 = vmatpush1.bf16.msra.mxu0 0
      %1888 = vmatprep.subr.bf16.mxu0 0
      %1889 = vmatpush1.bf16.msra.mxu0 0
      %1890 = vmatprep.subr.bf16.mxu0 0
      %1891 = vmatpush1.bf16.msra.mxu0 0
      %1892 = vmatprep.subr.bf16.mxu0 0
      %1893 = vmatpush1.bf16.msra.mxu0 0
      %1894 = vmatprep.mubr.bf16.mxu0 0
      %1895 = vmatmul.mubr.bf16.gmra.mrb[0].mxu0 %v1606
      %v1896 = vpop.f32.mrb[0].mxu0
      %v1897 = vadd.f32 %v1652, %v1896
      %v1898 = vpop.f32.mrb[0].mxu0
      %v1899 = vadd.f32 %v1656, %v1898
      %v1900 = vpop.f32.mrb[0].mxu0
      %v1901 = vpop.f32.mrb[0].mxu0
      %1902 = vdwg.mxu0
      %1903 = vst [vmem:[#allocation13] sm:$0xff] %v1856
      %1904 = vst [vmem:[#allocation13 + $0x8] sm:$0xff] %v1858
      %1905 = vst [vmem:[#allocation13 + $0x10] sm:$0xff] %v1897
      %1906 = vst [vmem:[#allocation13 + $0x18] sm:$0xff] %v1899
    $region49: #{tpu_custom_call.1} parent=1 // pred_fallthru
      _
    // Predicated region
    $region50: #{tpu_custom_call.1} parent=1 // pred_check
      _
    $region51: #{tpu_custom_call.1} parent=1 // pred_check_branch
      %1908 = sbr.rel (0) target = $region53
    $region52: #{tpu_custom_call.1} parent=1 // pred_region
      %s1910 = ssub.s32 512, 512
      %1911 = vsyncadd [#allocation7], %s1910
      %s1913 = sshll.u32 [#allocation13], 4
      %s1914 = int_to_ptr.vmem [resolvable:$true] %s1913
      %1916 = dma.vmem_to_hbm [thread:$0]  %s1914, 512, %s6, [#allocation7]
    $region53: #{tpu_custom_call.1} parent=1 // pred_fallthru
      _
    // Predicated region
    $region54: #{tpu_custom_call.1} parent=1 // pred_check
      _
    $region55: #{tpu_custom_call.1} parent=1 // pred_check_branch
      %1918 = sbr.rel (0) target = $region57
    $region56: #{tpu_custom_call.1} parent=1 // pred_region
      %1919 = dma.done [#allocation7], 512
    $region57: #{tpu_custom_call.1} parent=1 // pred_fallthru
      _
    %1920 = vsyncpa [#allocation6], 1
    %1921 = vsyncpa [#allocation9], 1
    %1922 = vsyncpa [#allocation12], 1
    %1923 = vsyncpa [#allocation7], 1

</llo_original>
